<compile_context>
chip_gen: v7x
topology: tpu7x:2x2x1
jax: 0.10.0
libtpu: 0.0.40
codegen_flags: <defaults>
</compile_context>

<pallas_src>
import jax
import jax.numpy as jnp
from jax.experimental import pallas as pl
from jax.experimental.pallas import tpu as pltpu

IN_DIM = 4
OUT_DIM = 32
N_POINTS = 11          # temporal_encoding is (1, in_dim, 11) -> sequence length must be 11
H1, H2, H3 = 64, 128, 1024
BN_EPS = 1e-5


def point_encoder_kernel(
    x_ref,
    w1_ref, b1p_ref,
    w2_ref, b2_ref,
    w3_ref, b3_ref,
    wfc1_ref, b4_ref,
    wfc2_ref, bfc2_ref,
    out_ref,
):
    tb = x_ref.shape[1]                                    # static batch-tile size

    def mm(a, w_ref):
        # bf16 MXU matmul, f32 accumulation.
        return jnp.dot(a, w_ref[...], preferred_element_type=jnp.float32)

    # Point-major bf16 block: (11, TB, Cin) -> leading-dim flatten (free).
    x = x_ref[...].reshape(N_POINTS * tb, IN_DIM)

    # conv1 / bn1 / relu.  Temporal encoding is folded into the per-point bias
    # b1p = te @ w1 + b1, added on the (11, TB, 64) view (leading-dim reshape).
    h1 = mm(x, w1_ref).reshape(N_POINTS, tb, H1)
    h1 = jnp.maximum(h1 + b1p_ref[...], 0.0).astype(jnp.bfloat16)
    h1 = h1.reshape(N_POINTS * tb, H1)

    # conv2 / bn2 / relu (single matmul with M = 11*TB).
    h2 = jnp.maximum(mm(h1, w2_ref) + b2_ref[...], 0.0).astype(jnp.bfloat16)

    # conv3 / bn3 / relu fused with the max over the 11 points: only one
    # (TB, 1024) slab is live at a time.  Rows j*TB:(j+1)*TB of h2 all belong to
    # point j; TB is a multiple of 16 so every slab slice is sublane-aligned in
    # bf16.  The max is done in bf16 (monotonic rounding => identical result).
    b3 = b3_ref[...]
    g = None
    for j in range(N_POINTS):                              # static 11-iteration loop
        hj = mm(h2[j * tb:(j + 1) * tb], w3_ref) + b3
        hj = jnp.maximum(hj, 0.0).astype(jnp.bfloat16)     # (TB, 1024)
        g = hj if g is None else jnp.maximum(g, hj)

    # fc1 / bn4 / relu, fc2 (BN folded into wfc1 / b4).
    f = jnp.maximum(mm(g, wfc1_ref) + b4_ref[...], 0.0).astype(jnp.bfloat16)
    o = mm(f, wfc2_ref) + bfc2_ref[...]                    # (TB, 32) f32
    out_ref[...] = o.astype(out_ref.dtype)


def _round_up(x, m):
    return ((x + m - 1) // m) * m


def point_encoder(x_ncl, p, *, tb=128):
    """x_ncl: (B, in_dim, 11) like the PyTorch module (NCL). Returns (B, out_dim)."""
    B = x_ncl.shape[0]

    # Shrink the tile for small batches so padded (wasted) rows stay bounded; keep
    # tb a multiple of 16 so every bf16 slab reshape/slice is sublane-aligned.
    tb = min(tb, _round_up(B, 16))
    tb = max(16, (tb // 16) * 16)
    n_tiles = pl.cdiv(B, tb)
    # v7x has 2 TensorCores: prefer an even tile count on the "parallel" batch
    # axis when a 16-aligned choice exists (near-zero effect on v5e/v6e, 1 TC).
    if n_tiles > 1 and n_tiles % 2 == 1:
        tb_even = _round_up(pl.cdiv(B, n_tiles + 1), 16)
        if tb_even >= 16 and pl.cdiv(B, tb_even) % 2 == 0:
            tb = tb_even
            n_tiles = pl.cdiv(B, tb)
    assert tb % 16 == 0
    b_pad = n_tiles * tb

    # Point-major, channels-last, bf16: (N_POINTS, B_pad, Cin).
    x_pm = jnp.transpose(x_ncl, (2, 0, 1)).astype(jnp.bfloat16)
    if b_pad != B:
        x_pm = jnp.pad(x_pm, ((0, 0), (0, b_pad - B), (0, 0)))

    operands = (
        x_pm,
        p["w1"], p["b1p"],
        p["w2"], p["b2"],
        p["w3"], p["b3"],
        p["wfc1"], p["b4"],
        p["wfc2"], p["bfc2"],
    )

    def const_spec(arr):
        nd = arr.ndim
        return pl.BlockSpec(arr.shape, lambda t, _nd=nd: (0,) * _nd)

    in_specs = [pl.BlockSpec((N_POINTS, tb, IN_DIM), lambda t: (0, t, 0))]
    in_specs += [const_spec(op) for op in operands[1:]]

    out = pl.pallas_call(
        point_encoder_kernel,
        out_shape=jax.ShapeDtypeStruct((b_pad, OUT_DIM), jnp.float32),
        grid_spec=pltpu.PrefetchScalarGridSpec(
            num_scalar_prefetch=0,
            grid=(n_tiles,),
            in_specs=in_specs,
            out_specs=pl.BlockSpec((tb, OUT_DIM), lambda t: (t, 0)),
        ),
        compiler_params=pltpu.CompilerParams(
            dimension_semantics=("parallel",),
            # ~3 MiB live at tb=128 (bf16 intermediates, one conv3 slab at a
            # time); 32 MiB gives headroom up to tb~512 and fits every chip.
            vmem_limit_bytes=32 * 1024 * 1024,
        ),
    )(*operands)
    return out[:B]


def init_params(key):
    """Deterministic synthetic parameters.

    Eval-mode BatchNorm is folded into bf16 weight columns and f32 biases; the
    temporal encoding is folded through conv1 into a per-point bias b1p.
    """
    ks = iter(jax.random.split(key, 32))

    def nxt():
        return next(ks)

    def linear(cin, cout, scale):
        w = scale * jax.random.normal(nxt(), (cin, cout), jnp.float32)
        b = scale * jax.random.normal(nxt(), (cout,), jnp.float32)
        return w, b

    def bn_fold(w, conv_b, c):
        gamma = 1.0 + 0.1 * jax.random.normal(nxt(), (c,), jnp.float32)
        beta = 0.1 * jax.random.normal(nxt(), (c,), jnp.float32)
        mean = 0.1 * jax.random.normal(nxt(), (c,), jnp.float32)
        var = jnp.abs(jax.random.normal(nxt(), (c,), jnp.float32)) + 0.5
        scale = gamma / jnp.sqrt(var + BN_EPS)
        w_folded = (w * scale[None, :]).astype(jnp.bfloat16)       # BN scale -> weights
        b_folded = ((conv_b - mean) * scale + beta).reshape(1, c)  # f32 bias
        return w_folded, b_folded

    p = {}
    # torch param is (1, in_dim, 11); kept point-major (11, in_dim) here.
    te = jax.random.normal(nxt(), (N_POINTS, IN_DIM), jnp.float32)
    w1, cb1 = linear(IN_DIM, H1, 0.3)
    p["w1"], b1 = bn_fold(w1, cb1, H1)
    # Fold temporal encoding through conv1: (x + te) @ W1 == x @ W1 + te @ W1.
    b1p = jnp.dot(te, p["w1"].astype(jnp.float32)) + b1            # (11, 64)
    p["b1p"] = b1p.reshape(N_POINTS, 1, H1)
    w2, cb2 = linear(H1, H2, 0.1)
    p["w2"], p["b2"] = bn_fold(w2, cb2, H2)
    w3, cb3 = linear(H2, H3, 0.05)
    p["w3"], p["b3"] = bn_fold(w3, cb3, H3)
    wf1, cbf1 = linear(H3, OUT_DIM, 0.02)
    p["wfc1"], p["b4"] = bn_fold(wf1, cbf1, OUT_DIM)
    wf2, bf2 = linear(OUT_DIM, OUT_DIM, 0.1)
    p["wfc2"] = wf2.astype(jnp.bfloat16)
    p["bfc2"] = bf2.reshape(1, OUT_DIM)
    return p


def reference(x_ncl, p):
    """Pure-JAX reference with identical (folded-BN, bf16-intermediate) semantics."""
    B = x_ncl.shape[0]
    x = jnp.transpose(x_ncl, (2, 0, 1)).astype(jnp.bfloat16)       # (11, B, Cin)

    def mm(a, w):
        return jnp.dot(a, w, preferred_element_type=jnp.float32)

    h1 = mm(x.reshape(N_POINTS * B, IN_DIM), p["w1"]).reshape(N_POINTS, B, H1)
    h1 = jnp.maximum(h1 + p["b1p"], 0.0).astype(jnp.bfloat16)
    h2 = jnp.maximum(mm(h1.reshape(N_POINTS * B, H1), p["w2"]) + p["b2"], 0.0)
    h2 = h2.astype(jnp.bfloat16).reshape(N_POINTS, B, H2)
    g = None
    for j in range(N_POINTS):
        hj = jnp.maximum(mm(h2[j], p["w3"]) + p["b3"], 0.0).astype(jnp.bfloat16)
        g = hj if g is None else jnp.maximum(g, hj)
    f = jnp.maximum(mm(g, p["wfc1"]) + p["b4"], 0.0).astype(jnp.bfloat16)
    return mm(f, p["wfc2"]) + p["bfc2"]


if __name__ == "__main__":
    key = jax.random.PRNGKey(0)
    kx, kp = jax.random.split(key)
    B = 2
    # PyTorch-style NCL input: (batch, in_dim, seq=11)
    x = jax.random.normal(kx, (B, IN_DIM, N_POINTS), jnp.float32)
    params = init_params(kp)

    out = point_encoder(x, params)          # tile auto-shrinks to 16 for B=2
    out = jax.block_until_ready(out)

    ref = reference(x, params)
    assert out.shape == (B, OUT_DIM)
    assert jnp.allclose(out, ref, atol=5e-3, rtol=5e-3), (out, ref)
    print("KERNEL_OK")
</pallas_src>

<mosaic_0001>
module attributes {stable_mosaic.version = 11 : i64} {
  func.func @point_encoder_kernel(%arg0: i32, %arg1: memref<11x16x4xbf16, #tpu.memory_space<vmem>>, %arg2: memref<4x64xbf16, #tpu.memory_space<vmem>>, %arg3: memref<11x1x64xf32, #tpu.memory_space<vmem>>, %arg4: memref<64x128xbf16, #tpu.memory_space<vmem>>, %arg5: memref<1x128xf32, #tpu.memory_space<vmem>>, %arg6: memref<128x1024xbf16, #tpu.memory_space<vmem>>, %arg7: memref<1x1024xf32, #tpu.memory_space<vmem>>, %arg8: memref<1024x32xbf16, #tpu.memory_space<vmem>>, %arg9: memref<1x32xf32, #tpu.memory_space<vmem>>, %arg10: memref<32x32xbf16, #tpu.memory_space<vmem>>, %arg11: memref<1x32xf32, #tpu.memory_space<vmem>>, %arg12: memref<16x32xf32, #tpu.memory_space<vmem>>) attributes {dimension_semantics = [#tpu.dimension_semantics<parallel>], iteration_bounds = array<i64: 1>, scalar_prefetch = 0 : i64, scratch_operands = 0 : i64, tpu.core_type = #tpu.core_type<tc>, window_params = [{transform_indices = @transform_0, window_bounds = array<i64: 11, 16, 4>}, {pipeline_mode = #tpu.pipeline_mode<synchronous>, transform_indices = @transform_1, window_bounds = array<i64: 4, 64>}, {pipeline_mode = #tpu.pipeline_mode<synchronous>, transform_indices = @transform_2, window_bounds = array<i64: 11, 1, 64>}, {pipeline_mode = #tpu.pipeline_mode<synchronous>, transform_indices = @transform_3, window_bounds = array<i64: 64, 128>}, {pipeline_mode = #tpu.pipeline_mode<synchronous>, transform_indices = @transform_4, window_bounds = array<i64: 1, 128>}, {pipeline_mode = #tpu.pipeline_mode<synchronous>, transform_indices = @transform_5, window_bounds = array<i64: 128, 1024>}, {pipeline_mode = #tpu.pipeline_mode<synchronous>, transform_indices = @transform_6, window_bounds = array<i64: 1, 1024>}, {pipeline_mode = #tpu.pipeline_mode<synchronous>, transform_indices = @transform_7, window_bounds = array<i64: 1024, 32>}, {pipeline_mode = #tpu.pipeline_mode<synchronous>, transform_indices = @transform_8, window_bounds = array<i64: 1, 32>}, {pipeline_mode = #tpu.pipeline_mode<synchronous>, transform_indices = @transform_9, window_bounds = array<i64: 32, 32>}, {pipeline_mode = #tpu.pipeline_mode<synchronous>, transform_indices = @transform_10, window_bounds = array<i64: 1, 32>}, {transform_indices = @transform_11, window_bounds = array<i64: 16, 32>}]} {
    %c0 = arith.constant 0 : index
    %c0_0 = arith.constant 0 : index
    %c0_1 = arith.constant 0 : index
    %0 = vector.load %arg1[%c0, %c0_0, %c0_1] : memref<11x16x4xbf16, #tpu.memory_space<vmem>>, vector<11x16x4xbf16>
    %1 = vector.shape_cast %0 : vector<11x16x4xbf16> to vector<176x4xbf16>
    %c0_2 = arith.constant 0 : index
    %c0_3 = arith.constant 0 : index
    %2 = vector.load %arg2[%c0_2, %c0_3] : memref<4x64xbf16, #tpu.memory_space<vmem>>, vector<4x64xbf16>
    %cst = arith.constant dense<0.000000e+00> : vector<176x64xf32>
    %3 = tpu.matmul %1, %2, %cst {dimension_numbers = #tpu.dot_dimension_numbers<[1], [0], [0], [1], [0, 0, 1, 1], [], []>} : vector<176x4xbf16>, vector<4x64xbf16>, vector<176x64xf32> -> vector<176x64xf32>
    %4 = vector.shape_cast %3 : vector<176x64xf32> to vector<11x16x64xf32>
    %c0_4 = arith.constant 0 : index
    %c0_5 = arith.constant 0 : index
    %c0_6 = arith.constant 0 : index
    %5 = vector.load %arg3[%c0_4, %c0_5, %c0_6] : memref<11x1x64xf32, #tpu.memory_space<vmem>>, vector<11x1x64xf32>
    %6 = vector.broadcast %5 : vector<11x1x64xf32> to vector<11x16x64xf32>
    %7 = arith.addf %4, %6 : vector<11x16x64xf32>
    %cst_7 = arith.constant 0.000000e+00 : f32
    %8 = vector.broadcast %cst_7 : f32 to vector<11x16x64xf32>
    %9 = arith.maximumf %7, %8 : vector<11x16x64xf32>
    %10 = arith.truncf %9 : vector<11x16x64xf32> to vector<11x16x64xbf16>
    %11 = vector.shape_cast %10 : vector<11x16x64xbf16> to vector<176x64xbf16>
    %c0_8 = arith.constant 0 : index
    %c0_9 = arith.constant 0 : index
    %12 = vector.load %arg4[%c0_8, %c0_9] : memref<64x128xbf16, #tpu.memory_space<vmem>>, vector<64x128xbf16>
    %cst_10 = arith.constant dense<0.000000e+00> : vector<176x128xf32>
    %13 = tpu.matmul %11, %12, %cst_10 {dimension_numbers = #tpu.dot_dimension_numbers<[1], [0], [0], [1], [0, 0, 1, 1], [], []>} : vector<176x64xbf16>, vector<64x128xbf16>, vector<176x128xf32> -> vector<176x128xf32>
    %c0_11 = arith.constant 0 : index
    %c0_12 = arith.constant 0 : index
    %14 = vector.load %arg5[%c0_11, %c0_12] : memref<1x128xf32, #tpu.memory_space<vmem>>, vector<1x128xf32>
    %15 = vector.broadcast %14 : vector<1x128xf32> to vector<176x128xf32>
    %16 = arith.addf %13, %15 : vector<176x128xf32>
    %cst_13 = arith.constant 0.000000e+00 : f32
    %17 = vector.broadcast %cst_13 : f32 to vector<176x128xf32>
    %18 = arith.maximumf %16, %17 : vector<176x128xf32>
    %19 = arith.truncf %18 : vector<176x128xf32> to vector<176x128xbf16>
    %c0_14 = arith.constant 0 : index
    %c0_15 = arith.constant 0 : index
    %20 = vector.load %arg7[%c0_14, %c0_15] : memref<1x1024xf32, #tpu.memory_space<vmem>>, vector<1x1024xf32>
    %21 = vector.extract_strided_slice %19 {offsets = [0, 0], sizes = [16, 128], strides = [1, 1]} : vector<176x128xbf16> to vector<16x128xbf16>
    %c0_16 = arith.constant 0 : index
    %c0_17 = arith.constant 0 : index
    %22 = vector.load %arg6[%c0_16, %c0_17] : memref<128x1024xbf16, #tpu.memory_space<vmem>>, vector<128x1024xbf16>
    %cst_18 = arith.constant dense<0.000000e+00> : vector<16x1024xf32>
    %23 = tpu.matmul %21, %22, %cst_18 {dimension_numbers = #tpu.dot_dimension_numbers<[1], [0], [0], [1], [0, 0, 1, 1], [], []>} : vector<16x128xbf16>, vector<128x1024xbf16>, vector<16x1024xf32> -> vector<16x1024xf32>
    %24 = vector.broadcast %20 : vector<1x1024xf32> to vector<16x1024xf32>
    %25 = arith.addf %23, %24 : vector<16x1024xf32>
    %cst_19 = arith.constant 0.000000e+00 : f32
    %26 = vector.broadcast %cst_19 : f32 to vector<16x1024xf32>
    %27 = arith.maximumf %25, %26 : vector<16x1024xf32>
    %28 = arith.truncf %27 : vector<16x1024xf32> to vector<16x1024xbf16>
    %29 = vector.extract_strided_slice %19 {offsets = [16, 0], sizes = [16, 128], strides = [1, 1]} : vector<176x128xbf16> to vector<16x128xbf16>
    %c0_20 = arith.constant 0 : index
    %c0_21 = arith.constant 0 : index
    %30 = vector.load %arg6[%c0_20, %c0_21] : memref<128x1024xbf16, #tpu.memory_space<vmem>>, vector<128x1024xbf16>
    %cst_22 = arith.constant dense<0.000000e+00> : vector<16x1024xf32>
    %31 = tpu.matmul %29, %30, %cst_22 {dimension_numbers = #tpu.dot_dimension_numbers<[1], [0], [0], [1], [0, 0, 1, 1], [], []>} : vector<16x128xbf16>, vector<128x1024xbf16>, vector<16x1024xf32> -> vector<16x1024xf32>
    %32 = vector.broadcast %20 : vector<1x1024xf32> to vector<16x1024xf32>
    %33 = arith.addf %31, %32 : vector<16x1024xf32>
    %cst_23 = arith.constant 0.000000e+00 : f32
    %34 = vector.broadcast %cst_23 : f32 to vector<16x1024xf32>
    %35 = arith.maximumf %33, %34 : vector<16x1024xf32>
    %36 = arith.truncf %35 : vector<16x1024xf32> to vector<16x1024xbf16>
    %37 = arith.maximumf %28, %36 : vector<16x1024xbf16>
    %38 = vector.extract_strided_slice %19 {offsets = [32, 0], sizes = [16, 128], strides = [1, 1]} : vector<176x128xbf16> to vector<16x128xbf16>
    %c0_24 = arith.constant 0 : index
    %c0_25 = arith.constant 0 : index
    %39 = vector.load %arg6[%c0_24, %c0_25] : memref<128x1024xbf16, #tpu.memory_space<vmem>>, vector<128x1024xbf16>
    %cst_26 = arith.constant dense<0.000000e+00> : vector<16x1024xf32>
    %40 = tpu.matmul %38, %39, %cst_26 {dimension_numbers = #tpu.dot_dimension_numbers<[1], [0], [0], [1], [0, 0, 1, 1], [], []>} : vector<16x128xbf16>, vector<128x1024xbf16>, vector<16x1024xf32> -> vector<16x1024xf32>
    %41 = vector.broadcast %20 : vector<1x1024xf32> to vector<16x1024xf32>
    %42 = arith.addf %40, %41 : vector<16x1024xf32>
    %cst_27 = arith.constant 0.000000e+00 : f32
    %43 = vector.broadcast %cst_27 : f32 to vector<16x1024xf32>
    %44 = arith.maximumf %42, %43 : vector<16x1024xf32>
    %45 = arith.truncf %44 : vector<16x1024xf32> to vector<16x1024xbf16>
    %46 = arith.maximumf %37, %45 : vector<16x1024xbf16>
    %47 = vector.extract_strided_slice %19 {offsets = [48, 0], sizes = [16, 128], strides = [1, 1]} : vector<176x128xbf16> to vector<16x128xbf16>
    %c0_28 = arith.constant 0 : index
    %c0_29 = arith.constant 0 : index
    %48 = vector.load %arg6[%c0_28, %c0_29] : memref<128x1024xbf16, #tpu.memory_space<vmem>>, vector<128x1024xbf16>
    %cst_30 = arith.constant dense<0.000000e+00> : vector<16x1024xf32>
    %49 = tpu.matmul %47, %48, %cst_30 {dimension_numbers = #tpu.dot_dimension_numbers<[1], [0], [0], [1], [0, 0, 1, 1], [], []>} : vector<16x128xbf16>, vector<128x1024xbf16>, vector<16x1024xf32> -> vector<16x1024xf32>
    %50 = vector.broadcast %20 : vector<1x1024xf32> to vector<16x1024xf32>
    %51 = arith.addf %49, %50 : vector<16x1024xf32>
    %cst_31 = arith.constant 0.000000e+00 : f32
    %52 = vector.broadcast %cst_31 : f32 to vector<16x1024xf32>
    %53 = arith.maximumf %51, %52 : vector<16x1024xf32>
    %54 = arith.truncf %53 : vector<16x1024xf32> to vector<16x1024xbf16>
    %55 = arith.maximumf %46, %54 : vector<16x1024xbf16>
    %56 = vector.extract_strided_slice %19 {offsets = [64, 0], sizes = [16, 128], strides = [1, 1]} : vector<176x128xbf16> to vector<16x128xbf16>
    %c0_32 = arith.constant 0 : index
    %c0_33 = arith.constant 0 : index
    %57 = vector.load %arg6[%c0_32, %c0_33] : memref<128x1024xbf16, #tpu.memory_space<vmem>>, vector<128x1024xbf16>
    %cst_34 = arith.constant dense<0.000000e+00> : vector<16x1024xf32>
    %58 = tpu.matmul %56, %57, %cst_34 {dimension_numbers = #tpu.dot_dimension_numbers<[1], [0], [0], [1], [0, 0, 1, 1], [], []>} : vector<16x128xbf16>, vector<128x1024xbf16>, vector<16x1024xf32> -> vector<16x1024xf32>
    %59 = vector.broadcast %20 : vector<1x1024xf32> to vector<16x1024xf32>
    %60 = arith.addf %58, %59 : vector<16x1024xf32>
    %cst_35 = arith.constant 0.000000e+00 : f32
    %61 = vector.broadcast %cst_35 : f32 to vector<16x1024xf32>
    %62 = arith.maximumf %60, %61 : vector<16x1024xf32>
    %63 = arith.truncf %62 : vector<16x1024xf32> to vector<16x1024xbf16>
    %64 = arith.maximumf %55, %63 : vector<16x1024xbf16>
    %65 = vector.extract_strided_slice %19 {offsets = [80, 0], sizes = [16, 128], strides = [1, 1]} : vector<176x128xbf16> to vector<16x128xbf16>
    %c0_36 = arith.constant 0 : index
    %c0_37 = arith.constant 0 : index
    %66 = vector.load %arg6[%c0_36, %c0_37] : memref<128x1024xbf16, #tpu.memory_space<vmem>>, vector<128x1024xbf16>
    %cst_38 = arith.constant dense<0.000000e+00> : vector<16x1024xf32>
    %67 = tpu.matmul %65, %66, %cst_38 {dimension_numbers = #tpu.dot_dimension_numbers<[1], [0], [0], [1], [0, 0, 1, 1], [], []>} : vector<16x128xbf16>, vector<128x1024xbf16>, vector<16x1024xf32> -> vector<16x1024xf32>
    %68 = vector.broadcast %20 : vector<1x1024xf32> to vector<16x1024xf32>
    %69 = arith.addf %67, %68 : vector<16x1024xf32>
    %cst_39 = arith.constant 0.000000e+00 : f32
    %70 = vector.broadcast %cst_39 : f32 to vector<16x1024xf32>
    %71 = arith.maximumf %69, %70 : vector<16x1024xf32>
    %72 = arith.truncf %71 : vector<16x1024xf32> to vector<16x1024xbf16>
    %73 = arith.maximumf %64, %72 : vector<16x1024xbf16>
    %74 = vector.extract_strided_slice %19 {offsets = [96, 0], sizes = [16, 128], strides = [1, 1]} : vector<176x128xbf16> to vector<16x128xbf16>
    %c0_40 = arith.constant 0 : index
    %c0_41 = arith.constant 0 : index
    %75 = vector.load %arg6[%c0_40, %c0_41] : memref<128x1024xbf16, #tpu.memory_space<vmem>>, vector<128x1024xbf16>
    %cst_42 = arith.constant dense<0.000000e+00> : vector<16x1024xf32>
    %76 = tpu.matmul %74, %75, %cst_42 {dimension_numbers = #tpu.dot_dimension_numbers<[1], [0], [0], [1], [0, 0, 1, 1], [], []>} : vector<16x128xbf16>, vector<128x1024xbf16>, vector<16x1024xf32> -> vector<16x1024xf32>
    %77 = vector.broadcast %20 : vector<1x1024xf32> to vector<16x1024xf32>
    %78 = arith.addf %76, %77 : vector<16x1024xf32>
    %cst_43 = arith.constant 0.000000e+00 : f32
    %79 = vector.broadcast %cst_43 : f32 to vector<16x1024xf32>
    %80 = arith.maximumf %78, %79 : vector<16x1024xf32>
    %81 = arith.truncf %80 : vector<16x1024xf32> to vector<16x1024xbf16>
    %82 = arith.maximumf %73, %81 : vector<16x1024xbf16>
    %83 = vector.extract_strided_slice %19 {offsets = [112, 0], sizes = [16, 128], strides = [1, 1]} : vector<176x128xbf16> to vector<16x128xbf16>
    %c0_44 = arith.constant 0 : index
    %c0_45 = arith.constant 0 : index
    %84 = vector.load %arg6[%c0_44, %c0_45] : memref<128x1024xbf16, #tpu.memory_space<vmem>>, vector<128x1024xbf16>
    %cst_46 = arith.constant dense<0.000000e+00> : vector<16x1024xf32>
    %85 = tpu.matmul %83, %84, %cst_46 {dimension_numbers = #tpu.dot_dimension_numbers<[1], [0], [0], [1], [0, 0, 1, 1], [], []>} : vector<16x128xbf16>, vector<128x1024xbf16>, vector<16x1024xf32> -> vector<16x1024xf32>
    %86 = vector.broadcast %20 : vector<1x1024xf32> to vector<16x1024xf32>
    %87 = arith.addf %85, %86 : vector<16x1024xf32>
    %cst_47 = arith.constant 0.000000e+00 : f32
    %88 = vector.broadcast %cst_47 : f32 to vector<16x1024xf32>
    %89 = arith.maximumf %87, %88 : vector<16x1024xf32>
    %90 = arith.truncf %89 : vector<16x1024xf32> to vector<16x1024xbf16>
    %91 = arith.maximumf %82, %90 : vector<16x1024xbf16>
    %92 = vector.extract_strided_slice %19 {offsets = [128, 0], sizes = [16, 128], strides = [1, 1]} : vector<176x128xbf16> to vector<16x128xbf16>
    %c0_48 = arith.constant 0 : index
    %c0_49 = arith.constant 0 : index
    %93 = vector.load %arg6[%c0_48, %c0_49] : memref<128x1024xbf16, #tpu.memory_space<vmem>>, vector<128x1024xbf16>
    %cst_50 = arith.constant dense<0.000000e+00> : vector<16x1024xf32>
    %94 = tpu.matmul %92, %93, %cst_50 {dimension_numbers = #tpu.dot_dimension_numbers<[1], [0], [0], [1], [0, 0, 1, 1], [], []>} : vector<16x128xbf16>, vector<128x1024xbf16>, vector<16x1024xf32> -> vector<16x1024xf32>
    %95 = vector.broadcast %20 : vector<1x1024xf32> to vector<16x1024xf32>
    %96 = arith.addf %94, %95 : vector<16x1024xf32>
    %cst_51 = arith.constant 0.000000e+00 : f32
    %97 = vector.broadcast %cst_51 : f32 to vector<16x1024xf32>
    %98 = arith.maximumf %96, %97 : vector<16x1024xf32>
    %99 = arith.truncf %98 : vector<16x1024xf32> to vector<16x1024xbf16>
    %100 = arith.maximumf %91, %99 : vector<16x1024xbf16>
    %101 = vector.extract_strided_slice %19 {offsets = [144, 0], sizes = [16, 128], strides = [1, 1]} : vector<176x128xbf16> to vector<16x128xbf16>
    %c0_52 = arith.constant 0 : index
    %c0_53 = arith.constant 0 : index
    %102 = vector.load %arg6[%c0_52, %c0_53] : memref<128x1024xbf16, #tpu.memory_space<vmem>>, vector<128x1024xbf16>
    %cst_54 = arith.constant dense<0.000000e+00> : vector<16x1024xf32>
    %103 = tpu.matmul %101, %102, %cst_54 {dimension_numbers = #tpu.dot_dimension_numbers<[1], [0], [0], [1], [0, 0, 1, 1], [], []>} : vector<16x128xbf16>, vector<128x1024xbf16>, vector<16x1024xf32> -> vector<16x1024xf32>
    %104 = vector.broadcast %20 : vector<1x1024xf32> to vector<16x1024xf32>
    %105 = arith.addf %103, %104 : vector<16x1024xf32>
    %cst_55 = arith.constant 0.000000e+00 : f32
    %106 = vector.broadcast %cst_55 : f32 to vector<16x1024xf32>
    %107 = arith.maximumf %105, %106 : vector<16x1024xf32>
    %108 = arith.truncf %107 : vector<16x1024xf32> to vector<16x1024xbf16>
    %109 = arith.maximumf %100, %108 : vector<16x1024xbf16>
    %110 = vector.extract_strided_slice %19 {offsets = [160, 0], sizes = [16, 128], strides = [1, 1]} : vector<176x128xbf16> to vector<16x128xbf16>
    %c0_56 = arith.constant 0 : index
    %c0_57 = arith.constant 0 : index
    %111 = vector.load %arg6[%c0_56, %c0_57] : memref<128x1024xbf16, #tpu.memory_space<vmem>>, vector<128x1024xbf16>
    %cst_58 = arith.constant dense<0.000000e+00> : vector<16x1024xf32>
    %112 = tpu.matmul %110, %111, %cst_58 {dimension_numbers = #tpu.dot_dimension_numbers<[1], [0], [0], [1], [0, 0, 1, 1], [], []>} : vector<16x128xbf16>, vector<128x1024xbf16>, vector<16x1024xf32> -> vector<16x1024xf32>
    %113 = vector.broadcast %20 : vector<1x1024xf32> to vector<16x1024xf32>
    %114 = arith.addf %112, %113 : vector<16x1024xf32>
    %cst_59 = arith.constant 0.000000e+00 : f32
    %115 = vector.broadcast %cst_59 : f32 to vector<16x1024xf32>
    %116 = arith.maximumf %114, %115 : vector<16x1024xf32>
    %117 = arith.truncf %116 : vector<16x1024xf32> to vector<16x1024xbf16>
    %118 = arith.maximumf %109, %117 : vector<16x1024xbf16>
    %c0_60 = arith.constant 0 : index
    %c0_61 = arith.constant 0 : index
    %119 = vector.load %arg8[%c0_60, %c0_61] : memref<1024x32xbf16, #tpu.memory_space<vmem>>, vector<1024x32xbf16>
    %cst_62 = arith.constant dense<0.000000e+00> : vector<16x32xf32>
    %120 = tpu.matmul %118, %119, %cst_62 {dimension_numbers = #tpu.dot_dimension_numbers<[1], [0], [0], [1], [0, 0, 1, 1], [], []>} : vector<16x1024xbf16>, vector<1024x32xbf16>, vector<16x32xf32> -> vector<16x32xf32>
    %c0_63 = arith.constant 0 : index
    %c0_64 = arith.constant 0 : index
    %121 = vector.load %arg9[%c0_63, %c0_64] : memref<1x32xf32, #tpu.memory_space<vmem>>, vector<1x32xf32>
    %122 = vector.broadcast %121 : vector<1x32xf32> to vector<16x32xf32>
    %123 = arith.addf %120, %122 : vector<16x32xf32>
    %cst_65 = arith.constant 0.000000e+00 : f32
    %124 = vector.broadcast %cst_65 : f32 to vector<16x32xf32>
    %125 = arith.maximumf %123, %124 : vector<16x32xf32>
    %126 = arith.truncf %125 : vector<16x32xf32> to vector<16x32xbf16>
    %c0_66 = arith.constant 0 : index
    %c0_67 = arith.constant 0 : index
    %127 = vector.load %arg10[%c0_66, %c0_67] : memref<32x32xbf16, #tpu.memory_space<vmem>>, vector<32x32xbf16>
    %cst_68 = arith.constant dense<0.000000e+00> : vector<16x32xf32>
    %128 = tpu.matmul %126, %127, %cst_68 {dimension_numbers = #tpu.dot_dimension_numbers<[1], [0], [0], [1], [0, 0, 1, 1], [], []>} : vector<16x32xbf16>, vector<32x32xbf16>, vector<16x32xf32> -> vector<16x32xf32>
    %c0_69 = arith.constant 0 : index
    %c0_70 = arith.constant 0 : index
    %129 = vector.load %arg11[%c0_69, %c0_70] : memref<1x32xf32, #tpu.memory_space<vmem>>, vector<1x32xf32>
    %130 = vector.broadcast %129 : vector<1x32xf32> to vector<16x32xf32>
    %131 = arith.addf %128, %130 : vector<16x32xf32>
    %c0_71 = arith.constant 0 : index
    %c0_72 = arith.constant 0 : index
    %132 = vector.load %arg12[%c0_71, %c0_72] : memref<16x32xf32, #tpu.memory_space<vmem>>, vector<16x32xf32>
    tpu.vector_store %arg12[%c0_71, %c0_72], %131 {strides = array<i32>} : memref<16x32xf32, #tpu.memory_space<vmem>>, vector<16x32xf32>,
    return
  }
  func.func @transform_0(%arg0: i32) -> (i32, i32, i32) {
    %c0_i32 = arith.constant 0 : i32
    %c0_i32_0 = arith.constant 0 : i32
    %c0_i32_1 = arith.constant 0 : i32
    return %c0_i32, %arg0, %c0_i32_0 : i32, i32, i32
  }
  func.func @transform_1(%arg0: i32) -> (i32, i32) {
    %c0_i32 = arith.constant 0 : i32
    %c0_i32_0 = arith.constant 0 : i32
    %c0_i32_1 = arith.constant 0 : i32
    return %c0_i32, %c0_i32_0 : i32, i32
  }
  func.func @transform_2(%arg0: i32) -> (i32, i32, i32) {
    %c0_i32 = arith.constant 0 : i32
    %c0_i32_0 = arith.constant 0 : i32
    %c0_i32_1 = arith.constant 0 : i32
    %c0_i32_2 = arith.constant 0 : i32
    return %c0_i32, %c0_i32_0, %c0_i32_1 : i32, i32, i32
  }
  func.func @transform_3(%arg0: i32) -> (i32, i32) {
    %c0_i32 = arith.constant 0 : i32
    %c0_i32_0 = arith.constant 0 : i32
    %c0_i32_1 = arith.constant 0 : i32
    return %c0_i32, %c0_i32_0 : i32, i32
  }
  func.func @transform_4(%arg0: i32) -> (i32, i32) {
    %c0_i32 = arith.constant 0 : i32
    %c0_i32_0 = arith.constant 0 : i32
    %c0_i32_1 = arith.constant 0 : i32
    return %c0_i32, %c0_i32_0 : i32, i32
  }
  func.func @transform_5(%arg0: i32) -> (i32, i32) {
    %c0_i32 = arith.constant 0 : i32
    %c0_i32_0 = arith.constant 0 : i32
    %c0_i32_1 = arith.constant 0 : i32
    return %c0_i32, %c0_i32_0 : i32, i32
  }
  func.func @transform_6(%arg0: i32) -> (i32, i32) {
    %c0_i32 = arith.constant 0 : i32
    %c0_i32_0 = arith.constant 0 : i32
    %c0_i32_1 = arith.constant 0 : i32
    return %c0_i32, %c0_i32_0 : i32, i32
  }
  func.func @transform_7(%arg0: i32) -> (i32, i32) {
    %c0_i32 = arith.constant 0 : i32
    %c0_i32_0 = arith.constant 0 : i32
    %c0_i32_1 = arith.constant 0 : i32
    return %c0_i32, %c0_i32_0 : i32, i32
  }
  func.func @transform_8(%arg0: i32) -> (i32, i32) {
    %c0_i32 = arith.constant 0 : i32
    %c0_i32_0 = arith.constant 0 : i32
    %c0_i32_1 = arith.constant 0 : i32
    return %c0_i32, %c0_i32_0 : i32, i32
  }
  func.func @transform_9(%arg0: i32) -> (i32, i32) {
    %c0_i32 = arith.constant 0 : i32
    %c0_i32_0 = arith.constant 0 : i32
    %c0_i32_1 = arith.constant 0 : i32
    return %c0_i32, %c0_i32_0 : i32, i32
  }
  func.func @transform_10(%arg0: i32) -> (i32, i32) {
    %c0_i32 = arith.constant 0 : i32
    %c0_i32_0 = arith.constant 0 : i32
    %c0_i32_1 = arith.constant 0 : i32
    return %c0_i32, %c0_i32_0 : i32, i32
  }
  func.func @transform_11(%arg0: i32) -> (i32, i32) {
    %c0_i32 = arith.constant 0 : i32
    %c0_i32_0 = arith.constant 0 : i32
    return %arg0, %c0_i32 : i32, i32
  }
}

</mosaic_0001>

<llo_original>
// kernel: tpu_custom_call.1
$region0: #{tpu_custom_call.1}
  #allocation0 [shape = 'u32[]', space=smem, size = 0x4, offset = 0x4, fixed_abs, tag = 'smem constant byte address 0x4 - core index']
  #allocation1 [shape = 'u32[144,128]{1,0:T(1,128)}', space=vmem, size = 0x12000, scoped, tag = 'internal scratch']
  %s0 = inlined_call_operand.vmem [shape: bf16[11,16,4], index: 0, kind: input, shape index: {}]
  %s1 = inlined_call_operand.vmem [shape: bf16[4,64], index: 1, kind: input, shape index: {}]
  %s2 = inlined_call_operand.vmem [shape: f32[11,1,64], index: 2, kind: input, shape index: {}]
  %s3 = inlined_call_operand.vmem [shape: bf16[64,128], index: 3, kind: input, shape index: {}]
  %s4 = inlined_call_operand.vmem [shape: f32[1,128], index: 4, kind: input, shape index: {}]
  %s5 = inlined_call_operand.vmem [shape: bf16[128,1024], index: 5, kind: input, shape index: {}]
  %s6 = inlined_call_operand.vmem [shape: f32[1,1024], index: 6, kind: input, shape index: {}]
  %s7 = inlined_call_operand.vmem [shape: bf16[1024,32], index: 7, kind: input, shape index: {}]
  %s8 = inlined_call_operand.vmem [shape: f32[1,32], index: 8, kind: input, shape index: {}]
  %s9 = inlined_call_operand.vmem [shape: bf16[32,32], index: 9, kind: input, shape index: {}]
  %s10 = inlined_call_operand.vmem [shape: f32[1,32], index: 10, kind: input, shape index: {}]
  %s11 = inlined_call_operand.hbm [shape: f32[16,32], index: 11, kind: output, shape index: {}]
  %s12 = sld [smem:[#allocation0]]
  $region54: #{tpu_custom_call.1} parent=0
    _
  %s14 = ssub.s32 1, %s12
  %s15 = scalar_select 0, %s14, %s12
  $region1: #{tpu_custom_call.1} parent=0
    #allocation2 [shape = 'u8[8192]{0}', space=vmem, size = 0x2000, scoped, tag = 'output window, operand 0, single buffered']
    #allocation3 [shape = 's32[1]{0}', space=sflag, size = 0x4, scoped, tag = 'scoped memory for tpu_custom_call.1']
    %16 = vsyncpa [#allocation3], 0
    // Predicated region
    $region2: #{tpu_custom_call.1} parent=1 // pred_check
      _
    $region3: #{tpu_custom_call.1} parent=1 // pred_check_branch
      %18 = sbr.rel (0) target = $region5
    $region4: #{tpu_custom_call.1} parent=1 // pred_region
      _
    $region5: #{tpu_custom_call.1} parent=1 // pred_fallthru
      _
    // Predicated region
    $region6: #{tpu_custom_call.1} parent=1 // pred_check
      _
    $region7: #{tpu_custom_call.1} parent=1 // pred_check_branch
      %20 = sbr.rel (0) target = $region9
    $region8: #{tpu_custom_call.1} parent=1 // pred_region
      _
    $region9: #{tpu_custom_call.1} parent=1 // pred_fallthru
      _
    // Predicated region
    $region10: #{tpu_custom_call.1} parent=1 // pred_check
      _
    $region11: #{tpu_custom_call.1} parent=1 // pred_check_branch
      %22 = sbr.rel (0) target = $region13
    $region12: #{tpu_custom_call.1} parent=1 // pred_region
      _
    $region13: #{tpu_custom_call.1} parent=1 // pred_fallthru
      _
    // Predicated region
    $region14: #{tpu_custom_call.1} parent=1 // pred_check
      _
    $region15: #{tpu_custom_call.1} parent=1 // pred_check_branch
      %24 = sbr.rel (0) target = $region17
    $region16: #{tpu_custom_call.1} parent=1 // pred_region
      _
    $region17: #{tpu_custom_call.1} parent=1 // pred_fallthru
      _
    // Predicated region
    $region18: #{tpu_custom_call.1} parent=1 // pred_check
      _
    $region19: #{tpu_custom_call.1} parent=1 // pred_check_branch
      %26 = sbr.rel (0) target = $region21
    $region20: #{tpu_custom_call.1} parent=1 // pred_region
      _
    $region21: #{tpu_custom_call.1} parent=1 // pred_fallthru
      _
    // Predicated region
    $region22: #{tpu_custom_call.1} parent=1 // pred_check
      _
    $region23: #{tpu_custom_call.1} parent=1 // pred_check_branch
      %28 = sbr.rel (0) target = $region25
    $region24: #{tpu_custom_call.1} parent=1 // pred_region
      _
    $region25: #{tpu_custom_call.1} parent=1 // pred_fallthru
      _
    // Predicated region
    $region26: #{tpu_custom_call.1} parent=1 // pred_check
      _
    $region27: #{tpu_custom_call.1} parent=1 // pred_check_branch
      %30 = sbr.rel (0) target = $region29
    $region28: #{tpu_custom_call.1} parent=1 // pred_region
      _
    $region29: #{tpu_custom_call.1} parent=1 // pred_fallthru
      _
    // Predicated region
    $region30: #{tpu_custom_call.1} parent=1 // pred_check
      _
    $region31: #{tpu_custom_call.1} parent=1 // pred_check_branch
      %32 = sbr.rel (0) target = $region33
    $region32: #{tpu_custom_call.1} parent=1 // pred_region
      _
    $region33: #{tpu_custom_call.1} parent=1 // pred_fallthru
      _
    // Predicated region
    $region34: #{tpu_custom_call.1} parent=1 // pred_check
      _
    $region35: #{tpu_custom_call.1} parent=1 // pred_check_branch
      %34 = sbr.rel (0) target = $region37
    $region36: #{tpu_custom_call.1} parent=1 // pred_region
      _
    $region37: #{tpu_custom_call.1} parent=1 // pred_fallthru
      _
    // Predicated region
    $region38: #{tpu_custom_call.1} parent=1 // pred_check
      _
    $region39: #{tpu_custom_call.1} parent=1 // pred_check_branch
      %36 = sbr.rel (0) target = $region41
    $region40: #{tpu_custom_call.1} parent=1 // pred_region
      _
    $region41: #{tpu_custom_call.1} parent=1 // pred_fallthru
      _
    // Predicated region
    $region42: #{tpu_custom_call.1} parent=1 // pred_check
      _
    $region43: #{tpu_custom_call.1} parent=1 // pred_check_branch
      %38 = sbr.rel (0) target = $region45
    $region44: #{tpu_custom_call.1} parent=1 // pred_region
      _
    $region45: #{tpu_custom_call.1} parent=1 // pred_fallthru
      _
    %v40 = vld [vmem:[%s0] sm:$0xf]
    %v41 = vld [vmem:[%s0 + $0x4] sm:$0xf]
    %v42 = vld [vmem:[%s0 + $0x8] sm:$0xf]
    %v43 = vld [vmem:[%s0 + $0xc] sm:$0xf]
    %v44 = vld [vmem:[%s0 + $0x10] sm:$0xf]
    %v45 = vld [vmem:[%s0 + $0x14] sm:$0xf]
    %v46 = vld [vmem:[%s0 + $0x18] sm:$0xf]
    %v47 = vld [vmem:[%s0 + $0x1c] sm:$0xf]
    %v48 = vld [vmem:[%s0 + $0x20] sm:$0xf]
    %v49 = vld [vmem:[%s0 + $0x24] sm:$0xf]
    %v50 = vld [vmem:[%s0 + $0x28] sm:$0xf]
    %v51 = vld [vmem:[%s0 + $0x2c] sm:$0xf]
    %v52 = vld [vmem:[%s0 + $0x30] sm:$0xf]
    %v53 = vld [vmem:[%s0 + $0x34] sm:$0xf]
    %v54 = vld [vmem:[%s0 + $0x38] sm:$0xf]
    %v55 = vld [vmem:[%s0 + $0x3c] sm:$0xf]
    %v56 = vld [vmem:[%s0 + $0x40] sm:$0xf]
    %v57 = vld [vmem:[%s0 + $0x44] sm:$0xf]
    %v58 = vld [vmem:[%s0 + $0x48] sm:$0xf]
    %v59 = vld [vmem:[%s0 + $0x4c] sm:$0xf]
    %v60 = vld [vmem:[%s0 + $0x50] sm:$0xf]
    %v61 = vld [vmem:[%s0 + $0x54] sm:$0xf]
    %v62 = vld [vmem:[%s1] sm:$0x3]
    %v85 = vunpack.c.l.b16 %v40
    %v86 = vunpack.c.l.b16 %v41
    %v87 = vunpack.c.l.b16 %v42
    %v88 = vunpack.c.l.b16 %v43
    %v89 = vunpack.c.l.b16 %v44
    %v90 = vunpack.c.l.b16 %v45
    %v91 = vunpack.c.l.b16 %v46
    %v92 = vunpack.c.l.b16 %v47
    %v93 = vunpack.c.l.b16 %v48
    %v94 = vunpack.c.l.b16 %v49
    %v95 = vunpack.c.l.b16 %v50
    %v96 = vunpack.c.l.b16 %v51
    %v97 = vunpack.c.l.b16 %v52
    %v98 = vunpack.c.l.b16 %v53
    %v99 = vunpack.c.l.b16 %v54
    %v100 = vunpack.c.l.b16 %v55
    %v101 = vunpack.c.l.b16 %v56
    %v102 = vunpack.c.l.b16 %v57
    %v103 = vunpack.c.l.b16 %v58
    %v104 = vunpack.c.l.b16 %v59
    %v105 = vunpack.c.l.b16 %v60
    %v106 = vunpack.c.l.b16 %v61
    %v107 = vpack.c.b16 %v86, %v85
    %v108 = vpack.c.b16 %v88, %v87
    %v109 = vpack.c.b16 %v90, %v89
    %v110 = vpack.c.b16 %v92, %v91
    %v111 = vpack.c.b16 %v94, %v93
    %v112 = vpack.c.b16 %v96, %v95
    %v113 = vpack.c.b16 %v98, %v97
    %v114 = vpack.c.b16 %v100, %v99
    %v115 = vpack.c.b16 %v102, %v101
    %v116 = vpack.c.b16 %v104, %v103
    %v117 = vpack.c.b16 %v106, %v105
    %vm118 = vcmask 31744
    %v120 = vsel %vm118, %v107, 0
    %v123 = vsel %vm118, %v108, 0
    %v126 = vsel %vm118, %v109, 0
    %v129 = vsel %vm118, %v110, 0
    %v132 = vsel %vm118, %v111, 0
    %v135 = vsel %vm118, %v112, 0
    %v138 = vsel %vm118, %v113, 0
    %v141 = vsel %vm118, %v114, 0
    %v144 = vsel %vm118, %v115, 0
    %v147 = vsel %vm118, %v116, 0
    %v150 = vsel %vm118, %v117, 0
    %vm152 = vcmask 1041408
    %v154 = vsel %vm152, %v62, 0
    %156 = vmatprep.subr.bf16.mxu0 0
    %157 = vmatpush1.bf16.msra.mxu0 %v154
    %158 = vmatprep.subr.bf16.mxu0 0
    %159 = vmatpush1.bf16.msra.mxu0 0
    %160 = vmatprep.subr.bf16.mxu0 0
    %161 = vmatpush1.bf16.msra.mxu0 0
    %162 = vmatprep.subr.bf16.mxu0 0
    %163 = vmatpush1.bf16.msra.mxu0 0
    %164 = vmatprep.subr.bf16.mxu0 0
    %165 = vmatpush1.bf16.msra.mxu0 0
    %166 = vmatprep.subr.bf16.mxu0 0
    %167 = vmatpush1.bf16.msra.mxu0 0
    %168 = vmatprep.subr.bf16.mxu0 0
    %169 = vmatpush1.bf16.msra.mxu0 0
    %170 = vmatprep.subr.bf16.mxu0 0
    %171 = vmatpush1.bf16.msra.mxu0 0
    %172 = vmatprep.subr.bf16.mxu0 0
    %173 = vmatpush1.bf16.msra.mxu0 0
    %174 = vmatprep.subr.bf16.mxu0 0
    %175 = vmatpush1.bf16.msra.mxu0 0
    %176 = vmatprep.subr.bf16.mxu0 0
    %177 = vmatpush1.bf16.msra.mxu0 0
    %178 = vmatprep.subr.bf16.mxu0 0
    %179 = vmatpush1.bf16.msra.mxu0 0
    %180 = vmatprep.subr.bf16.mxu0 0
    %181 = vmatpush1.bf16.msra.mxu0 0
    %182 = vmatprep.subr.bf16.mxu0 0
    %183 = vmatpush1.bf16.msra.mxu0 0
    %184 = vmatprep.subr.bf16.mxu0 0
    %185 = vmatpush1.bf16.msra.mxu0 0
    %186 = vmatprep.subr.bf16.mxu0 0
    %187 = vmatpush1.bf16.msra.mxu0 0
    %188 = vmatprep.mubr.bf16.mxu0 0
    %189 = vmatmul.mubr.bf16.gmra.mrb[0].mxu0 %v120
    %v190 = vpop.f32.mrb[0].mxu0
    %v191 = vadd.f32 0.0, %v190
    %v192 = vpop.f32.mrb[0].mxu0
    %v193 = vpop.f32.mrb[0].mxu0
    %v194 = vadd.f32 0.0, %v193
    %v195 = vpop.f32.mrb[0].mxu0
    %196 = vmatprep.mubr.bf16.mxu0 0
    %197 = vmatmul.mubr.bf16.gmra.mrb[0].mxu0 %v123
    %v198 = vpop.f32.mrb[0].mxu0
    %v199 = vadd.f32 0.0, %v198
    %v200 = vpop.f32.mrb[0].mxu0
    %v201 = vpop.f32.mrb[0].mxu0
    %v202 = vadd.f32 0.0, %v201
    %v203 = vpop.f32.mrb[0].mxu0
    %204 = vmatprep.mubr.bf16.mxu0 0
    %205 = vmatmul.mubr.bf16.gmra.mrb[0].mxu0 %v126
    %v206 = vpop.f32.mrb[0].mxu0
    %v207 = vadd.f32 0.0, %v206
    %v208 = vpop.f32.mrb[0].mxu0
    %v209 = vpop.f32.mrb[0].mxu0
    %v210 = vadd.f32 0.0, %v209
    %v211 = vpop.f32.mrb[0].mxu0
    %212 = vmatprep.mubr.bf16.mxu0 0
    %213 = vmatmul.mubr.bf16.gmra.mrb[0].mxu0 %v129
    %v214 = vpop.f32.mrb[0].mxu0
    %v215 = vadd.f32 0.0, %v214
    %v216 = vpop.f32.mrb[0].mxu0
    %v217 = vpop.f32.mrb[0].mxu0
    %v218 = vadd.f32 0.0, %v217
    %v219 = vpop.f32.mrb[0].mxu0
    %220 = vmatprep.mubr.bf16.mxu0 0
    %221 = vmatmul.mubr.bf16.gmra.mrb[0].mxu0 %v132
    %v222 = vpop.f32.mrb[0].mxu0
    %v223 = vadd.f32 0.0, %v222
    %v224 = vpop.f32.mrb[0].mxu0
    %v225 = vpop.f32.mrb[0].mxu0
    %v226 = vadd.f32 0.0, %v225
    %v227 = vpop.f32.mrb[0].mxu0
    %228 = vmatprep.mubr.bf16.mxu0 0
    %229 = vmatmul.mubr.bf16.gmra.mrb[0].mxu0 %v135
    %v230 = vpop.f32.mrb[0].mxu0
    %v231 = vadd.f32 0.0, %v230
    %v232 = vpop.f32.mrb[0].mxu0
    %v233 = vpop.f32.mrb[0].mxu0
    %v234 = vadd.f32 0.0, %v233
    %v235 = vpop.f32.mrb[0].mxu0
    %236 = vmatprep.mubr.bf16.mxu0 0
    %237 = vmatmul.mubr.bf16.gmra.mrb[0].mxu0 %v138
    %v238 = vpop.f32.mrb[0].mxu0
    %v239 = vadd.f32 0.0, %v238
    %v240 = vpop.f32.mrb[0].mxu0
    %v241 = vpop.f32.mrb[0].mxu0
    %v242 = vadd.f32 0.0, %v241
    %v243 = vpop.f32.mrb[0].mxu0
    %244 = vmatprep.mubr.bf16.mxu0 0
    %245 = vmatmul.mubr.bf16.gmra.mrb[0].mxu0 %v141
    %v246 = vpop.f32.mrb[0].mxu0
    %v247 = vadd.f32 0.0, %v246
    %v248 = vpop.f32.mrb[0].mxu0
    %v249 = vpop.f32.mrb[0].mxu0
    %v250 = vadd.f32 0.0, %v249
    %v251 = vpop.f32.mrb[0].mxu0
    %252 = vmatprep.mubr.bf16.mxu0 0
    %253 = vmatmul.mubr.bf16.gmra.mrb[0].mxu0 %v144
    %v254 = vpop.f32.mrb[0].mxu0
    %v255 = vadd.f32 0.0, %v254
    %v256 = vpop.f32.mrb[0].mxu0
    %v257 = vpop.f32.mrb[0].mxu0
    %v258 = vadd.f32 0.0, %v257
    %v259 = vpop.f32.mrb[0].mxu0
    %260 = vmatprep.mubr.bf16.mxu0 0
    %261 = vmatmul.mubr.bf16.gmra.mrb[0].mxu0 %v147
    %v262 = vpop.f32.mrb[0].mxu0
    %v263 = vadd.f32 0.0, %v262
    %v264 = vpop.f32.mrb[0].mxu0
    %v265 = vpop.f32.mrb[0].mxu0
    %v266 = vadd.f32 0.0, %v265
    %v267 = vpop.f32.mrb[0].mxu0
    %268 = vmatprep.mubr.bf16.mxu0 0
    %269 = vmatmul.mubr.bf16.gmra.mrb[0].mxu0 %v150
    %v270 = vpop.f32.mrb[0].mxu0
    %v271 = vadd.f32 0.0, %v270
    %v272 = vpop.f32.mrb[0].mxu0
    %v273 = vpop.f32.mrb[0].mxu0
    %v274 = vadd.f32 0.0, %v273
    %v275 = vpop.f32.mrb[0].mxu0
    %276 = vdwg.mxu0
    %v277 = vld [vmem:[%s2] sm:$0x1]
    %v278 = vld [vmem:[%s2 + $0x1] sm:$0x1]
    %v279 = vld [vmem:[%s2 + $0x2] sm:$0x1]
    %v280 = vld [vmem:[%s2 + $0x3] sm:$0x1]
    %v281 = vld [vmem:[%s2 + $0x4] sm:$0x1]
    %v282 = vld [vmem:[%s2 + $0x5] sm:$0x1]
    %v283 = vld [vmem:[%s2 + $0x6] sm:$0x1]
    %v284 = vld [vmem:[%s2 + $0x7] sm:$0x1]
    %v285 = vld [vmem:[%s2 + $0x8] sm:$0x1]
    %v286 = vld [vmem:[%s2 + $0x9] sm:$0x1]
    %v287 = vld [vmem:[%s2 + $0xa] sm:$0x1]
    %v299 = vlaneseq
    %v300 = vshrl.u32 %v299, 7
    %v301 = vsub.s32 0, %v300
    %v302 = vrot.slane %v277, %v301
    %v303 = vlaneseq
    %v304 = vshrl.u32 %v303, 7
    %v305 = vsub.s32 0, %v304
    %v306 = vrot.slane %v278, %v305
    %v307 = vlaneseq
    %v308 = vshrl.u32 %v307, 7
    %v309 = vsub.s32 0, %v308
    %v310 = vrot.slane %v279, %v309
    %v311 = vlaneseq
    %v312 = vshrl.u32 %v311, 7
    %v313 = vsub.s32 0, %v312
    %v314 = vrot.slane %v280, %v313
    %v315 = vlaneseq
    %v316 = vshrl.u32 %v315, 7
    %v317 = vsub.s32 0, %v316
    %v318 = vrot.slane %v281, %v317
    %v319 = vlaneseq
    %v320 = vshrl.u32 %v319, 7
    %v321 = vsub.s32 0, %v320
    %v322 = vrot.slane %v282, %v321
    %v323 = vlaneseq
    %v324 = vshrl.u32 %v323, 7
    %v325 = vsub.s32 0, %v324
    %v326 = vrot.slane %v283, %v325
    %v327 = vlaneseq
    %v328 = vshrl.u32 %v327, 7
    %v329 = vsub.s32 0, %v328
    %v330 = vrot.slane %v284, %v329
    %v331 = vlaneseq
    %v332 = vshrl.u32 %v331, 7
    %v333 = vsub.s32 0, %v332
    %v334 = vrot.slane %v285, %v333
    %v335 = vlaneseq
    %v336 = vshrl.u32 %v335, 7
    %v337 = vsub.s32 0, %v336
    %v338 = vrot.slane %v286, %v337
    %v339 = vlaneseq
    %v340 = vshrl.u32 %v339, 7
    %v341 = vsub.s32 0, %v340
    %v342 = vrot.slane %v287, %v341
    %v354 = vadd.f32 %v191, %v302
    %v355 = vadd.f32 %v194, %v302
    %v356 = vadd.f32 %v199, %v306
    %v357 = vadd.f32 %v202, %v306
    %v358 = vadd.f32 %v207, %v310
    %v359 = vadd.f32 %v210, %v310
    %v360 = vadd.f32 %v215, %v314
    %v361 = vadd.f32 %v218, %v314
    %v362 = vadd.f32 %v223, %v318
    %v363 = vadd.f32 %v226, %v318
    %v364 = vadd.f32 %v231, %v322
    %v365 = vadd.f32 %v234, %v322
    %v366 = vadd.f32 %v239, %v326
    %v367 = vadd.f32 %v242, %v326
    %v368 = vadd.f32 %v247, %v330
    %v369 = vadd.f32 %v250, %v330
    %v370 = vadd.f32 %v255, %v334
    %v371 = vadd.f32 %v258, %v334
    %v372 = vadd.f32 %v263, %v338
    %v373 = vadd.f32 %v266, %v338
    %v374 = vadd.f32 %v271, %v342
    %v375 = vadd.f32 %v274, %v342
    %v376 = vmax.f32 %v354, 0.0
    %v377 = vmax.f32 %v355, 0.0
    %v378 = vmax.f32 %v356, 0.0
    %v379 = vmax.f32 %v357, 0.0
    %v380 = vmax.f32 %v358, 0.0
    %v381 = vmax.f32 %v359, 0.0
    %v382 = vmax.f32 %v360, 0.0
    %v383 = vmax.f32 %v361, 0.0
    %v384 = vmax.f32 %v362, 0.0
    %v385 = vmax.f32 %v363, 0.0
    %v386 = vmax.f32 %v364, 0.0
    %v387 = vmax.f32 %v365, 0.0
    %v388 = vmax.f32 %v366, 0.0
    %v389 = vmax.f32 %v367, 0.0
    %v390 = vmax.f32 %v368, 0.0
    %v391 = vmax.f32 %v369, 0.0
    %v392 = vmax.f32 %v370, 0.0
    %v393 = vmax.f32 %v371, 0.0
    %v394 = vmax.f32 %v372, 0.0
    %v395 = vmax.f32 %v373, 0.0
    %v396 = vmax.f32 %v374, 0.0
    %v397 = vmax.f32 %v375, 0.0
    %v398 = vpack.c.bf16 %v377, %v376
    %v399 = vpack.c.bf16 %v379, %v378
    %v400 = vpack.c.bf16 %v381, %v380
    %v401 = vpack.c.bf16 %v383, %v382
    %v402 = vpack.c.bf16 %v385, %v384
    %v403 = vpack.c.bf16 %v387, %v386
    %v404 = vpack.c.bf16 %v389, %v388
    %v405 = vpack.c.bf16 %v391, %v390
    %v406 = vpack.c.bf16 %v393, %v392
    %v407 = vpack.c.bf16 %v395, %v394
    %v408 = vpack.c.bf16 %v397, %v396
    %v409 = vld [vmem:[%s3] sm:$0xf]
    %v410 = vld [vmem:[%s3 + $0x4] sm:$0xf]
    %v411 = vld [vmem:[%s3 + $0x8] sm:$0xf]
    %v412 = vld [vmem:[%s3 + $0xc] sm:$0xf]
    %v413 = vld [vmem:[%s3 + $0x10] sm:$0xf]
    %v414 = vld [vmem:[%s3 + $0x14] sm:$0xf]
    %v415 = vld [vmem:[%s3 + $0x18] sm:$0xf]
    %v416 = vld [vmem:[%s3 + $0x1c] sm:$0xf]
    %v417 = vld [vmem:[%s4] sm:$0x1]
    %v419 = vlaneseq
    %v420 = vshrl.u32 %v419, 7
    %v421 = vsub.s32 0, %v420
    %v422 = vrot.slane %v417, %v421
    %v432 = vunpack.c.l.b16 %v409
    %v433 = vunpack.c.l.b16 %v410
    %v434 = vunpack.c.l.b16 %v411
    %v435 = vunpack.c.l.b16 %v412
    %v436 = vunpack.c.l.b16 %v413
    %v437 = vunpack.c.l.b16 %v414
    %v438 = vunpack.c.l.b16 %v415
    %v439 = vunpack.c.l.b16 %v416
    %v440 = vpack.c.b16 %v433, %v432
    %v441 = vpack.c.b16 %v435, %v434
    %v442 = vpack.c.b16 %v437, %v436
    %v443 = vpack.c.b16 %v439, %v438
    %vm448 = vcmask 523264
    %v450 = vsel %vm448, %v398, 0
    %v453 = vsel %vm448, %v399, 0
    %v456 = vsel %vm448, %v400, 0
    %v459 = vsel %vm448, %v401, 0
    %v462 = vsel %vm448, %v402, 0
    %v465 = vsel %vm448, %v403, 0
    %v468 = vsel %vm448, %v404, 0
    %v471 = vsel %vm448, %v405, 0
    %v474 = vsel %vm448, %v406, 0
    %v477 = vsel %vm448, %v407, 0
    %v480 = vsel %vm448, %v408, 0
    %482 = vmatprep.subr.bf16.mxu0 0
    %483 = vmatpush1.bf16.msra.mxu0 %v440
    %484 = vmatprep.subr.bf16.mxu0 0
    %485 = vmatpush1.bf16.msra.mxu0 %v441
    %486 = vmatprep.subr.bf16.mxu0 0
    %487 = vmatpush1.bf16.msra.mxu0 %v442
    %488 = vmatprep.subr.bf16.mxu0 0
    %489 = vmatpush1.bf16.msra.mxu0 %v443
    %490 = vmatprep.subr.bf16.mxu0 0
    %491 = vmatpush1.bf16.msra.mxu0 0
    %492 = vmatprep.subr.bf16.mxu0 0
    %493 = vmatpush1.bf16.msra.mxu0 0
    %494 = vmatprep.subr.bf16.mxu0 0
    %495 = vmatpush1.bf16.msra.mxu0 0
    %496 = vmatprep.subr.bf16.mxu0 0
    %497 = vmatpush1.bf16.msra.mxu0 0
    %498 = vmatprep.subr.bf16.mxu0 0
    %499 = vmatpush1.bf16.msra.mxu0 0
    %500 = vmatprep.subr.bf16.mxu0 0
    %501 = vmatpush1.bf16.msra.mxu0 0
    %502 = vmatprep.subr.bf16.mxu0 0
    %503 = vmatpush1.bf16.msra.mxu0 0
    %504 = vmatprep.subr.bf16.mxu0 0
    %505 = vmatpush1.bf16.msra.mxu0 0
    %506 = vmatprep.subr.bf16.mxu0 0
    %507 = vmatpush1.bf16.msra.mxu0 0
    %508 = vmatprep.subr.bf16.mxu0 0
    %509 = vmatpush1.bf16.msra.mxu0 0
    %510 = vmatprep.subr.bf16.mxu0 0
    %511 = vmatpush1.bf16.msra.mxu0 0
    %512 = vmatprep.subr.bf16.mxu0 0
    %513 = vmatpush1.bf16.msra.mxu0 0
    %514 = vmatprep.mubr.bf16.mxu0 0
    %515 = vmatmul.mubr.bf16.gmra.mrb[0].mxu0 %v450
    %v516 = vpop.f32.mrb[0].mxu0
    %v517 = vadd.f32 %v422, %v516
    %v518 = vpop.f32.mrb[0].mxu0
    %v519 = vpop.f32.mrb[0].mxu0
    %v520 = vadd.f32 %v422, %v519
    %v521 = vpop.f32.mrb[0].mxu0
    %522 = vmatprep.mubr.bf16.mxu0 0
    %523 = vmatmul.mubr.bf16.gmra.mrb[0].mxu0 %v453
    %v524 = vpop.f32.mrb[0].mxu0
    %v525 = vadd.f32 %v422, %v524
    %v526 = vpop.f32.mrb[0].mxu0
    %v527 = vpop.f32.mrb[0].mxu0
    %v528 = vadd.f32 %v422, %v527
    %v529 = vpop.f32.mrb[0].mxu0
    %530 = vmatprep.mubr.bf16.mxu0 0
    %531 = vmatmul.mubr.bf16.gmra.mrb[0].mxu0 %v456
    %v532 = vpop.f32.mrb[0].mxu0
    %v533 = vadd.f32 %v422, %v532
    %v534 = vpop.f32.mrb[0].mxu0
    %v535 = vpop.f32.mrb[0].mxu0
    %v536 = vadd.f32 %v422, %v535
    %v537 = vpop.f32.mrb[0].mxu0
    %538 = vmatprep.mubr.bf16.mxu0 0
    %539 = vmatmul.mubr.bf16.gmra.mrb[0].mxu0 %v459
    %v540 = vpop.f32.mrb[0].mxu0
    %v541 = vadd.f32 %v422, %v540
    %v542 = vpop.f32.mrb[0].mxu0
    %v543 = vpop.f32.mrb[0].mxu0
    %v544 = vadd.f32 %v422, %v543
    %v545 = vpop.f32.mrb[0].mxu0
    %546 = vmatprep.mubr.bf16.mxu0 0
    %547 = vmatmul.mubr.bf16.gmra.mrb[0].mxu0 %v462
    %v548 = vpop.f32.mrb[0].mxu0
    %v549 = vadd.f32 %v422, %v548
    %v550 = vpop.f32.mrb[0].mxu0
    %v551 = vpop.f32.mrb[0].mxu0
    %v552 = vadd.f32 %v422, %v551
    %v553 = vpop.f32.mrb[0].mxu0
    %554 = vmatprep.mubr.bf16.mxu0 0
    %555 = vmatmul.mubr.bf16.gmra.mrb[0].mxu0 %v465
    %v556 = vpop.f32.mrb[0].mxu0
    %v557 = vadd.f32 %v422, %v556
    %v558 = vpop.f32.mrb[0].mxu0
    %v559 = vpop.f32.mrb[0].mxu0
    %v560 = vadd.f32 %v422, %v559
    %v561 = vpop.f32.mrb[0].mxu0
    %562 = vmatprep.mubr.bf16.mxu0 0
    %563 = vmatmul.mubr.bf16.gmra.mrb[0].mxu0 %v468
    %v564 = vpop.f32.mrb[0].mxu0
    %v565 = vadd.f32 %v422, %v564
    %v566 = vpop.f32.mrb[0].mxu0
    %v567 = vpop.f32.mrb[0].mxu0
    %v568 = vadd.f32 %v422, %v567
    %v569 = vpop.f32.mrb[0].mxu0
    %570 = vmatprep.mubr.bf16.mxu0 0
    %571 = vmatmul.mubr.bf16.gmra.mrb[0].mxu0 %v471
    %v572 = vpop.f32.mrb[0].mxu0
    %v573 = vadd.f32 %v422, %v572
    %v574 = vpop.f32.mrb[0].mxu0
    %v575 = vpop.f32.mrb[0].mxu0
    %v576 = vadd.f32 %v422, %v575
    %v577 = vpop.f32.mrb[0].mxu0
    %578 = vmatprep.mubr.bf16.mxu0 0
    %579 = vmatmul.mubr.bf16.gmra.mrb[0].mxu0 %v474
    %v580 = vpop.f32.mrb[0].mxu0
    %v581 = vadd.f32 %v422, %v580
    %v582 = vpop.f32.mrb[0].mxu0
    %v583 = vpop.f32.mrb[0].mxu0
    %v584 = vadd.f32 %v422, %v583
    %v585 = vpop.f32.mrb[0].mxu0
    %586 = vmatprep.mubr.bf16.mxu0 0
    %587 = vmatmul.mubr.bf16.gmra.mrb[0].mxu0 %v477
    %v588 = vpop.f32.mrb[0].mxu0
    %v589 = vadd.f32 %v422, %v588
    %v590 = vpop.f32.mrb[0].mxu0
    %v591 = vpop.f32.mrb[0].mxu0
    %v592 = vadd.f32 %v422, %v591
    %v593 = vpop.f32.mrb[0].mxu0
    %594 = vmatprep.mubr.bf16.mxu0 0
    %595 = vmatmul.mubr.bf16.gmra.mrb[0].mxu0 %v480
    %v596 = vpop.f32.mrb[0].mxu0
    %v597 = vadd.f32 %v422, %v596
    %v598 = vpop.f32.mrb[0].mxu0
    %v599 = vpop.f32.mrb[0].mxu0
    %v600 = vadd.f32 %v422, %v599
    %v601 = vpop.f32.mrb[0].mxu0
    %602 = vdwg.mxu0
    %v603 = vmax.f32 %v517, 0.0
    %v604 = vmax.f32 %v520, 0.0
    %v605 = vmax.f32 %v525, 0.0
    %v606 = vmax.f32 %v528, 0.0
    %v607 = vmax.f32 %v533, 0.0
    %v608 = vmax.f32 %v536, 0.0
    %v609 = vmax.f32 %v541, 0.0
    %v610 = vmax.f32 %v544, 0.0
    %v611 = vmax.f32 %v549, 0.0
    %v612 = vmax.f32 %v552, 0.0
    %v613 = vmax.f32 %v557, 0.0
    %v614 = vmax.f32 %v560, 0.0
    %v615 = vmax.f32 %v565, 0.0
    %v616 = vmax.f32 %v568, 0.0
    %v617 = vmax.f32 %v573, 0.0
    %v618 = vmax.f32 %v576, 0.0
    %v619 = vmax.f32 %v581, 0.0
    %v620 = vmax.f32 %v584, 0.0
    %v621 = vmax.f32 %v589, 0.0
    %v622 = vmax.f32 %v592, 0.0
    %v623 = vmax.f32 %v597, 0.0
    %v624 = vmax.f32 %v600, 0.0
    %v625 = vpack.c.bf16 %v604, %v603
    %v626 = vpack.c.bf16 %v606, %v605
    %v627 = vpack.c.bf16 %v608, %v607
    %v628 = vpack.c.bf16 %v610, %v609
    %v629 = vpack.c.bf16 %v612, %v611
    %v630 = vpack.c.bf16 %v614, %v613
    %v631 = vpack.c.bf16 %v616, %v615
    %v632 = vpack.c.bf16 %v618, %v617
    %v633 = vpack.c.bf16 %v620, %v619
    %v634 = vpack.c.bf16 %v622, %v621
    %v635 = vpack.c.bf16 %v624, %v623
    %v636 = vld [vmem:[%s6] sm:$0xff]
    %v637 = vld [vmem:[%s5] sm:$0xff]
    %v638 = vld [vmem:[%s5 + $0x8] sm:$0xff]
    %v639 = vld [vmem:[%s5 + $0x10] sm:$0xff]
    %v640 = vld [vmem:[%s5 + $0x18] sm:$0xff]
    %v641 = vld [vmem:[%s5 + $0x20] sm:$0xff]
    %v642 = vld [vmem:[%s5 + $0x28] sm:$0xff]
    %v643 = vld [vmem:[%s5 + $0x30] sm:$0xff]
    %v644 = vld [vmem:[%s5 + $0x38] sm:$0xff]
    %v645 = vld [vmem:[%s5 + $0x40] sm:$0xff]
    %v646 = vld [vmem:[%s5 + $0x48] sm:$0xff]
    %v647 = vld [vmem:[%s5 + $0x50] sm:$0xff]
    %v648 = vld [vmem:[%s5 + $0x58] sm:$0xff]
    %v649 = vld [vmem:[%s5 + $0x60] sm:$0xff]
    %v650 = vld [vmem:[%s5 + $0x68] sm:$0xff]
    %v651 = vld [vmem:[%s5 + $0x70] sm:$0xff]
    %v652 = vld [vmem:[%s5 + $0x78] sm:$0xff]
    %v653 = vld [vmem:[%s5 + $0x80] sm:$0xff]
    %v654 = vld [vmem:[%s5 + $0x88] sm:$0xff]
    %v655 = vld [vmem:[%s5 + $0x90] sm:$0xff]
    %v656 = vld [vmem:[%s5 + $0x98] sm:$0xff]
    %v657 = vld [vmem:[%s5 + $0xa0] sm:$0xff]
    %v658 = vld [vmem:[%s5 + $0xa8] sm:$0xff]
    %v659 = vld [vmem:[%s5 + $0xb0] sm:$0xff]
    %v660 = vld [vmem:[%s5 + $0xb8] sm:$0xff]
    %v661 = vld [vmem:[%s5 + $0xc0] sm:$0xff]
    %v662 = vld [vmem:[%s5 + $0xc8] sm:$0xff]
    %v663 = vld [vmem:[%s5 + $0xd0] sm:$0xff]
    %v664 = vld [vmem:[%s5 + $0xd8] sm:$0xff]
    %v665 = vld [vmem:[%s5 + $0xe0] sm:$0xff]
    %v666 = vld [vmem:[%s5 + $0xe8] sm:$0xff]
    %v667 = vld [vmem:[%s5 + $0xf0] sm:$0xff]
    %v668 = vld [vmem:[%s5 + $0xf8] sm:$0xff]
    %v669 = vld [vmem:[%s5 + $0x100] sm:$0xff]
    %v670 = vld [vmem:[%s5 + $0x108] sm:$0xff]
    %v671 = vld [vmem:[%s5 + $0x110] sm:$0xff]
    %v672 = vld [vmem:[%s5 + $0x118] sm:$0xff]
    %v673 = vld [vmem:[%s5 + $0x120] sm:$0xff]
    %v674 = vld [vmem:[%s5 + $0x128] sm:$0xff]
    %v675 = vld [vmem:[%s5 + $0x130] sm:$0xff]
    %v676 = vld [vmem:[%s5 + $0x138] sm:$0xff]
    %v677 = vld [vmem:[%s5 + $0x140] sm:$0xff]
    %v678 = vld [vmem:[%s5 + $0x148] sm:$0xff]
    %v679 = vld [vmem:[%s5 + $0x150] sm:$0xff]
    %v680 = vld [vmem:[%s5 + $0x158] sm:$0xff]
    %v681 = vld [vmem:[%s5 + $0x160] sm:$0xff]
    %v682 = vld [vmem:[%s5 + $0x168] sm:$0xff]
    %v683 = vld [vmem:[%s5 + $0x170] sm:$0xff]
    %v684 = vld [vmem:[%s5 + $0x178] sm:$0xff]
    %v685 = vld [vmem:[%s5 + $0x180] sm:$0xff]
    %v686 = vld [vmem:[%s5 + $0x188] sm:$0xff]
    %v687 = vld [vmem:[%s5 + $0x190] sm:$0xff]
    %v688 = vld [vmem:[%s5 + $0x198] sm:$0xff]
    %v689 = vld [vmem:[%s5 + $0x1a0] sm:$0xff]
    %v690 = vld [vmem:[%s5 + $0x1a8] sm:$0xff]
    %v691 = vld [vmem:[%s5 + $0x1b0] sm:$0xff]
    %v692 = vld [vmem:[%s5 + $0x1b8] sm:$0xff]
    %v693 = vld [vmem:[%s5 + $0x1c0] sm:$0xff]
    %v694 = vld [vmem:[%s5 + $0x1c8] sm:$0xff]
    %v695 = vld [vmem:[%s5 + $0x1d0] sm:$0xff]
    %v696 = vld [vmem:[%s5 + $0x1d8] sm:$0xff]
    %v697 = vld [vmem:[%s5 + $0x1e0] sm:$0xff]
    %v698 = vld [vmem:[%s5 + $0x1e8] sm:$0xff]
    %v699 = vld [vmem:[%s5 + $0x1f0] sm:$0xff]
    %v700 = vld [vmem:[%s5 + $0x1f8] sm:$0xff]
    %v702 = vlaneseq
    %v703 = vshrl.u32 %v702, 7
    %v704 = vsub.s32 0, %v703
    %v705 = vrot.slane %v636, %v704
    %v706 = vlaneseq
    %v707 = vshrl.u32 %v706, 7
    %v708 = vsub.s32 1, %v707
    %v709 = vrot.slane %v636, %v708
    %v710 = vlaneseq
    %v711 = vshrl.u32 %v710, 7
    %v712 = vsub.s32 2, %v711
    %v713 = vrot.slane %v636, %v712
    %v714 = vlaneseq
    %v715 = vshrl.u32 %v714, 7
    %v716 = vsub.s32 3, %v715
    %v717 = vrot.slane %v636, %v716
    %v718 = vlaneseq
    %v719 = vshrl.u32 %v718, 7
    %v720 = vsub.s32 4, %v719
    %v721 = vrot.slane %v636, %v720
    %v722 = vlaneseq
    %v723 = vshrl.u32 %v722, 7
    %v724 = vsub.s32 5, %v723
    %v725 = vrot.slane %v636, %v724
    %v726 = vlaneseq
    %v727 = vshrl.u32 %v726, 7
    %v728 = vsub.s32 6, %v727
    %v729 = vrot.slane %v636, %v728
    %v730 = vlaneseq
    %v731 = vshrl.u32 %v730, 7
    %v732 = vsub.s32 7, %v731
    %v733 = vrot.slane %v636, %v732
    %v806 = vunpack.c.l.b16 %v637
    %v807 = vunpack.c.h.b16 %v637
    %v808 = vunpack.c.l.b16 %v638
    %v809 = vunpack.c.h.b16 %v638
    %v810 = vunpack.c.l.b16 %v639
    %v811 = vunpack.c.h.b16 %v639
    %v812 = vunpack.c.l.b16 %v640
    %v813 = vunpack.c.h.b16 %v640
    %v814 = vunpack.c.l.b16 %v641
    %v815 = vunpack.c.h.b16 %v641
    %v816 = vunpack.c.l.b16 %v642
    %v817 = vunpack.c.h.b16 %v642
    %v818 = vunpack.c.l.b16 %v643
    %v819 = vunpack.c.h.b16 %v643
    %v820 = vunpack.c.l.b16 %v644
    %v821 = vunpack.c.h.b16 %v644
    %v822 = vunpack.c.l.b16 %v645
    %v823 = vunpack.c.h.b16 %v645
    %v824 = vunpack.c.l.b16 %v646
    %v825 = vunpack.c.h.b16 %v646
    %v826 = vunpack.c.l.b16 %v647
    %v827 = vunpack.c.h.b16 %v647
    %v828 = vunpack.c.l.b16 %v648
    %v829 = vunpack.c.h.b16 %v648
    %v830 = vunpack.c.l.b16 %v649
    %v831 = vunpack.c.h.b16 %v649
    %v832 = vunpack.c.l.b16 %v650
    %v833 = vunpack.c.h.b16 %v650
    %v834 = vunpack.c.l.b16 %v651
    %v835 = vunpack.c.h.b16 %v651
    %v836 = vunpack.c.l.b16 %v652
    %v837 = vunpack.c.h.b16 %v652
    %v838 = vunpack.c.l.b16 %v653
    %v839 = vunpack.c.h.b16 %v653
    %v840 = vunpack.c.l.b16 %v654
    %v841 = vunpack.c.h.b16 %v654
    %v842 = vunpack.c.l.b16 %v655
    %v843 = vunpack.c.h.b16 %v655
    %v844 = vunpack.c.l.b16 %v656
    %v845 = vunpack.c.h.b16 %v656
    %v846 = vunpack.c.l.b16 %v657
    %v847 = vunpack.c.h.b16 %v657
    %v848 = vunpack.c.l.b16 %v658
    %v849 = vunpack.c.h.b16 %v658
    %v850 = vunpack.c.l.b16 %v659
    %v851 = vunpack.c.h.b16 %v659
    %v852 = vunpack.c.l.b16 %v660
    %v853 = vunpack.c.h.b16 %v660
    %v854 = vunpack.c.l.b16 %v661
    %v855 = vunpack.c.h.b16 %v661
    %v856 = vunpack.c.l.b16 %v662
    %v857 = vunpack.c.h.b16 %v662
    %v858 = vunpack.c.l.b16 %v663
    %v859 = vunpack.c.h.b16 %v663
    %v860 = vunpack.c.l.b16 %v664
    %v861 = vunpack.c.h.b16 %v664
    %v862 = vunpack.c.l.b16 %v665
    %v863 = vunpack.c.h.b16 %v665
    %v864 = vunpack.c.l.b16 %v666
    %v865 = vunpack.c.h.b16 %v666
    %v866 = vunpack.c.l.b16 %v667
    %v867 = vunpack.c.h.b16 %v667
    %v868 = vunpack.c.l.b16 %v668
    %v869 = vunpack.c.h.b16 %v668
    %v870 = vunpack.c.l.b16 %v669
    %v871 = vunpack.c.h.b16 %v669
    %v872 = vunpack.c.l.b16 %v670
    %v873 = vunpack.c.h.b16 %v670
    %v874 = vunpack.c.l.b16 %v671
    %v875 = vunpack.c.h.b16 %v671
    %v876 = vunpack.c.l.b16 %v672
    %v877 = vunpack.c.h.b16 %v672
    %v878 = vunpack.c.l.b16 %v673
    %v879 = vunpack.c.h.b16 %v673
    %v880 = vunpack.c.l.b16 %v674
    %v881 = vunpack.c.h.b16 %v674
    %v882 = vunpack.c.l.b16 %v675
    %v883 = vunpack.c.h.b16 %v675
    %v884 = vunpack.c.l.b16 %v676
    %v885 = vunpack.c.h.b16 %v676
    %v886 = vunpack.c.l.b16 %v677
    %v887 = vunpack.c.h.b16 %v677
    %v888 = vunpack.c.l.b16 %v678
    %v889 = vunpack.c.h.b16 %v678
    %v890 = vunpack.c.l.b16 %v679
    %v891 = vunpack.c.h.b16 %v679
    %v892 = vunpack.c.l.b16 %v680
    %v893 = vunpack.c.h.b16 %v680
    %v894 = vunpack.c.l.b16 %v681
    %v895 = vunpack.c.h.b16 %v681
    %v896 = vunpack.c.l.b16 %v682
    %v897 = vunpack.c.h.b16 %v682
    %v898 = vunpack.c.l.b16 %v683
    %v899 = vunpack.c.h.b16 %v683
    %v900 = vunpack.c.l.b16 %v684
    %v901 = vunpack.c.h.b16 %v684
    %v902 = vunpack.c.l.b16 %v685
    %v903 = vunpack.c.h.b16 %v685
    %v904 = vunpack.c.l.b16 %v686
    %v905 = vunpack.c.h.b16 %v686
    %v906 = vunpack.c.l.b16 %v687
    %v907 = vunpack.c.h.b16 %v687
    %v908 = vunpack.c.l.b16 %v688
    %v909 = vunpack.c.h.b16 %v688
    %v910 = vunpack.c.l.b16 %v689
    %v911 = vunpack.c.h.b16 %v689
    %v912 = vunpack.c.l.b16 %v690
    %v913 = vunpack.c.h.b16 %v690
    %v914 = vunpack.c.l.b16 %v691
    %v915 = vunpack.c.h.b16 %v691
    %v916 = vunpack.c.l.b16 %v692
    %v917 = vunpack.c.h.b16 %v692
    %v918 = vunpack.c.l.b16 %v693
    %v919 = vunpack.c.h.b16 %v693
    %v920 = vunpack.c.l.b16 %v694
    %v921 = vunpack.c.h.b16 %v694
    %v922 = vunpack.c.l.b16 %v695
    %v923 = vunpack.c.h.b16 %v695
    %v924 = vunpack.c.l.b16 %v696
    %v925 = vunpack.c.h.b16 %v696
    %v926 = vunpack.c.l.b16 %v697
    %v927 = vunpack.c.h.b16 %v697
    %v928 = vunpack.c.l.b16 %v698
    %v929 = vunpack.c.h.b16 %v698
    %v930 = vunpack.c.l.b16 %v699
    %v931 = vunpack.c.h.b16 %v699
    %v932 = vunpack.c.l.b16 %v700
    %v933 = vunpack.c.h.b16 %v700
    %v934 = vpack.c.b16 %v814, %v806
    %v935 = vpack.c.b16 %v815, %v807
    %v936 = vpack.c.b16 %v816, %v808
    %v937 = vpack.c.b16 %v817, %v809
    %v938 = vpack.c.b16 %v818, %v810
    %v939 = vpack.c.b16 %v819, %v811
    %v940 = vpack.c.b16 %v820, %v812
    %v941 = vpack.c.b16 %v821, %v813
    %v942 = vpack.c.b16 %v830, %v822
    %v943 = vpack.c.b16 %v831, %v823
    %v944 = vpack.c.b16 %v832, %v824
    %v945 = vpack.c.b16 %v833, %v825
    %v946 = vpack.c.b16 %v834, %v826
    %v947 = vpack.c.b16 %v835, %v827
    %v948 = vpack.c.b16 %v836, %v828
    %v949 = vpack.c.b16 %v837, %v829
    %v950 = vpack.c.b16 %v846, %v838
    %v951 = vpack.c.b16 %v847, %v839
    %v952 = vpack.c.b16 %v848, %v840
    %v953 = vpack.c.b16 %v849, %v841
    %v954 = vpack.c.b16 %v850, %v842
    %v955 = vpack.c.b16 %v851, %v843
    %v956 = vpack.c.b16 %v852, %v844
    %v957 = vpack.c.b16 %v853, %v845
    %v958 = vpack.c.b16 %v862, %v854
    %v959 = vpack.c.b16 %v863, %v855
    %v960 = vpack.c.b16 %v864, %v856
    %v961 = vpack.c.b16 %v865, %v857
    %v962 = vpack.c.b16 %v866, %v858
    %v963 = vpack.c.b16 %v867, %v859
    %v964 = vpack.c.b16 %v868, %v860
    %v965 = vpack.c.b16 %v869, %v861
    %v966 = vpack.c.b16 %v878, %v870
    %v967 = vpack.c.b16 %v879, %v871
    %v968 = vpack.c.b16 %v880, %v872
    %v969 = vpack.c.b16 %v881, %v873
    %v970 = vpack.c.b16 %v882, %v874
    %v971 = vpack.c.b16 %v883, %v875
    %v972 = vpack.c.b16 %v884, %v876
    %v973 = vpack.c.b16 %v885, %v877
    %v974 = vpack.c.b16 %v894, %v886
    %v975 = vpack.c.b16 %v895, %v887
    %v976 = vpack.c.b16 %v896, %v888
    %v977 = vpack.c.b16 %v897, %v889
    %v978 = vpack.c.b16 %v898, %v890
    %v979 = vpack.c.b16 %v899, %v891
    %v980 = vpack.c.b16 %v900, %v892
    %v981 = vpack.c.b16 %v901, %v893
    %v982 = vpack.c.b16 %v910, %v902
    %v983 = vpack.c.b16 %v911, %v903
    %v984 = vpack.c.b16 %v912, %v904
    %v985 = vpack.c.b16 %v913, %v905
    %v986 = vpack.c.b16 %v914, %v906
    %v987 = vpack.c.b16 %v915, %v907
    %v988 = vpack.c.b16 %v916, %v908
    %v989 = vpack.c.b16 %v917, %v909
    %v990 = vpack.c.b16 %v926, %v918
    %v991 = vpack.c.b16 %v927, %v919
    %v992 = vpack.c.b16 %v928, %v920
    %v993 = vpack.c.b16 %v929, %v921
    %v994 = vpack.c.b16 %v930, %v922
    %v995 = vpack.c.b16 %v931, %v923
    %v996 = vpack.c.b16 %v932, %v924
    %v997 = vpack.c.b16 %v933, %v925
    %1062 = vmatprep.subr.bf16.mxu0 %v935
    %1063 = vmatpush1.bf16.msra.mxu0 %v934
    %1064 = vmatprep.subr.bf16.mxu0 %v943
    %1065 = vmatpush1.bf16.msra.mxu0 %v942
    %1066 = vmatprep.subr.bf16.mxu0 %v951
    %1067 = vmatpush1.bf16.msra.mxu0 %v950
    %1068 = vmatprep.subr.bf16.mxu0 %v959
    %1069 = vmatpush1.bf16.msra.mxu0 %v958
    %1070 = vmatprep.subr.bf16.mxu0 %v967
    %1071 = vmatpush1.bf16.msra.mxu0 %v966
    %1072 = vmatprep.subr.bf16.mxu0 %v975
    %1073 = vmatpush1.bf16.msra.mxu0 %v974
    %1074 = vmatprep.subr.bf16.mxu0 %v983
    %1075 = vmatpush1.bf16.msra.mxu0 %v982
    %1076 = vmatprep.subr.bf16.mxu0 %v991
    %1077 = vmatpush1.bf16.msra.mxu0 %v990
    %1078 = vmatprep.subr.bf16.mxu0 0
    %1079 = vmatpush1.bf16.msra.mxu0 0
    %1080 = vmatprep.subr.bf16.mxu0 0
    %1081 = vmatpush1.bf16.msra.mxu0 0
    %1082 = vmatprep.subr.bf16.mxu0 0
    %1083 = vmatpush1.bf16.msra.mxu0 0
    %1084 = vmatprep.subr.bf16.mxu0 0
    %1085 = vmatpush1.bf16.msra.mxu0 0
    %1086 = vmatprep.subr.bf16.mxu0 0
    %1087 = vmatpush1.bf16.msra.mxu0 0
    %1088 = vmatprep.subr.bf16.mxu0 0
    %1089 = vmatpush1.bf16.msra.mxu0 0
    %1090 = vmatprep.subr.bf16.mxu0 0
    %1091 = vmatpush1.bf16.msra.mxu0 0
    %1092 = vmatprep.subr.bf16.mxu0 0
    %1093 = vmatpush1.bf16.msra.mxu0 0
    %1094 = vmatprep.mubr.bf16.mxu0 0
    %1095 = vmatmul.mubr.bf16.gmra.mrb[0].mxu0 %v625
    %v1096 = vpop.f32.mrb[0].mxu0
    %v1097 = vadd.f32 %v705, %v1096
    %v1098 = vpop.f32.mrb[0].mxu0
    %v1099 = vadd.f32 %v709, %v1098
    %v1100 = vpop.f32.mrb[0].mxu0
    %v1101 = vadd.f32 %v705, %v1100
    %v1102 = vpop.f32.mrb[0].mxu0
    %v1103 = vadd.f32 %v709, %v1102
    %1104 = vdwg.mxu0
    %1105 = vmatprep.subr.bf16.mxu0 %v937
    %1106 = vmatpush1.bf16.msra.mxu0 %v936
    %1107 = vmatprep.subr.bf16.mxu0 %v945
    %1108 = vmatpush1.bf16.msra.mxu0 %v944
    %1109 = vmatprep.subr.bf16.mxu0 %v953
    %1110 = vmatpush1.bf16.msra.mxu0 %v952
    %1111 = vmatprep.subr.bf16.mxu0 %v961
    %1112 = vmatpush1.bf16.msra.mxu0 %v960
    %1113 = vmatprep.subr.bf16.mxu0 %v969
    %1114 = vmatpush1.bf16.msra.mxu0 %v968
    %1115 = vmatprep.subr.bf16.mxu0 %v977
    %1116 = vmatpush1.bf16.msra.mxu0 %v976
    %1117 = vmatprep.subr.bf16.mxu0 %v985
    %1118 = vmatpush1.bf16.msra.mxu0 %v984
    %1119 = vmatprep.subr.bf16.mxu0 %v993
    %1120 = vmatpush1.bf16.msra.mxu0 %v992
    %1121 = vmatprep.subr.bf16.mxu0 0
    %1122 = vmatpush1.bf16.msra.mxu0 0
    %1123 = vmatprep.subr.bf16.mxu0 0
    %1124 = vmatpush1.bf16.msra.mxu0 0
    %1125 = vmatprep.subr.bf16.mxu0 0
    %1126 = vmatpush1.bf16.msra.mxu0 0
    %1127 = vmatprep.subr.bf16.mxu0 0
    %1128 = vmatpush1.bf16.msra.mxu0 0
    %1129 = vmatprep.subr.bf16.mxu0 0
    %1130 = vmatpush1.bf16.msra.mxu0 0
    %1131 = vmatprep.subr.bf16.mxu0 0
    %1132 = vmatpush1.bf16.msra.mxu0 0
    %1133 = vmatprep.subr.bf16.mxu0 0
    %1134 = vmatpush1.bf16.msra.mxu0 0
    %1135 = vmatprep.subr.bf16.mxu0 0
    %1136 = vmatpush1.bf16.msra.mxu0 0
    %1137 = vmatprep.mubr.bf16.mxu0 0
    %1138 = vmatmul.mubr.bf16.gmra.mrb[0].mxu0 %v625
    %v1139 = vpop.f32.mrb[0].mxu0
    %v1140 = vadd.f32 %v713, %v1139
    %v1141 = vpop.f32.mrb[0].mxu0
    %v1142 = vadd.f32 %v717, %v1141
    %v1143 = vpop.f32.mrb[0].mxu0
    %v1144 = vadd.f32 %v713, %v1143
    %v1145 = vpop.f32.mrb[0].mxu0
    %v1146 = vadd.f32 %v717, %v1145
    %1147 = vdwg.mxu0
    %1148 = vmatprep.subr.bf16.mxu0 %v939
    %1149 = vmatpush1.bf16.msra.mxu0 %v938
    %1150 = vmatprep.subr.bf16.mxu0 %v947
    %1151 = vmatpush1.bf16.msra.mxu0 %v946
    %1152 = vmatprep.subr.bf16.mxu0 %v955
    %1153 = vmatpush1.bf16.msra.mxu0 %v954
    %1154 = vmatprep.subr.bf16.mxu0 %v963
    %1155 = vmatpush1.bf16.msra.mxu0 %v962
    %1156 = vmatprep.subr.bf16.mxu0 %v971
    %1157 = vmatpush1.bf16.msra.mxu0 %v970
    %1158 = vmatprep.subr.bf16.mxu0 %v979
    %1159 = vmatpush1.bf16.msra.mxu0 %v978
    %1160 = vmatprep.subr.bf16.mxu0 %v987
    %1161 = vmatpush1.bf16.msra.mxu0 %v986
    %1162 = vmatprep.subr.bf16.mxu0 %v995
    %1163 = vmatpush1.bf16.msra.mxu0 %v994
    %1164 = vmatprep.subr.bf16.mxu0 0
    %1165 = vmatpush1.bf16.msra.mxu0 0
    %1166 = vmatprep.subr.bf16.mxu0 0
    %1167 = vmatpush1.bf16.msra.mxu0 0
    %1168 = vmatprep.subr.bf16.mxu0 0
    %1169 = vmatpush1.bf16.msra.mxu0 0
    %1170 = vmatprep.subr.bf16.mxu0 0
    %1171 = vmatpush1.bf16.msra.mxu0 0
    %1172 = vmatprep.subr.bf16.mxu0 0
    %1173 = vmatpush1.bf16.msra.mxu0 0
    %1174 = vmatprep.subr.bf16.mxu0 0
    %1175 = vmatpush1.bf16.msra.mxu0 0
    %1176 = vmatprep.subr.bf16.mxu0 0
    %1177 = vmatpush1.bf16.msra.mxu0 0
    %1178 = vmatprep.subr.bf16.mxu0 0
    %1179 = vmatpush1.bf16.msra.mxu0 0
    %1180 = vmatprep.mubr.bf16.mxu0 0
    %1181 = vmatmul.mubr.bf16.gmra.mrb[0].mxu0 %v625
    %v1182 = vpop.f32.mrb[0].mxu0
    %v1183 = vadd.f32 %v721, %v1182
    %v1184 = vpop.f32.mrb[0].mxu0
    %v1185 = vadd.f32 %v725, %v1184
    %v1186 = vpop.f32.mrb[0].mxu0
    %v1187 = vadd.f32 %v721, %v1186
    %v1188 = vpop.f32.mrb[0].mxu0
    %v1189 = vadd.f32 %v725, %v1188
    %1190 = vdwg.mxu0
    %1191 = vmatprep.subr.bf16.mxu0 %v941
    %1192 = vmatpush1.bf16.msra.mxu0 %v940
    %1193 = vmatprep.subr.bf16.mxu0 %v949
    %1194 = vmatpush1.bf16.msra.mxu0 %v948
    %1195 = vmatprep.subr.bf16.mxu0 %v957
    %1196 = vmatpush1.bf16.msra.mxu0 %v956
    %1197 = vmatprep.subr.bf16.mxu0 %v965
    %1198 = vmatpush1.bf16.msra.mxu0 %v964
    %1199 = vmatprep.subr.bf16.mxu0 %v973
    %1200 = vmatpush1.bf16.msra.mxu0 %v972
    %1201 = vmatprep.subr.bf16.mxu0 %v981
    %1202 = vmatpush1.bf16.msra.mxu0 %v980
    %1203 = vmatprep.subr.bf16.mxu0 %v989
    %1204 = vmatpush1.bf16.msra.mxu0 %v988
    %1205 = vmatprep.subr.bf16.mxu0 %v997
    %1206 = vmatpush1.bf16.msra.mxu0 %v996
    %1207 = vmatprep.subr.bf16.mxu0 0
    %1208 = vmatpush1.bf16.msra.mxu0 0
    %1209 = vmatprep.subr.bf16.mxu0 0
    %1210 = vmatpush1.bf16.msra.mxu0 0
    %1211 = vmatprep.subr.bf16.mxu0 0
    %1212 = vmatpush1.bf16.msra.mxu0 0
    %1213 = vmatprep.subr.bf16.mxu0 0
    %1214 = vmatpush1.bf16.msra.mxu0 0
    %1215 = vmatprep.subr.bf16.mxu0 0
    %1216 = vmatpush1.bf16.msra.mxu0 0
    %1217 = vmatprep.subr.bf16.mxu0 0
    %1218 = vmatpush1.bf16.msra.mxu0 0
    %1219 = vmatprep.subr.bf16.mxu0 0
    %1220 = vmatpush1.bf16.msra.mxu0 0
    %1221 = vmatprep.subr.bf16.mxu0 0
    %1222 = vmatpush1.bf16.msra.mxu0 0
    %1223 = vmatprep.mubr.bf16.mxu0 0
    %1224 = vmatmul.mubr.bf16.gmra.mrb[0].mxu0 %v625
    %v1225 = vpop.f32.mrb[0].mxu0
    %v1226 = vadd.f32 %v729, %v1225
    %v1227 = vpop.f32.mrb[0].mxu0
    %v1228 = vadd.f32 %v733, %v1227
    %v1229 = vpop.f32.mrb[0].mxu0
    %v1230 = vadd.f32 %v729, %v1229
    %v1231 = vpop.f32.mrb[0].mxu0
    %v1232 = vadd.f32 %v733, %v1231
    %1233 = vdwg.mxu0
    %v1234 = vmax.f32 %v1097, 0.0
    %v1235 = vmax.f32 %v1099, 0.0
    %v1236 = vmax.f32 %v1140, 0.0
    %v1237 = vmax.f32 %v1142, 0.0
    %v1238 = vmax.f32 %v1183, 0.0
    %v1239 = vmax.f32 %v1185, 0.0
    %v1240 = vmax.f32 %v1226, 0.0
    %v1241 = vmax.f32 %v1228, 0.0
    %v1242 = vmax.f32 %v1101, 0.0
    %v1243 = vmax.f32 %v1103, 0.0
    %v1244 = vmax.f32 %v1144, 0.0
    %v1245 = vmax.f32 %v1146, 0.0
    %v1246 = vmax.f32 %v1187, 0.0
    %v1247 = vmax.f32 %v1189, 0.0
    %v1248 = vmax.f32 %v1230, 0.0
    %v1249 = vmax.f32 %v1232, 0.0
    %v1250 = vpack.c.bf16 %v1242, %v1234
    %v1251 = vpack.c.bf16 %v1243, %v1235
    %v1252 = vpack.c.bf16 %v1244, %v1236
    %v1253 = vpack.c.bf16 %v1245, %v1237
    %v1254 = vpack.c.bf16 %v1246, %v1238
    %v1255 = vpack.c.bf16 %v1247, %v1239
    %v1256 = vpack.c.bf16 %v1248, %v1240
    %v1257 = vpack.c.bf16 %v1249, %v1241
    %1258 = vmatprep.subr.bf16.mxu0 %v935
    %1259 = vmatpush1.bf16.msra.mxu0 %v934
    %1260 = vmatprep.subr.bf16.mxu0 %v943
    %1261 = vmatpush1.bf16.msra.mxu0 %v942
    %1262 = vmatprep.subr.bf16.mxu0 %v951
    %1263 = vmatpush1.bf16.msra.mxu0 %v950
    %1264 = vmatprep.subr.bf16.mxu0 %v959
    %1265 = vmatpush1.bf16.msra.mxu0 %v958
    %1266 = vmatprep.subr.bf16.mxu0 %v967
    %1267 = vmatpush1.bf16.msra.mxu0 %v966
    %1268 = vmatprep.subr.bf16.mxu0 %v975
    %1269 = vmatpush1.bf16.msra.mxu0 %v974
    %1270 = vmatprep.subr.bf16.mxu0 %v983
    %1271 = vmatpush1.bf16.msra.mxu0 %v982
    %1272 = vmatprep.subr.bf16.mxu0 %v991
    %1273 = vmatpush1.bf16.msra.mxu0 %v990
    %1274 = vmatprep.subr.bf16.mxu0 0
    %1275 = vmatpush1.bf16.msra.mxu0 0
    %1276 = vmatprep.subr.bf16.mxu0 0
    %1277 = vmatpush1.bf16.msra.mxu0 0
    %1278 = vmatprep.subr.bf16.mxu0 0
    %1279 = vmatpush1.bf16.msra.mxu0 0
    %1280 = vmatprep.subr.bf16.mxu0 0
    %1281 = vmatpush1.bf16.msra.mxu0 0
    %1282 = vmatprep.subr.bf16.mxu0 0
    %1283 = vmatpush1.bf16.msra.mxu0 0
    %1284 = vmatprep.subr.bf16.mxu0 0
    %1285 = vmatpush1.bf16.msra.mxu0 0
    %1286 = vmatprep.subr.bf16.mxu0 0
    %1287 = vmatpush1.bf16.msra.mxu0 0
    %1288 = vmatprep.subr.bf16.mxu0 0
    %1289 = vmatpush1.bf16.msra.mxu0 0
    %1290 = vmatprep.mubr.bf16.mxu0 0
    %1291 = vmatmul.mubr.bf16.gmra.mrb[0].mxu0 %v626
    %v1292 = vpop.f32.mrb[0].mxu0
    %v1293 = vadd.f32 %v705, %v1292
    %v1294 = vpop.f32.mrb[0].mxu0
    %v1295 = vadd.f32 %v709, %v1294
    %v1296 = vpop.f32.mrb[0].mxu0
    %v1297 = vadd.f32 %v705, %v1296
    %v1298 = vpop.f32.mrb[0].mxu0
    %v1299 = vadd.f32 %v709, %v1298
    %1300 = vdwg.mxu0
    %1301 = vmatprep.subr.bf16.mxu0 %v937
    %1302 = vmatpush1.bf16.msra.mxu0 %v936
    %1303 = vmatprep.subr.bf16.mxu0 %v945
    %1304 = vmatpush1.bf16.msra.mxu0 %v944
    %1305 = vmatprep.subr.bf16.mxu0 %v953
    %1306 = vmatpush1.bf16.msra.mxu0 %v952
    %1307 = vmatprep.subr.bf16.mxu0 %v961
    %1308 = vmatpush1.bf16.msra.mxu0 %v960
    %1309 = vmatprep.subr.bf16.mxu0 %v969
    %1310 = vmatpush1.bf16.msra.mxu0 %v968
    %1311 = vmatprep.subr.bf16.mxu0 %v977
    %1312 = vmatpush1.bf16.msra.mxu0 %v976
    %1313 = vmatprep.subr.bf16.mxu0 %v985
    %1314 = vmatpush1.bf16.msra.mxu0 %v984
    %1315 = vmatprep.subr.bf16.mxu0 %v993
    %1316 = vmatpush1.bf16.msra.mxu0 %v992
    %1317 = vmatprep.subr.bf16.mxu0 0
    %1318 = vmatpush1.bf16.msra.mxu0 0
    %1319 = vmatprep.subr.bf16.mxu0 0
    %1320 = vmatpush1.bf16.msra.mxu0 0
    %1321 = vmatprep.subr.bf16.mxu0 0
    %1322 = vmatpush1.bf16.msra.mxu0 0
    %1323 = vmatprep.subr.bf16.mxu0 0
    %1324 = vmatpush1.bf16.msra.mxu0 0
    %1325 = vmatprep.subr.bf16.mxu0 0
    %1326 = vmatpush1.bf16.msra.mxu0 0
    %1327 = vmatprep.subr.bf16.mxu0 0
    %1328 = vmatpush1.bf16.msra.mxu0 0
    %1329 = vmatprep.subr.bf16.mxu0 0
    %1330 = vmatpush1.bf16.msra.mxu0 0
    %1331 = vmatprep.subr.bf16.mxu0 0
    %1332 = vmatpush1.bf16.msra.mxu0 0
    %1333 = vmatprep.mubr.bf16.mxu0 0
    %1334 = vmatmul.mubr.bf16.gmra.mrb[0].mxu0 %v626
    %v1335 = vpop.f32.mrb[0].mxu0
    %v1336 = vadd.f32 %v713, %v1335
    %v1337 = vpop.f32.mrb[0].mxu0
    %v1338 = vadd.f32 %v717, %v1337
    %v1339 = vpop.f32.mrb[0].mxu0
    %v1340 = vadd.f32 %v713, %v1339
    %v1341 = vpop.f32.mrb[0].mxu0
    %v1342 = vadd.f32 %v717, %v1341
    %1343 = vdwg.mxu0
    %1344 = vmatprep.subr.bf16.mxu0 %v939
    %1345 = vmatpush1.bf16.msra.mxu0 %v938
    %1346 = vmatprep.subr.bf16.mxu0 %v947
    %1347 = vmatpush1.bf16.msra.mxu0 %v946
    %1348 = vmatprep.subr.bf16.mxu0 %v955
    %1349 = vmatpush1.bf16.msra.mxu0 %v954
    %1350 = vmatprep.subr.bf16.mxu0 %v963
    %1351 = vmatpush1.bf16.msra.mxu0 %v962
    %1352 = vmatprep.subr.bf16.mxu0 %v971
    %1353 = vmatpush1.bf16.msra.mxu0 %v970
    %1354 = vmatprep.subr.bf16.mxu0 %v979
    %1355 = vmatpush1.bf16.msra.mxu0 %v978
    %1356 = vmatprep.subr.bf16.mxu0 %v987
    %1357 = vmatpush1.bf16.msra.mxu0 %v986
    %1358 = vmatprep.subr.bf16.mxu0 %v995
    %1359 = vmatpush1.bf16.msra.mxu0 %v994
    %1360 = vmatprep.subr.bf16.mxu0 0
    %1361 = vmatpush1.bf16.msra.mxu0 0
    %1362 = vmatprep.subr.bf16.mxu0 0
    %1363 = vmatpush1.bf16.msra.mxu0 0
    %1364 = vmatprep.subr.bf16.mxu0 0
    %1365 = vmatpush1.bf16.msra.mxu0 0
    %1366 = vmatprep.subr.bf16.mxu0 0
    %1367 = vmatpush1.bf16.msra.mxu0 0
    %1368 = vmatprep.subr.bf16.mxu0 0
    %1369 = vmatpush1.bf16.msra.mxu0 0
    %1370 = vmatprep.subr.bf16.mxu0 0
    %1371 = vmatpush1.bf16.msra.mxu0 0
    %1372 = vmatprep.subr.bf16.mxu0 0
    %1373 = vmatpush1.bf16.msra.mxu0 0
    %1374 = vmatprep.subr.bf16.mxu0 0
    %1375 = vmatpush1.bf16.msra.mxu0 0
    %1376 = vmatprep.mubr.bf16.mxu0 0
    %1377 = vmatmul.mubr.bf16.gmra.mrb[0].mxu0 %v626
    %v1378 = vpop.f32.mrb[0].mxu0
    %v1379 = vadd.f32 %v721, %v1378
    %v1380 = vpop.f32.mrb[0].mxu0
    %v1381 = vadd.f32 %v725, %v1380
    %v1382 = vpop.f32.mrb[0].mxu0
    %v1383 = vadd.f32 %v721, %v1382
    %v1384 = vpop.f32.mrb[0].mxu0
    %v1385 = vadd.f32 %v725, %v1384
    %1386 = vdwg.mxu0
    %1387 = vmatprep.subr.bf16.mxu0 %v941
    %1388 = vmatpush1.bf16.msra.mxu0 %v940
    %1389 = vmatprep.subr.bf16.mxu0 %v949
    %1390 = vmatpush1.bf16.msra.mxu0 %v948
    %1391 = vmatprep.subr.bf16.mxu0 %v957
    %1392 = vmatpush1.bf16.msra.mxu0 %v956
    %1393 = vmatprep.subr.bf16.mxu0 %v965
    %1394 = vmatpush1.bf16.msra.mxu0 %v964
    %1395 = vmatprep.subr.bf16.mxu0 %v973
    %1396 = vmatpush1.bf16.msra.mxu0 %v972
    %1397 = vmatprep.subr.bf16.mxu0 %v981
    %1398 = vmatpush1.bf16.msra.mxu0 %v980
    %1399 = vmatprep.subr.bf16.mxu0 %v989
    %1400 = vmatpush1.bf16.msra.mxu0 %v988
    %1401 = vmatprep.subr.bf16.mxu0 %v997
    %1402 = vmatpush1.bf16.msra.mxu0 %v996
    %1403 = vmatprep.subr.bf16.mxu0 0
    %1404 = vmatpush1.bf16.msra.mxu0 0
    %1405 = vmatprep.subr.bf16.mxu0 0
    %1406 = vmatpush1.bf16.msra.mxu0 0
    %1407 = vmatprep.subr.bf16.mxu0 0
    %1408 = vmatpush1.bf16.msra.mxu0 0
    %1409 = vmatprep.subr.bf16.mxu0 0
    %1410 = vmatpush1.bf16.msra.mxu0 0
    %1411 = vmatprep.subr.bf16.mxu0 0
    %1412 = vmatpush1.bf16.msra.mxu0 0
    %1413 = vmatprep.subr.bf16.mxu0 0
    %1414 = vmatpush1.bf16.msra.mxu0 0
    %1415 = vmatprep.subr.bf16.mxu0 0
    %1416 = vmatpush1.bf16.msra.mxu0 0
    %1417 = vmatprep.subr.bf16.mxu0 0
    %1418 = vmatpush1.bf16.msra.mxu0 0
    %1419 = vmatprep.mubr.bf16.mxu0 0
    %1420 = vmatmul.mubr.bf16.gmra.mrb[0].mxu0 %v626
    %v1421 = vpop.f32.mrb[0].mxu0
    %v1422 = vadd.f32 %v729, %v1421
    %v1423 = vpop.f32.mrb[0].mxu0
    %v1424 = vadd.f32 %v733, %v1423
    %v1425 = vpop.f32.mrb[0].mxu0
    %v1426 = vadd.f32 %v729, %v1425
    %v1427 = vpop.f32.mrb[0].mxu0
    %v1428 = vadd.f32 %v733, %v1427
    %1429 = vdwg.mxu0
    %v1430 = vmax.f32 %v1293, 0.0
    %v1431 = vmax.f32 %v1295, 0.0
    %v1432 = vmax.f32 %v1336, 0.0
    %v1433 = vmax.f32 %v1338, 0.0
    %v1434 = vmax.f32 %v1379, 0.0
    %v1435 = vmax.f32 %v1381, 0.0
    %v1436 = vmax.f32 %v1422, 0.0
    %v1437 = vmax.f32 %v1424, 0.0
    %v1438 = vmax.f32 %v1297, 0.0
    %v1439 = vmax.f32 %v1299, 0.0
    %v1440 = vmax.f32 %v1340, 0.0
    %v1441 = vmax.f32 %v1342, 0.0
    %v1442 = vmax.f32 %v1383, 0.0
    %v1443 = vmax.f32 %v1385, 0.0
    %v1444 = vmax.f32 %v1426, 0.0
    %v1445 = vmax.f32 %v1428, 0.0
    %v1446 = vpack.c.bf16 %v1438, %v1430
    %v1447 = vpack.c.bf16 %v1439, %v1431
    %v1448 = vpack.c.bf16 %v1440, %v1432
    %v1449 = vpack.c.bf16 %v1441, %v1433
    %v1450 = vpack.c.bf16 %v1442, %v1434
    %v1451 = vpack.c.bf16 %v1443, %v1435
    %v1452 = vpack.c.bf16 %v1444, %v1436
    %v1453 = vpack.c.bf16 %v1445, %v1437
    %v1454 = vmax.bf16 %v1250, %v1446
    %v1455 = vmax.bf16 %v1251, %v1447
    %v1456 = vmax.bf16 %v1252, %v1448
    %v1457 = vmax.bf16 %v1253, %v1449
    %v1458 = vmax.bf16 %v1254, %v1450
    %v1459 = vmax.bf16 %v1255, %v1451
    %v1460 = vmax.bf16 %v1256, %v1452
    %v1461 = vmax.bf16 %v1257, %v1453
    %1462 = vmatprep.subr.bf16.mxu0 %v935
    %1463 = vmatpush1.bf16.msra.mxu0 %v934
    %1464 = vmatprep.subr.bf16.mxu0 %v943
    %1465 = vmatpush1.bf16.msra.mxu0 %v942
    %1466 = vmatprep.subr.bf16.mxu0 %v951
    %1467 = vmatpush1.bf16.msra.mxu0 %v950
    %1468 = vmatprep.subr.bf16.mxu0 %v959
    %1469 = vmatpush1.bf16.msra.mxu0 %v958
    %1470 = vmatprep.subr.bf16.mxu0 %v967
    %1471 = vmatpush1.bf16.msra.mxu0 %v966
    %1472 = vmatprep.subr.bf16.mxu0 %v975
    %1473 = vmatpush1.bf16.msra.mxu0 %v974
    %1474 = vmatprep.subr.bf16.mxu0 %v983
    %1475 = vmatpush1.bf16.msra.mxu0 %v982
    %1476 = vmatprep.subr.bf16.mxu0 %v991
    %1477 = vmatpush1.bf16.msra.mxu0 %v990
    %1478 = vmatprep.subr.bf16.mxu0 0
    %1479 = vmatpush1.bf16.msra.mxu0 0
    %1480 = vmatprep.subr.bf16.mxu0 0
    %1481 = vmatpush1.bf16.msra.mxu0 0
    %1482 = vmatprep.subr.bf16.mxu0 0
    %1483 = vmatpush1.bf16.msra.mxu0 0
    %1484 = vmatprep.subr.bf16.mxu0 0
    %1485 = vmatpush1.bf16.msra.mxu0 0
    %1486 = vmatprep.subr.bf16.mxu0 0
    %1487 = vmatpush1.bf16.msra.mxu0 0
    %1488 = vmatprep.subr.bf16.mxu0 0
    %1489 = vmatpush1.bf16.msra.mxu0 0
    %1490 = vmatprep.subr.bf16.mxu0 0
    %1491 = vmatpush1.bf16.msra.mxu0 0
    %1492 = vmatprep.subr.bf16.mxu0 0
    %1493 = vmatpush1.bf16.msra.mxu0 0
    %1494 = vmatprep.mubr.bf16.mxu0 0
    %1495 = vmatmul.mubr.bf16.gmra.mrb[0].mxu0 %v627
    %v1496 = vpop.f32.mrb[0].mxu0
    %v1497 = vadd.f32 %v705, %v1496
    %v1498 = vpop.f32.mrb[0].mxu0
    %v1499 = vadd.f32 %v709, %v1498
    %v1500 = vpop.f32.mrb[0].mxu0
    %v1501 = vadd.f32 %v705, %v1500
    %v1502 = vpop.f32.mrb[0].mxu0
    %v1503 = vadd.f32 %v709, %v1502
    %1504 = vdwg.mxu0
    %1505 = vmatprep.subr.bf16.mxu0 %v937
    %1506 = vmatpush1.bf16.msra.mxu0 %v936
    %1507 = vmatprep.subr.bf16.mxu0 %v945
    %1508 = vmatpush1.bf16.msra.mxu0 %v944
    %1509 = vmatprep.subr.bf16.mxu0 %v953
    %1510 = vmatpush1.bf16.msra.mxu0 %v952
    %1511 = vmatprep.subr.bf16.mxu0 %v961
    %1512 = vmatpush1.bf16.msra.mxu0 %v960
    %1513 = vmatprep.subr.bf16.mxu0 %v969
    %1514 = vmatpush1.bf16.msra.mxu0 %v968
    %1515 = vmatprep.subr.bf16.mxu0 %v977
    %1516 = vmatpush1.bf16.msra.mxu0 %v976
    %1517 = vmatprep.subr.bf16.mxu0 %v985
    %1518 = vmatpush1.bf16.msra.mxu0 %v984
    %1519 = vmatprep.subr.bf16.mxu0 %v993
    %1520 = vmatpush1.bf16.msra.mxu0 %v992
    %1521 = vmatprep.subr.bf16.mxu0 0
    %1522 = vmatpush1.bf16.msra.mxu0 0
    %1523 = vmatprep.subr.bf16.mxu0 0
    %1524 = vmatpush1.bf16.msra.mxu0 0
    %1525 = vmatprep.subr.bf16.mxu0 0
    %1526 = vmatpush1.bf16.msra.mxu0 0
    %1527 = vmatprep.subr.bf16.mxu0 0
    %1528 = vmatpush1.bf16.msra.mxu0 0
    %1529 = vmatprep.subr.bf16.mxu0 0
    %1530 = vmatpush1.bf16.msra.mxu0 0
    %1531 = vmatprep.subr.bf16.mxu0 0
    %1532 = vmatpush1.bf16.msra.mxu0 0
    %1533 = vmatprep.subr.bf16.mxu0 0
    %1534 = vmatpush1.bf16.msra.mxu0 0
    %1535 = vmatprep.subr.bf16.mxu0 0
    %1536 = vmatpush1.bf16.msra.mxu0 0
    %1537 = vmatprep.mubr.bf16.mxu0 0
    %1538 = vmatmul.mubr.bf16.gmra.mrb[0].mxu0 %v627
    %v1539 = vpop.f32.mrb[0].mxu0
    %v1540 = vadd.f32 %v713, %v1539
    %v1541 = vpop.f32.mrb[0].mxu0
    %v1542 = vadd.f32 %v717, %v1541
    %v1543 = vpop.f32.mrb[0].mxu0
    %v1544 = vadd.f32 %v713, %v1543
    %v1545 = vpop.f32.mrb[0].mxu0
    %v1546 = vadd.f32 %v717, %v1545
    %1547 = vdwg.mxu0
    %1548 = vmatprep.subr.bf16.mxu0 %v939
    %1549 = vmatpush1.bf16.msra.mxu0 %v938
    %1550 = vmatprep.subr.bf16.mxu0 %v947
    %1551 = vmatpush1.bf16.msra.mxu0 %v946
    %1552 = vmatprep.subr.bf16.mxu0 %v955
    %1553 = vmatpush1.bf16.msra.mxu0 %v954
    %1554 = vmatprep.subr.bf16.mxu0 %v963
    %1555 = vmatpush1.bf16.msra.mxu0 %v962
    %1556 = vmatprep.subr.bf16.mxu0 %v971
    %1557 = vmatpush1.bf16.msra.mxu0 %v970
    %1558 = vmatprep.subr.bf16.mxu0 %v979
    %1559 = vmatpush1.bf16.msra.mxu0 %v978
    %1560 = vmatprep.subr.bf16.mxu0 %v987
    %1561 = vmatpush1.bf16.msra.mxu0 %v986
    %1562 = vmatprep.subr.bf16.mxu0 %v995
    %1563 = vmatpush1.bf16.msra.mxu0 %v994
    %1564 = vmatprep.subr.bf16.mxu0 0
    %1565 = vmatpush1.bf16.msra.mxu0 0
    %1566 = vmatprep.subr.bf16.mxu0 0
    %1567 = vmatpush1.bf16.msra.mxu0 0
    %1568 = vmatprep.subr.bf16.mxu0 0
    %1569 = vmatpush1.bf16.msra.mxu0 0
    %1570 = vmatprep.subr.bf16.mxu0 0
    %1571 = vmatpush1.bf16.msra.mxu0 0
    %1572 = vmatprep.subr.bf16.mxu0 0
    %1573 = vmatpush1.bf16.msra.mxu0 0
    %1574 = vmatprep.subr.bf16.mxu0 0
    %1575 = vmatpush1.bf16.msra.mxu0 0
    %1576 = vmatprep.subr.bf16.mxu0 0
    %1577 = vmatpush1.bf16.msra.mxu0 0
    %1578 = vmatprep.subr.bf16.mxu0 0
    %1579 = vmatpush1.bf16.msra.mxu0 0
    %1580 = vmatprep.mubr.bf16.mxu0 0
    %1581 = vmatmul.mubr.bf16.gmra.mrb[0].mxu0 %v627
    %v1582 = vpop.f32.mrb[0].mxu0
    %v1583 = vadd.f32 %v721, %v1582
    %v1584 = vpop.f32.mrb[0].mxu0
    %v1585 = vadd.f32 %v725, %v1584
    %v1586 = vpop.f32.mrb[0].mxu0
    %v1587 = vadd.f32 %v721, %v1586
    %v1588 = vpop.f32.mrb[0].mxu0
    %v1589 = vadd.f32 %v725, %v1588
    %1590 = vdwg.mxu0
    %1591 = vmatprep.subr.bf16.mxu0 %v941
    %1592 = vmatpush1.bf16.msra.mxu0 %v940
    %1593 = vmatprep.subr.bf16.mxu0 %v949
    %1594 = vmatpush1.bf16.msra.mxu0 %v948
    %1595 = vmatprep.subr.bf16.mxu0 %v957
    %1596 = vmatpush1.bf16.msra.mxu0 %v956
    %1597 = vmatprep.subr.bf16.mxu0 %v965
    %1598 = vmatpush1.bf16.msra.mxu0 %v964
    %1599 = vmatprep.subr.bf16.mxu0 %v973
    %1600 = vmatpush1.bf16.msra.mxu0 %v972
    %1601 = vmatprep.subr.bf16.mxu0 %v981
    %1602 = vmatpush1.bf16.msra.mxu0 %v980
    %1603 = vmatprep.subr.bf16.mxu0 %v989
    %1604 = vmatpush1.bf16.msra.mxu0 %v988
    %1605 = vmatprep.subr.bf16.mxu0 %v997
    %1606 = vmatpush1.bf16.msra.mxu0 %v996
    %1607 = vmatprep.subr.bf16.mxu0 0
    %1608 = vmatpush1.bf16.msra.mxu0 0
    %1609 = vmatprep.subr.bf16.mxu0 0
    %1610 = vmatpush1.bf16.msra.mxu0 0
    %1611 = vmatprep.subr.bf16.mxu0 0
    %1612 = vmatpush1.bf16.msra.mxu0 0
    %1613 = vmatprep.subr.bf16.mxu0 0
    %1614 = vmatpush1.bf16.msra.mxu0 0
    %1615 = vmatprep.subr.bf16.mxu0 0
    %1616 = vmatpush1.bf16.msra.mxu0 0
    %1617 = vmatprep.subr.bf16.mxu0 0
    %1618 = vmatpush1.bf16.msra.mxu0 0
    %1619 = vmatprep.subr.bf16.mxu0 0
    %1620 = vmatpush1.bf16.msra.mxu0 0
    %1621 = vmatprep.subr.bf16.mxu0 0
    %1622 = vmatpush1.bf16.msra.mxu0 0
    %1623 = vmatprep.mubr.bf16.mxu0 0
    %1624 = vmatmul.mubr.bf16.gmra.mrb[0].mxu0 %v627
    %v1625 = vpop.f32.mrb[0].mxu0
    %v1626 = vadd.f32 %v729, %v1625
    %v1627 = vpop.f32.mrb[0].mxu0
    %v1628 = vadd.f32 %v733, %v1627
    %v1629 = vpop.f32.mrb[0].mxu0
    %v1630 = vadd.f32 %v729, %v1629
    %v1631 = vpop.f32.mrb[0].mxu0
    %v1632 = vadd.f32 %v733, %v1631
    %1633 = vdwg.mxu0
    %v1634 = vmax.f32 %v1497, 0.0
    %v1635 = vmax.f32 %v1499, 0.0
    %v1636 = vmax.f32 %v1540, 0.0
    %v1637 = vmax.f32 %v1542, 0.0
    %v1638 = vmax.f32 %v1583, 0.0
    %v1639 = vmax.f32 %v1585, 0.0
    %v1640 = vmax.f32 %v1626, 0.0
    %v1641 = vmax.f32 %v1628, 0.0
    %v1642 = vmax.f32 %v1501, 0.0
    %v1643 = vmax.f32 %v1503, 0.0
    %v1644 = vmax.f32 %v1544, 0.0
    %v1645 = vmax.f32 %v1546, 0.0
    %v1646 = vmax.f32 %v1587, 0.0
    %v1647 = vmax.f32 %v1589, 0.0
    %v1648 = vmax.f32 %v1630, 0.0
    %v1649 = vmax.f32 %v1632, 0.0
    %v1650 = vpack.c.bf16 %v1642, %v1634
    %v1651 = vpack.c.bf16 %v1643, %v1635
    %v1652 = vpack.c.bf16 %v1644, %v1636
    %v1653 = vpack.c.bf16 %v1645, %v1637
    %v1654 = vpack.c.bf16 %v1646, %v1638
    %v1655 = vpack.c.bf16 %v1647, %v1639
    %v1656 = vpack.c.bf16 %v1648, %v1640
    %v1657 = vpack.c.bf16 %v1649, %v1641
    %v1658 = vmax.bf16 %v1454, %v1650
    %v1659 = vmax.bf16 %v1455, %v1651
    %v1660 = vmax.bf16 %v1456, %v1652
    %v1661 = vmax.bf16 %v1457, %v1653
    %v1662 = vmax.bf16 %v1458, %v1654
    %v1663 = vmax.bf16 %v1459, %v1655
    %v1664 = vmax.bf16 %v1460, %v1656
    %v1665 = vmax.bf16 %v1461, %v1657
    %1666 = vmatprep.subr.bf16.mxu0 %v935
    %1667 = vmatpush1.bf16.msra.mxu0 %v934
    %1668 = vmatprep.subr.bf16.mxu0 %v943
    %1669 = vmatpush1.bf16.msra.mxu0 %v942
    %1670 = vmatprep.subr.bf16.mxu0 %v951
    %1671 = vmatpush1.bf16.msra.mxu0 %v950
    %1672 = vmatprep.subr.bf16.mxu0 %v959
    %1673 = vmatpush1.bf16.msra.mxu0 %v958
    %1674 = vmatprep.subr.bf16.mxu0 %v967
    %1675 = vmatpush1.bf16.msra.mxu0 %v966
    %1676 = vmatprep.subr.bf16.mxu0 %v975
    %1677 = vmatpush1.bf16.msra.mxu0 %v974
    %1678 = vmatprep.subr.bf16.mxu0 %v983
    %1679 = vmatpush1.bf16.msra.mxu0 %v982
    %1680 = vmatprep.subr.bf16.mxu0 %v991
    %1681 = vmatpush1.bf16.msra.mxu0 %v990
    %1682 = vmatprep.subr.bf16.mxu0 0
    %1683 = vmatpush1.bf16.msra.mxu0 0
    %1684 = vmatprep.subr.bf16.mxu0 0
    %1685 = vmatpush1.bf16.msra.mxu0 0
    %1686 = vmatprep.subr.bf16.mxu0 0
    %1687 = vmatpush1.bf16.msra.mxu0 0
    %1688 = vmatprep.subr.bf16.mxu0 0
    %1689 = vmatpush1.bf16.msra.mxu0 0
    %1690 = vmatprep.subr.bf16.mxu0 0
    %1691 = vmatpush1.bf16.msra.mxu0 0
    %1692 = vmatprep.subr.bf16.mxu0 0
    %1693 = vmatpush1.bf16.msra.mxu0 0
    %1694 = vmatprep.subr.bf16.mxu0 0
    %1695 = vmatpush1.bf16.msra.mxu0 0
    %1696 = vmatprep.subr.bf16.mxu0 0
    %1697 = vmatpush1.bf16.msra.mxu0 0
    %1698 = vmatprep.mubr.bf16.mxu0 0
    %1699 = vmatmul.mubr.bf16.gmra.mrb[0].mxu0 %v628
    %v1700 = vpop.f32.mrb[0].mxu0
    %v1701 = vadd.f32 %v705, %v1700
    %v1702 = vpop.f32.mrb[0].mxu0
    %v1703 = vadd.f32 %v709, %v1702
    %v1704 = vpop.f32.mrb[0].mxu0
    %v1705 = vadd.f32 %v705, %v1704
    %v1706 = vpop.f32.mrb[0].mxu0
    %v1707 = vadd.f32 %v709, %v1706
    %1708 = vdwg.mxu0
    %1709 = vmatprep.subr.bf16.mxu0 %v937
    %1710 = vmatpush1.bf16.msra.mxu0 %v936
    %1711 = vmatprep.subr.bf16.mxu0 %v945
    %1712 = vmatpush1.bf16.msra.mxu0 %v944
    %1713 = vmatprep.subr.bf16.mxu0 %v953
    %1714 = vmatpush1.bf16.msra.mxu0 %v952
    %1715 = vmatprep.subr.bf16.mxu0 %v961
    %1716 = vmatpush1.bf16.msra.mxu0 %v960
    %1717 = vmatprep.subr.bf16.mxu0 %v969
    %1718 = vmatpush1.bf16.msra.mxu0 %v968
    %1719 = vmatprep.subr.bf16.mxu0 %v977
    %1720 = vmatpush1.bf16.msra.mxu0 %v976
    %1721 = vmatprep.subr.bf16.mxu0 %v985
    %1722 = vmatpush1.bf16.msra.mxu0 %v984
    %1723 = vmatprep.subr.bf16.mxu0 %v993
    %1724 = vmatpush1.bf16.msra.mxu0 %v992
    %1725 = vmatprep.subr.bf16.mxu0 0
    %1726 = vmatpush1.bf16.msra.mxu0 0
    %1727 = vmatprep.subr.bf16.mxu0 0
    %1728 = vmatpush1.bf16.msra.mxu0 0
    %1729 = vmatprep.subr.bf16.mxu0 0
    %1730 = vmatpush1.bf16.msra.mxu0 0
    %1731 = vmatprep.subr.bf16.mxu0 0
    %1732 = vmatpush1.bf16.msra.mxu0 0
    %1733 = vmatprep.subr.bf16.mxu0 0
    %1734 = vmatpush1.bf16.msra.mxu0 0
    %1735 = vmatprep.subr.bf16.mxu0 0
    %1736 = vmatpush1.bf16.msra.mxu0 0
    %1737 = vmatprep.subr.bf16.mxu0 0
    %1738 = vmatpush1.bf16.msra.mxu0 0
    %1739 = vmatprep.subr.bf16.mxu0 0
    %1740 = vmatpush1.bf16.msra.mxu0 0
    %1741 = vmatprep.mubr.bf16.mxu0 0
    %1742 = vmatmul.mubr.bf16.gmra.mrb[0].mxu0 %v628
    %v1743 = vpop.f32.mrb[0].mxu0
    %v1744 = vadd.f32 %v713, %v1743
    %v1745 = vpop.f32.mrb[0].mxu0
    %v1746 = vadd.f32 %v717, %v1745
    %v1747 = vpop.f32.mrb[0].mxu0
    %v1748 = vadd.f32 %v713, %v1747
    %v1749 = vpop.f32.mrb[0].mxu0
    %v1750 = vadd.f32 %v717, %v1749
    %1751 = vdwg.mxu0
    %1752 = vmatprep.subr.bf16.mxu0 %v939
    %1753 = vmatpush1.bf16.msra.mxu0 %v938
    %1754 = vmatprep.subr.bf16.mxu0 %v947
    %1755 = vmatpush1.bf16.msra.mxu0 %v946
    %1756 = vmatprep.subr.bf16.mxu0 %v955
    %1757 = vmatpush1.bf16.msra.mxu0 %v954
    %1758 = vmatprep.subr.bf16.mxu0 %v963
    %1759 = vmatpush1.bf16.msra.mxu0 %v962
    %1760 = vmatprep.subr.bf16.mxu0 %v971
    %1761 = vmatpush1.bf16.msra.mxu0 %v970
    %1762 = vmatprep.subr.bf16.mxu0 %v979
    %1763 = vmatpush1.bf16.msra.mxu0 %v978
    %1764 = vmatprep.subr.bf16.mxu0 %v987
    %1765 = vmatpush1.bf16.msra.mxu0 %v986
    %1766 = vmatprep.subr.bf16.mxu0 %v995
    %1767 = vmatpush1.bf16.msra.mxu0 %v994
    %1768 = vmatprep.subr.bf16.mxu0 0
    %1769 = vmatpush1.bf16.msra.mxu0 0
    %1770 = vmatprep.subr.bf16.mxu0 0
    %1771 = vmatpush1.bf16.msra.mxu0 0
    %1772 = vmatprep.subr.bf16.mxu0 0
    %1773 = vmatpush1.bf16.msra.mxu0 0
    %1774 = vmatprep.subr.bf16.mxu0 0
    %1775 = vmatpush1.bf16.msra.mxu0 0
    %1776 = vmatprep.subr.bf16.mxu0 0
    %1777 = vmatpush1.bf16.msra.mxu0 0
    %1778 = vmatprep.subr.bf16.mxu0 0
    %1779 = vmatpush1.bf16.msra.mxu0 0
    %1780 = vmatprep.subr.bf16.mxu0 0
    %1781 = vmatpush1.bf16.msra.mxu0 0
    %1782 = vmatprep.subr.bf16.mxu0 0
    %1783 = vmatpush1.bf16.msra.mxu0 0
    %1784 = vmatprep.mubr.bf16.mxu0 0
    %1785 = vmatmul.mubr.bf16.gmra.mrb[0].mxu0 %v628
    %v1786 = vpop.f32.mrb[0].mxu0
    %v1787 = vadd.f32 %v721, %v1786
    %v1788 = vpop.f32.mrb[0].mxu0
    %v1789 = vadd.f32 %v725, %v1788
    %v1790 = vpop.f32.mrb[0].mxu0
    %v1791 = vadd.f32 %v721, %v1790
    %v1792 = vpop.f32.mrb[0].mxu0
    %v1793 = vadd.f32 %v725, %v1792
    %1794 = vdwg.mxu0
    %1795 = vmatprep.subr.bf16.mxu0 %v941
    %1796 = vmatpush1.bf16.msra.mxu0 %v940
    %1797 = vmatprep.subr.bf16.mxu0 %v949
    %1798 = vmatpush1.bf16.msra.mxu0 %v948
    %1799 = vmatprep.subr.bf16.mxu0 %v957
    %1800 = vmatpush1.bf16.msra.mxu0 %v956
    %1801 = vmatprep.subr.bf16.mxu0 %v965
    %1802 = vmatpush1.bf16.msra.mxu0 %v964
    %1803 = vmatprep.subr.bf16.mxu0 %v973
    %1804 = vmatpush1.bf16.msra.mxu0 %v972
    %1805 = vmatprep.subr.bf16.mxu0 %v981
    %1806 = vmatpush1.bf16.msra.mxu0 %v980
    %1807 = vmatprep.subr.bf16.mxu0 %v989
    %1808 = vmatpush1.bf16.msra.mxu0 %v988
    %1809 = vmatprep.subr.bf16.mxu0 %v997
    %1810 = vmatpush1.bf16.msra.mxu0 %v996
    %1811 = vmatprep.subr.bf16.mxu0 0
    %1812 = vmatpush1.bf16.msra.mxu0 0
    %1813 = vmatprep.subr.bf16.mxu0 0
    %1814 = vmatpush1.bf16.msra.mxu0 0
    %1815 = vmatprep.subr.bf16.mxu0 0
    %1816 = vmatpush1.bf16.msra.mxu0 0
    %1817 = vmatprep.subr.bf16.mxu0 0
    %1818 = vmatpush1.bf16.msra.mxu0 0
    %1819 = vmatprep.subr.bf16.mxu0 0
    %1820 = vmatpush1.bf16.msra.mxu0 0
    %1821 = vmatprep.subr.bf16.mxu0 0
    %1822 = vmatpush1.bf16.msra.mxu0 0
    %1823 = vmatprep.subr.bf16.mxu0 0
    %1824 = vmatpush1.bf16.msra.mxu0 0
    %1825 = vmatprep.subr.bf16.mxu0 0
    %1826 = vmatpush1.bf16.msra.mxu0 0
    %1827 = vmatprep.mubr.bf16.mxu0 0
    %1828 = vmatmul.mubr.bf16.gmra.mrb[0].mxu0 %v628
    %v1829 = vpop.f32.mrb[0].mxu0
    %v1830 = vadd.f32 %v729, %v1829
    %v1831 = vpop.f32.mrb[0].mxu0
    %v1832 = vadd.f32 %v733, %v1831
    %v1833 = vpop.f32.mrb[0].mxu0
    %v1834 = vadd.f32 %v729, %v1833
    %v1835 = vpop.f32.mrb[0].mxu0
    %v1836 = vadd.f32 %v733, %v1835
    %1837 = vdwg.mxu0
    %v1838 = vmax.f32 %v1701, 0.0
    %v1839 = vmax.f32 %v1703, 0.0
    %v1840 = vmax.f32 %v1744, 0.0
    %v1841 = vmax.f32 %v1746, 0.0
    %v1842 = vmax.f32 %v1787, 0.0
    %v1843 = vmax.f32 %v1789, 0.0
    %v1844 = vmax.f32 %v1830, 0.0
    %v1845 = vmax.f32 %v1832, 0.0
    %v1846 = vmax.f32 %v1705, 0.0
    %v1847 = vmax.f32 %v1707, 0.0
    %v1848 = vmax.f32 %v1748, 0.0
    %v1849 = vmax.f32 %v1750, 0.0
    %v1850 = vmax.f32 %v1791, 0.0
    %v1851 = vmax.f32 %v1793, 0.0
    %v1852 = vmax.f32 %v1834, 0.0
    %v1853 = vmax.f32 %v1836, 0.0
    %v1854 = vpack.c.bf16 %v1846, %v1838
    %v1855 = vpack.c.bf16 %v1847, %v1839
    %v1856 = vpack.c.bf16 %v1848, %v1840
    %v1857 = vpack.c.bf16 %v1849, %v1841
    %v1858 = vpack.c.bf16 %v1850, %v1842
    %v1859 = vpack.c.bf16 %v1851, %v1843
    %v1860 = vpack.c.bf16 %v1852, %v1844
    %v1861 = vpack.c.bf16 %v1853, %v1845
    %v1862 = vmax.bf16 %v1658, %v1854
    %v1863 = vmax.bf16 %v1659, %v1855
    %v1864 = vmax.bf16 %v1660, %v1856
    %v1865 = vmax.bf16 %v1661, %v1857
    %v1866 = vmax.bf16 %v1662, %v1858
    %v1867 = vmax.bf16 %v1663, %v1859
    %v1868 = vmax.bf16 %v1664, %v1860
    %v1869 = vmax.bf16 %v1665, %v1861
    %1870 = vmatprep.subr.bf16.mxu0 %v935
    %1871 = vmatpush1.bf16.msra.mxu0 %v934
    %1872 = vmatprep.subr.bf16.mxu0 %v943
    %1873 = vmatpush1.bf16.msra.mxu0 %v942
    %1874 = vmatprep.subr.bf16.mxu0 %v951
    %1875 = vmatpush1.bf16.msra.mxu0 %v950
    %1876 = vmatprep.subr.bf16.mxu0 %v959
    %1877 = vmatpush1.bf16.msra.mxu0 %v958
    %1878 = vmatprep.subr.bf16.mxu0 %v967
    %1879 = vmatpush1.bf16.msra.mxu0 %v966
    %1880 = vmatprep.subr.bf16.mxu0 %v975
    %1881 = vmatpush1.bf16.msra.mxu0 %v974
    %1882 = vmatprep.subr.bf16.mxu0 %v983
    %1883 = vmatpush1.bf16.msra.mxu0 %v982
    %1884 = vmatprep.subr.bf16.mxu0 %v991
    %1885 = vmatpush1.bf16.msra.mxu0 %v990
    %1886 = vmatprep.subr.bf16.mxu0 0
    %1887 = vmatpush1.bf16.msra.mxu0 0
    %1888 = vmatprep.subr.bf16.mxu0 0
    %1889 = vmatpush1.bf16.msra.mxu0 0
    %1890 = vmatprep.subr.bf16.mxu0 0
    %1891 = vmatpush1.bf16.msra.mxu0 0
    %1892 = vmatprep.subr.bf16.mxu0 0
    %1893 = vmatpush1.bf16.msra.mxu0 0
    %1894 = vmatprep.subr.bf16.mxu0 0
    %1895 = vmatpush1.bf16.msra.mxu0 0
    %1896 = vmatprep.subr.bf16.mxu0 0
    %1897 = vmatpush1.bf16.msra.mxu0 0
    %1898 = vmatprep.subr.bf16.mxu0 0
    %1899 = vmatpush1.bf16.msra.mxu0 0
    %1900 = vmatprep.subr.bf16.mxu0 0
    %1901 = vmatpush1.bf16.msra.mxu0 0
    %1902 = vmatprep.mubr.bf16.mxu0 0
    %1903 = vmatmul.mubr.bf16.gmra.mrb[0].mxu0 %v629
    %v1904 = vpop.f32.mrb[0].mxu0
    %v1905 = vadd.f32 %v705, %v1904
    %v1906 = vpop.f32.mrb[0].mxu0
    %v1907 = vadd.f32 %v709, %v1906
    %v1908 = vpop.f32.mrb[0].mxu0
    %v1909 = vadd.f32 %v705, %v1908
    %v1910 = vpop.f32.mrb[0].mxu0
    %v1911 = vadd.f32 %v709, %v1910
    %1912 = vdwg.mxu0
    %1913 = vmatprep.subr.bf16.mxu0 %v937
    %1914 = vmatpush1.bf16.msra.mxu0 %v936
    %1915 = vmatprep.subr.bf16.mxu0 %v945
    %1916 = vmatpush1.bf16.msra.mxu0 %v944
    %1917 = vmatprep.subr.bf16.mxu0 %v953
    %1918 = vmatpush1.bf16.msra.mxu0 %v952
    %1919 = vmatprep.subr.bf16.mxu0 %v961
    %1920 = vmatpush1.bf16.msra.mxu0 %v960
    %1921 = vmatprep.subr.bf16.mxu0 %v969
    %1922 = vmatpush1.bf16.msra.mxu0 %v968
    %1923 = vmatprep.subr.bf16.mxu0 %v977
    %1924 = vmatpush1.bf16.msra.mxu0 %v976
    %1925 = vmatprep.subr.bf16.mxu0 %v985
    %1926 = vmatpush1.bf16.msra.mxu0 %v984
    %1927 = vmatprep.subr.bf16.mxu0 %v993
    %1928 = vmatpush1.bf16.msra.mxu0 %v992
    %1929 = vmatprep.subr.bf16.mxu0 0
    %1930 = vmatpush1.bf16.msra.mxu0 0
    %1931 = vmatprep.subr.bf16.mxu0 0
    %1932 = vmatpush1.bf16.msra.mxu0 0
    %1933 = vmatprep.subr.bf16.mxu0 0
    %1934 = vmatpush1.bf16.msra.mxu0 0
    %1935 = vmatprep.subr.bf16.mxu0 0
    %1936 = vmatpush1.bf16.msra.mxu0 0
    %1937 = vmatprep.subr.bf16.mxu0 0
    %1938 = vmatpush1.bf16.msra.mxu0 0
    %1939 = vmatprep.subr.bf16.mxu0 0
    %1940 = vmatpush1.bf16.msra.mxu0 0
    %1941 = vmatprep.subr.bf16.mxu0 0
    %1942 = vmatpush1.bf16.msra.mxu0 0
    %1943 = vmatprep.subr.bf16.mxu0 0
    %1944 = vmatpush1.bf16.msra.mxu0 0
    %1945 = vmatprep.mubr.bf16.mxu0 0
    %1946 = vmatmul.mubr.bf16.gmra.mrb[0].mxu0 %v629
    %v1947 = vpop.f32.mrb[0].mxu0
    %v1948 = vadd.f32 %v713, %v1947
    %v1949 = vpop.f32.mrb[0].mxu0
    %v1950 = vadd.f32 %v717, %v1949
    %v1951 = vpop.f32.mrb[0].mxu0
    %v1952 = vadd.f32 %v713, %v1951
    %v1953 = vpop.f32.mrb[0].mxu0
    %v1954 = vadd.f32 %v717, %v1953
    %1955 = vdwg.mxu0
    %1956 = vmatprep.subr.bf16.mxu0 %v939
    %1957 = vmatpush1.bf16.msra.mxu0 %v938
    %1958 = vmatprep.subr.bf16.mxu0 %v947
    %1959 = vmatpush1.bf16.msra.mxu0 %v946
    %1960 = vmatprep.subr.bf16.mxu0 %v955
    %1961 = vmatpush1.bf16.msra.mxu0 %v954
    %1962 = vmatprep.subr.bf16.mxu0 %v963
    %1963 = vmatpush1.bf16.msra.mxu0 %v962
    %1964 = vmatprep.subr.bf16.mxu0 %v971
    %1965 = vmatpush1.bf16.msra.mxu0 %v970
    %1966 = vmatprep.subr.bf16.mxu0 %v979
    %1967 = vmatpush1.bf16.msra.mxu0 %v978
    %1968 = vmatprep.subr.bf16.mxu0 %v987
    %1969 = vmatpush1.bf16.msra.mxu0 %v986
    %1970 = vmatprep.subr.bf16.mxu0 %v995
    %1971 = vmatpush1.bf16.msra.mxu0 %v994
    %1972 = vmatprep.subr.bf16.mxu0 0
    %1973 = vmatpush1.bf16.msra.mxu0 0
    %1974 = vmatprep.subr.bf16.mxu0 0
    %1975 = vmatpush1.bf16.msra.mxu0 0
    %1976 = vmatprep.subr.bf16.mxu0 0
    %1977 = vmatpush1.bf16.msra.mxu0 0
    %1978 = vmatprep.subr.bf16.mxu0 0
    %1979 = vmatpush1.bf16.msra.mxu0 0
    %1980 = vmatprep.subr.bf16.mxu0 0
    %1981 = vmatpush1.bf16.msra.mxu0 0
    %1982 = vmatprep.subr.bf16.mxu0 0
    %1983 = vmatpush1.bf16.msra.mxu0 0
    %1984 = vmatprep.subr.bf16.mxu0 0
    %1985 = vmatpush1.bf16.msra.mxu0 0
    %1986 = vmatprep.subr.bf16.mxu0 0
    %1987 = vmatpush1.bf16.msra.mxu0 0
    %1988 = vmatprep.mubr.bf16.mxu0 0
    %1989 = vmatmul.mubr.bf16.gmra.mrb[0].mxu0 %v629
    %v1990 = vpop.f32.mrb[0].mxu0
    %v1991 = vadd.f32 %v721, %v1990
    %v1992 = vpop.f32.mrb[0].mxu0
    %v1993 = vadd.f32 %v725, %v1992
    %v1994 = vpop.f32.mrb[0].mxu0
    %v1995 = vadd.f32 %v721, %v1994
    %v1996 = vpop.f32.mrb[0].mxu0
    %v1997 = vadd.f32 %v725, %v1996
    %1998 = vdwg.mxu0
    %1999 = vmatprep.subr.bf16.mxu0 %v941
    %2000 = vmatpush1.bf16.msra.mxu0 %v940
    %2001 = vmatprep.subr.bf16.mxu0 %v949
    %2002 = vmatpush1.bf16.msra.mxu0 %v948
    %2003 = vmatprep.subr.bf16.mxu0 %v957
    %2004 = vmatpush1.bf16.msra.mxu0 %v956
    %2005 = vmatprep.subr.bf16.mxu0 %v965
    %2006 = vmatpush1.bf16.msra.mxu0 %v964
    %2007 = vmatprep.subr.bf16.mxu0 %v973
    %2008 = vmatpush1.bf16.msra.mxu0 %v972
    %2009 = vmatprep.subr.bf16.mxu0 %v981
    %2010 = vmatpush1.bf16.msra.mxu0 %v980
    %2011 = vmatprep.subr.bf16.mxu0 %v989
    %2012 = vmatpush1.bf16.msra.mxu0 %v988
    %2013 = vmatprep.subr.bf16.mxu0 %v997
    %2014 = vmatpush1.bf16.msra.mxu0 %v996
    %2015 = vmatprep.subr.bf16.mxu0 0
    %2016 = vmatpush1.bf16.msra.mxu0 0
    %2017 = vmatprep.subr.bf16.mxu0 0
    %2018 = vmatpush1.bf16.msra.mxu0 0
    %2019 = vmatprep.subr.bf16.mxu0 0
    %2020 = vmatpush1.bf16.msra.mxu0 0
    %2021 = vmatprep.subr.bf16.mxu0 0
    %2022 = vmatpush1.bf16.msra.mxu0 0
    %2023 = vmatprep.subr.bf16.mxu0 0
    %2024 = vmatpush1.bf16.msra.mxu0 0
    %2025 = vmatprep.subr.bf16.mxu0 0
    %2026 = vmatpush1.bf16.msra.mxu0 0
    %2027 = vmatprep.subr.bf16.mxu0 0
    %2028 = vmatpush1.bf16.msra.mxu0 0
    %2029 = vmatprep.subr.bf16.mxu0 0
    %2030 = vmatpush1.bf16.msra.mxu0 0
    %2031 = vmatprep.mubr.bf16.mxu0 0
    %2032 = vmatmul.mubr.bf16.gmra.mrb[0].mxu0 %v629
    %v2033 = vpop.f32.mrb[0].mxu0
    %v2034 = vadd.f32 %v729, %v2033
    %v2035 = vpop.f32.mrb[0].mxu0
    %v2036 = vadd.f32 %v733, %v2035
    %v2037 = vpop.f32.mrb[0].mxu0
    %v2038 = vadd.f32 %v729, %v2037
    %v2039 = vpop.f32.mrb[0].mxu0
    %v2040 = vadd.f32 %v733, %v2039
    %2041 = vdwg.mxu0
    %v2042 = vmax.f32 %v1905, 0.0
    %v2043 = vmax.f32 %v1907, 0.0
    %v2044 = vmax.f32 %v1948, 0.0
    %v2045 = vmax.f32 %v1950, 0.0
    %v2046 = vmax.f32 %v1991, 0.0
    %v2047 = vmax.f32 %v1993, 0.0
    %v2048 = vmax.f32 %v2034, 0.0
    %v2049 = vmax.f32 %v2036, 0.0
    %v2050 = vmax.f32 %v1909, 0.0
    %v2051 = vmax.f32 %v1911, 0.0
    %v2052 = vmax.f32 %v1952, 0.0
    %v2053 = vmax.f32 %v1954, 0.0
    %v2054 = vmax.f32 %v1995, 0.0
    %v2055 = vmax.f32 %v1997, 0.0
    %v2056 = vmax.f32 %v2038, 0.0
    %v2057 = vmax.f32 %v2040, 0.0
    %v2058 = vpack.c.bf16 %v2050, %v2042
    %v2059 = vpack.c.bf16 %v2051, %v2043
    %v2060 = vpack.c.bf16 %v2052, %v2044
    %v2061 = vpack.c.bf16 %v2053, %v2045
    %v2062 = vpack.c.bf16 %v2054, %v2046
    %v2063 = vpack.c.bf16 %v2055, %v2047
    %v2064 = vpack.c.bf16 %v2056, %v2048
    %v2065 = vpack.c.bf16 %v2057, %v2049
    %v2066 = vmax.bf16 %v1862, %v2058
    %v2067 = vmax.bf16 %v1863, %v2059
    %v2068 = vmax.bf16 %v1864, %v2060
    %v2069 = vmax.bf16 %v1865, %v2061
    %v2070 = vmax.bf16 %v1866, %v2062
    %v2071 = vmax.bf16 %v1867, %v2063
    %v2072 = vmax.bf16 %v1868, %v2064
    %v2073 = vmax.bf16 %v1869, %v2065
    %2074 = vmatprep.subr.bf16.mxu0 %v935
    %2075 = vmatpush1.bf16.msra.mxu0 %v934
    %2076 = vmatprep.subr.bf16.mxu0 %v943
    %2077 = vmatpush1.bf16.msra.mxu0 %v942
    %2078 = vmatprep.subr.bf16.mxu0 %v951
    %2079 = vmatpush1.bf16.msra.mxu0 %v950
    %2080 = vmatprep.subr.bf16.mxu0 %v959
    %2081 = vmatpush1.bf16.msra.mxu0 %v958
    %2082 = vmatprep.subr.bf16.mxu0 %v967
    %2083 = vmatpush1.bf16.msra.mxu0 %v966
    %2084 = vmatprep.subr.bf16.mxu0 %v975
    %2085 = vmatpush1.bf16.msra.mxu0 %v974
    %2086 = vmatprep.subr.bf16.mxu0 %v983
    %2087 = vmatpush1.bf16.msra.mxu0 %v982
    %2088 = vmatprep.subr.bf16.mxu0 %v991
    %2089 = vmatpush1.bf16.msra.mxu0 %v990
    %2090 = vmatprep.subr.bf16.mxu0 0
    %2091 = vmatpush1.bf16.msra.mxu0 0
    %2092 = vmatprep.subr.bf16.mxu0 0
    %2093 = vmatpush1.bf16.msra.mxu0 0
    %2094 = vmatprep.subr.bf16.mxu0 0
    %2095 = vmatpush1.bf16.msra.mxu0 0
    %2096 = vmatprep.subr.bf16.mxu0 0
    %2097 = vmatpush1.bf16.msra.mxu0 0
    %2098 = vmatprep.subr.bf16.mxu0 0
    %2099 = vmatpush1.bf16.msra.mxu0 0
    %2100 = vmatprep.subr.bf16.mxu0 0
    %2101 = vmatpush1.bf16.msra.mxu0 0
    %2102 = vmatprep.subr.bf16.mxu0 0
    %2103 = vmatpush1.bf16.msra.mxu0 0
    %2104 = vmatprep.subr.bf16.mxu0 0
    %2105 = vmatpush1.bf16.msra.mxu0 0
    %2106 = vmatprep.mubr.bf16.mxu0 0
    %2107 = vmatmul.mubr.bf16.gmra.mrb[0].mxu0 %v630
    %v2108 = vpop.f32.mrb[0].mxu0
    %v2109 = vadd.f32 %v705, %v2108
    %v2110 = vpop.f32.mrb[0].mxu0
    %v2111 = vadd.f32 %v709, %v2110
    %v2112 = vpop.f32.mrb[0].mxu0
    %v2113 = vadd.f32 %v705, %v2112
    %v2114 = vpop.f32.mrb[0].mxu0
    %v2115 = vadd.f32 %v709, %v2114
    %2116 = vdwg.mxu0
    %2117 = vmatprep.subr.bf16.mxu0 %v937
    %2118 = vmatpush1.bf16.msra.mxu0 %v936
    %2119 = vmatprep.subr.bf16.mxu0 %v945
    %2120 = vmatpush1.bf16.msra.mxu0 %v944
    %2121 = vmatprep.subr.bf16.mxu0 %v953
    %2122 = vmatpush1.bf16.msra.mxu0 %v952
    %2123 = vmatprep.subr.bf16.mxu0 %v961
    %2124 = vmatpush1.bf16.msra.mxu0 %v960
    %2125 = vmatprep.subr.bf16.mxu0 %v969
    %2126 = vmatpush1.bf16.msra.mxu0 %v968
    %2127 = vmatprep.subr.bf16.mxu0 %v977
    %2128 = vmatpush1.bf16.msra.mxu0 %v976
    %2129 = vmatprep.subr.bf16.mxu0 %v985
    %2130 = vmatpush1.bf16.msra.mxu0 %v984
    %2131 = vmatprep.subr.bf16.mxu0 %v993
    %2132 = vmatpush1.bf16.msra.mxu0 %v992
    %2133 = vmatprep.subr.bf16.mxu0 0
    %2134 = vmatpush1.bf16.msra.mxu0 0
    %2135 = vmatprep.subr.bf16.mxu0 0
    %2136 = vmatpush1.bf16.msra.mxu0 0
    %2137 = vmatprep.subr.bf16.mxu0 0
    %2138 = vmatpush1.bf16.msra.mxu0 0
    %2139 = vmatprep.subr.bf16.mxu0 0
    %2140 = vmatpush1.bf16.msra.mxu0 0
    %2141 = vmatprep.subr.bf16.mxu0 0
    %2142 = vmatpush1.bf16.msra.mxu0 0
    %2143 = vmatprep.subr.bf16.mxu0 0
    %2144 = vmatpush1.bf16.msra.mxu0 0
    %2145 = vmatprep.subr.bf16.mxu0 0
    %2146 = vmatpush1.bf16.msra.mxu0 0
    %2147 = vmatprep.subr.bf16.mxu0 0
    %2148 = vmatpush1.bf16.msra.mxu0 0
    %2149 = vmatprep.mubr.bf16.mxu0 0
    %2150 = vmatmul.mubr.bf16.gmra.mrb[0].mxu0 %v630
    %v2151 = vpop.f32.mrb[0].mxu0
    %v2152 = vadd.f32 %v713, %v2151
    %v2153 = vpop.f32.mrb[0].mxu0
    %v2154 = vadd.f32 %v717, %v2153
    %v2155 = vpop.f32.mrb[0].mxu0
    %v2156 = vadd.f32 %v713, %v2155
    %v2157 = vpop.f32.mrb[0].mxu0
    %v2158 = vadd.f32 %v717, %v2157
    %2159 = vdwg.mxu0
    %2160 = vmatprep.subr.bf16.mxu0 %v939
    %2161 = vmatpush1.bf16.msra.mxu0 %v938
    %2162 = vmatprep.subr.bf16.mxu0 %v947
    %2163 = vmatpush1.bf16.msra.mxu0 %v946
    %2164 = vmatprep.subr.bf16.mxu0 %v955
    %2165 = vmatpush1.bf16.msra.mxu0 %v954
    %2166 = vmatprep.subr.bf16.mxu0 %v963
    %2167 = vmatpush1.bf16.msra.mxu0 %v962
    %2168 = vmatprep.subr.bf16.mxu0 %v971
    %2169 = vmatpush1.bf16.msra.mxu0 %v970
    %2170 = vmatprep.subr.bf16.mxu0 %v979
    %2171 = vmatpush1.bf16.msra.mxu0 %v978
    %2172 = vmatprep.subr.bf16.mxu0 %v987
    %2173 = vmatpush1.bf16.msra.mxu0 %v986
    %2174 = vmatprep.subr.bf16.mxu0 %v995
    %2175 = vmatpush1.bf16.msra.mxu0 %v994
    %2176 = vmatprep.subr.bf16.mxu0 0
    %2177 = vmatpush1.bf16.msra.mxu0 0
    %2178 = vmatprep.subr.bf16.mxu0 0
    %2179 = vmatpush1.bf16.msra.mxu0 0
    %2180 = vmatprep.subr.bf16.mxu0 0
    %2181 = vmatpush1.bf16.msra.mxu0 0
    %2182 = vmatprep.subr.bf16.mxu0 0
    %2183 = vmatpush1.bf16.msra.mxu0 0
    %2184 = vmatprep.subr.bf16.mxu0 0
    %2185 = vmatpush1.bf16.msra.mxu0 0
    %2186 = vmatprep.subr.bf16.mxu0 0
    %2187 = vmatpush1.bf16.msra.mxu0 0
    %2188 = vmatprep.subr.bf16.mxu0 0
    %2189 = vmatpush1.bf16.msra.mxu0 0
    %2190 = vmatprep.subr.bf16.mxu0 0
    %2191 = vmatpush1.bf16.msra.mxu0 0
    %2192 = vmatprep.mubr.bf16.mxu0 0
    %2193 = vmatmul.mubr.bf16.gmra.mrb[0].mxu0 %v630
    %v2194 = vpop.f32.mrb[0].mxu0
    %v2195 = vadd.f32 %v721, %v2194
    %v2196 = vpop.f32.mrb[0].mxu0
    %v2197 = vadd.f32 %v725, %v2196
    %v2198 = vpop.f32.mrb[0].mxu0
    %v2199 = vadd.f32 %v721, %v2198
    %v2200 = vpop.f32.mrb[0].mxu0
    %v2201 = vadd.f32 %v725, %v2200
    %2202 = vdwg.mxu0
    %2203 = vmatprep.subr.bf16.mxu0 %v941
    %2204 = vmatpush1.bf16.msra.mxu0 %v940
    %2205 = vmatprep.subr.bf16.mxu0 %v949
    %2206 = vmatpush1.bf16.msra.mxu0 %v948
    %2207 = vmatprep.subr.bf16.mxu0 %v957
    %2208 = vmatpush1.bf16.msra.mxu0 %v956
    %2209 = vmatprep.subr.bf16.mxu0 %v965
    %2210 = vmatpush1.bf16.msra.mxu0 %v964
    %2211 = vmatprep.subr.bf16.mxu0 %v973
    %2212 = vmatpush1.bf16.msra.mxu0 %v972
    %2213 = vmatprep.subr.bf16.mxu0 %v981
    %2214 = vmatpush1.bf16.msra.mxu0 %v980
    %2215 = vmatprep.subr.bf16.mxu0 %v989
    %2216 = vmatpush1.bf16.msra.mxu0 %v988
    %2217 = vmatprep.subr.bf16.mxu0 %v997
    %2218 = vmatpush1.bf16.msra.mxu0 %v996
    %2219 = vmatprep.subr.bf16.mxu0 0
    %2220 = vmatpush1.bf16.msra.mxu0 0
    %2221 = vmatprep.subr.bf16.mxu0 0
    %2222 = vmatpush1.bf16.msra.mxu0 0
    %2223 = vmatprep.subr.bf16.mxu0 0
    %2224 = vmatpush1.bf16.msra.mxu0 0
    %2225 = vmatprep.subr.bf16.mxu0 0
    %2226 = vmatpush1.bf16.msra.mxu0 0
    %2227 = vmatprep.subr.bf16.mxu0 0
    %2228 = vmatpush1.bf16.msra.mxu0 0
    %2229 = vmatprep.subr.bf16.mxu0 0
    %2230 = vmatpush1.bf16.msra.mxu0 0
    %2231 = vmatprep.subr.bf16.mxu0 0
    %2232 = vmatpush1.bf16.msra.mxu0 0
    %2233 = vmatprep.subr.bf16.mxu0 0
    %2234 = vmatpush1.bf16.msra.mxu0 0
    %2235 = vmatprep.mubr.bf16.mxu0 0
    %2236 = vmatmul.mubr.bf16.gmra.mrb[0].mxu0 %v630
    %v2237 = vpop.f32.mrb[0].mxu0
    %v2238 = vadd.f32 %v729, %v2237
    %v2239 = vpop.f32.mrb[0].mxu0
    %v2240 = vadd.f32 %v733, %v2239
    %v2241 = vpop.f32.mrb[0].mxu0
    %v2242 = vadd.f32 %v729, %v2241
    %v2243 = vpop.f32.mrb[0].mxu0
    %v2244 = vadd.f32 %v733, %v2243
    %2245 = vdwg.mxu0
    %v2246 = vmax.f32 %v2109, 0.0
    %v2247 = vmax.f32 %v2111, 0.0
    %v2248 = vmax.f32 %v2152, 0.0
    %v2249 = vmax.f32 %v2154, 0.0
    %v2250 = vmax.f32 %v2195, 0.0
    %v2251 = vmax.f32 %v2197, 0.0
    %v2252 = vmax.f32 %v2238, 0.0
    %v2253 = vmax.f32 %v2240, 0.0
    %v2254 = vmax.f32 %v2113, 0.0
    %v2255 = vmax.f32 %v2115, 0.0
    %v2256 = vmax.f32 %v2156, 0.0
    %v2257 = vmax.f32 %v2158, 0.0
    %v2258 = vmax.f32 %v2199, 0.0
    %v2259 = vmax.f32 %v2201, 0.0
    %v2260 = vmax.f32 %v2242, 0.0
    %v2261 = vmax.f32 %v2244, 0.0
    %v2262 = vpack.c.bf16 %v2254, %v2246
    %v2263 = vpack.c.bf16 %v2255, %v2247
    %v2264 = vpack.c.bf16 %v2256, %v2248
    %v2265 = vpack.c.bf16 %v2257, %v2249
    %v2266 = vpack.c.bf16 %v2258, %v2250
    %v2267 = vpack.c.bf16 %v2259, %v2251
    %v2268 = vpack.c.bf16 %v2260, %v2252
    %v2269 = vpack.c.bf16 %v2261, %v2253
    %v2270 = vmax.bf16 %v2066, %v2262
    %v2271 = vmax.bf16 %v2067, %v2263
    %v2272 = vmax.bf16 %v2068, %v2264
    %v2273 = vmax.bf16 %v2069, %v2265
    %v2274 = vmax.bf16 %v2070, %v2266
    %v2275 = vmax.bf16 %v2071, %v2267
    %v2276 = vmax.bf16 %v2072, %v2268
    %v2277 = vmax.bf16 %v2073, %v2269
    %2278 = vmatprep.subr.bf16.mxu0 %v935
    %2279 = vmatpush1.bf16.msra.mxu0 %v934
    %2280 = vmatprep.subr.bf16.mxu0 %v943
    %2281 = vmatpush1.bf16.msra.mxu0 %v942
    %2282 = vmatprep.subr.bf16.mxu0 %v951
    %2283 = vmatpush1.bf16.msra.mxu0 %v950
    %2284 = vmatprep.subr.bf16.mxu0 %v959
    %2285 = vmatpush1.bf16.msra.mxu0 %v958
    %2286 = vmatprep.subr.bf16.mxu0 %v967
    %2287 = vmatpush1.bf16.msra.mxu0 %v966
    %2288 = vmatprep.subr.bf16.mxu0 %v975
    %2289 = vmatpush1.bf16.msra.mxu0 %v974
    %2290 = vmatprep.subr.bf16.mxu0 %v983
    %2291 = vmatpush1.bf16.msra.mxu0 %v982
    %2292 = vmatprep.subr.bf16.mxu0 %v991
    %2293 = vmatpush1.bf16.msra.mxu0 %v990
    %2294 = vmatprep.subr.bf16.mxu0 0
    %2295 = vmatpush1.bf16.msra.mxu0 0
    %2296 = vmatprep.subr.bf16.mxu0 0
    %2297 = vmatpush1.bf16.msra.mxu0 0
    %2298 = vmatprep.subr.bf16.mxu0 0
    %2299 = vmatpush1.bf16.msra.mxu0 0
    %2300 = vmatprep.subr.bf16.mxu0 0
    %2301 = vmatpush1.bf16.msra.mxu0 0
    %2302 = vmatprep.subr.bf16.mxu0 0
    %2303 = vmatpush1.bf16.msra.mxu0 0
    %2304 = vmatprep.subr.bf16.mxu0 0
    %2305 = vmatpush1.bf16.msra.mxu0 0
    %2306 = vmatprep.subr.bf16.mxu0 0
    %2307 = vmatpush1.bf16.msra.mxu0 0
    %2308 = vmatprep.subr.bf16.mxu0 0
    %2309 = vmatpush1.bf16.msra.mxu0 0
    %2310 = vmatprep.mubr.bf16.mxu0 0
    %2311 = vmatmul.mubr.bf16.gmra.mrb[0].mxu0 %v631
    %v2312 = vpop.f32.mrb[0].mxu0
    %v2313 = vadd.f32 %v705, %v2312
    %v2314 = vpop.f32.mrb[0].mxu0
    %v2315 = vadd.f32 %v709, %v2314
    %v2316 = vpop.f32.mrb[0].mxu0
    %v2317 = vadd.f32 %v705, %v2316
    %v2318 = vpop.f32.mrb[0].mxu0
    %v2319 = vadd.f32 %v709, %v2318
    %2320 = vdwg.mxu0
    %2321 = vmatprep.subr.bf16.mxu0 %v937
    %2322 = vmatpush1.bf16.msra.mxu0 %v936
    %2323 = vmatprep.subr.bf16.mxu0 %v945
    %2324 = vmatpush1.bf16.msra.mxu0 %v944
    %2325 = vmatprep.subr.bf16.mxu0 %v953
    %2326 = vmatpush1.bf16.msra.mxu0 %v952
    %2327 = vmatprep.subr.bf16.mxu0 %v961
    %2328 = vmatpush1.bf16.msra.mxu0 %v960
    %2329 = vmatprep.subr.bf16.mxu0 %v969
    %2330 = vmatpush1.bf16.msra.mxu0 %v968
    %2331 = vmatprep.subr.bf16.mxu0 %v977
    %2332 = vmatpush1.bf16.msra.mxu0 %v976
    %2333 = vmatprep.subr.bf16.mxu0 %v985
    %2334 = vmatpush1.bf16.msra.mxu0 %v984
    %2335 = vmatprep.subr.bf16.mxu0 %v993
    %2336 = vmatpush1.bf16.msra.mxu0 %v992
    %2337 = vmatprep.subr.bf16.mxu0 0
    %2338 = vmatpush1.bf16.msra.mxu0 0
    %2339 = vmatprep.subr.bf16.mxu0 0
    %2340 = vmatpush1.bf16.msra.mxu0 0
    %2341 = vmatprep.subr.bf16.mxu0 0
    %2342 = vmatpush1.bf16.msra.mxu0 0
    %2343 = vmatprep.subr.bf16.mxu0 0
    %2344 = vmatpush1.bf16.msra.mxu0 0
    %2345 = vmatprep.subr.bf16.mxu0 0
    %2346 = vmatpush1.bf16.msra.mxu0 0
    %2347 = vmatprep.subr.bf16.mxu0 0
    %2348 = vmatpush1.bf16.msra.mxu0 0
    %2349 = vmatprep.subr.bf16.mxu0 0
    %2350 = vmatpush1.bf16.msra.mxu0 0
    %2351 = vmatprep.subr.bf16.mxu0 0
    %2352 = vmatpush1.bf16.msra.mxu0 0
    %2353 = vmatprep.mubr.bf16.mxu0 0
    %2354 = vmatmul.mubr.bf16.gmra.mrb[0].mxu0 %v631
    %v2355 = vpop.f32.mrb[0].mxu0
    %v2356 = vadd.f32 %v713, %v2355
    %v2357 = vpop.f32.mrb[0].mxu0
    %v2358 = vadd.f32 %v717, %v2357
    %v2359 = vpop.f32.mrb[0].mxu0
    %v2360 = vadd.f32 %v713, %v2359
    %v2361 = vpop.f32.mrb[0].mxu0
    %v2362 = vadd.f32 %v717, %v2361
    %2363 = vdwg.mxu0
    %2364 = vmatprep.subr.bf16.mxu0 %v939
    %2365 = vmatpush1.bf16.msra.mxu0 %v938
    %2366 = vmatprep.subr.bf16.mxu0 %v947
    %2367 = vmatpush1.bf16.msra.mxu0 %v946
    %2368 = vmatprep.subr.bf16.mxu0 %v955
    %2369 = vmatpush1.bf16.msra.mxu0 %v954
    %2370 = vmatprep.subr.bf16.mxu0 %v963
    %2371 = vmatpush1.bf16.msra.mxu0 %v962
    %2372 = vmatprep.subr.bf16.mxu0 %v971
    %2373 = vmatpush1.bf16.msra.mxu0 %v970
    %2374 = vmatprep.subr.bf16.mxu0 %v979
    %2375 = vmatpush1.bf16.msra.mxu0 %v978
    %2376 = vmatprep.subr.bf16.mxu0 %v987
    %2377 = vmatpush1.bf16.msra.mxu0 %v986
    %2378 = vmatprep.subr.bf16.mxu0 %v995
    %2379 = vmatpush1.bf16.msra.mxu0 %v994
    %2380 = vmatprep.subr.bf16.mxu0 0
    %2381 = vmatpush1.bf16.msra.mxu0 0
    %2382 = vmatprep.subr.bf16.mxu0 0
    %2383 = vmatpush1.bf16.msra.mxu0 0
    %2384 = vmatprep.subr.bf16.mxu0 0
    %2385 = vmatpush1.bf16.msra.mxu0 0
    %2386 = vmatprep.subr.bf16.mxu0 0
    %2387 = vmatpush1.bf16.msra.mxu0 0
    %2388 = vmatprep.subr.bf16.mxu0 0
    %2389 = vmatpush1.bf16.msra.mxu0 0
    %2390 = vmatprep.subr.bf16.mxu0 0
    %2391 = vmatpush1.bf16.msra.mxu0 0
    %2392 = vmatprep.subr.bf16.mxu0 0
    %2393 = vmatpush1.bf16.msra.mxu0 0
    %2394 = vmatprep.subr.bf16.mxu0 0
    %2395 = vmatpush1.bf16.msra.mxu0 0
    %2396 = vmatprep.mubr.bf16.mxu0 0
    %2397 = vmatmul.mubr.bf16.gmra.mrb[0].mxu0 %v631
    %v2398 = vpop.f32.mrb[0].mxu0
    %v2399 = vadd.f32 %v721, %v2398
    %v2400 = vpop.f32.mrb[0].mxu0
    %v2401 = vadd.f32 %v725, %v2400
    %v2402 = vpop.f32.mrb[0].mxu0
    %v2403 = vadd.f32 %v721, %v2402
    %v2404 = vpop.f32.mrb[0].mxu0
    %v2405 = vadd.f32 %v725, %v2404
    %2406 = vdwg.mxu0
    %2407 = vmatprep.subr.bf16.mxu0 %v941
    %2408 = vmatpush1.bf16.msra.mxu0 %v940
    %2409 = vmatprep.subr.bf16.mxu0 %v949
    %2410 = vmatpush1.bf16.msra.mxu0 %v948
    %2411 = vmatprep.subr.bf16.mxu0 %v957
    %2412 = vmatpush1.bf16.msra.mxu0 %v956
    %2413 = vmatprep.subr.bf16.mxu0 %v965
    %2414 = vmatpush1.bf16.msra.mxu0 %v964
    %2415 = vmatprep.subr.bf16.mxu0 %v973
    %2416 = vmatpush1.bf16.msra.mxu0 %v972
    %2417 = vmatprep.subr.bf16.mxu0 %v981
    %2418 = vmatpush1.bf16.msra.mxu0 %v980
    %2419 = vmatprep.subr.bf16.mxu0 %v989
    %2420 = vmatpush1.bf16.msra.mxu0 %v988
    %2421 = vmatprep.subr.bf16.mxu0 %v997
    %2422 = vmatpush1.bf16.msra.mxu0 %v996
    %2423 = vmatprep.subr.bf16.mxu0 0
    %2424 = vmatpush1.bf16.msra.mxu0 0
    %2425 = vmatprep.subr.bf16.mxu0 0
    %2426 = vmatpush1.bf16.msra.mxu0 0
    %2427 = vmatprep.subr.bf16.mxu0 0
    %2428 = vmatpush1.bf16.msra.mxu0 0
    %2429 = vmatprep.subr.bf16.mxu0 0
    %2430 = vmatpush1.bf16.msra.mxu0 0
    %2431 = vmatprep.subr.bf16.mxu0 0
    %2432 = vmatpush1.bf16.msra.mxu0 0
    %2433 = vmatprep.subr.bf16.mxu0 0
    %2434 = vmatpush1.bf16.msra.mxu0 0
    %2435 = vmatprep.subr.bf16.mxu0 0
    %2436 = vmatpush1.bf16.msra.mxu0 0
    %2437 = vmatprep.subr.bf16.mxu0 0
    %2438 = vmatpush1.bf16.msra.mxu0 0
    %2439 = vmatprep.mubr.bf16.mxu0 0
    %2440 = vmatmul.mubr.bf16.gmra.mrb[0].mxu0 %v631
    %v2441 = vpop.f32.mrb[0].mxu0
    %v2442 = vadd.f32 %v729, %v2441
    %v2443 = vpop.f32.mrb[0].mxu0
    %v2444 = vadd.f32 %v733, %v2443
    %v2445 = vpop.f32.mrb[0].mxu0
    %v2446 = vadd.f32 %v729, %v2445
    %v2447 = vpop.f32.mrb[0].mxu0
    %v2448 = vadd.f32 %v733, %v2447
    %2449 = vdwg.mxu0
    %v2450 = vmax.f32 %v2313, 0.0
    %v2451 = vmax.f32 %v2315, 0.0
    %v2452 = vmax.f32 %v2356, 0.0
    %v2453 = vmax.f32 %v2358, 0.0
    %v2454 = vmax.f32 %v2399, 0.0
    %v2455 = vmax.f32 %v2401, 0.0
    %v2456 = vmax.f32 %v2442, 0.0
    %v2457 = vmax.f32 %v2444, 0.0
    %v2458 = vmax.f32 %v2317, 0.0
    %v2459 = vmax.f32 %v2319, 0.0
    %v2460 = vmax.f32 %v2360, 0.0
    %v2461 = vmax.f32 %v2362, 0.0
    %v2462 = vmax.f32 %v2403, 0.0
    %v2463 = vmax.f32 %v2405, 0.0
    %v2464 = vmax.f32 %v2446, 0.0
    %v2465 = vmax.f32 %v2448, 0.0
    %v2466 = vpack.c.bf16 %v2458, %v2450
    %v2467 = vpack.c.bf16 %v2459, %v2451
    %v2468 = vpack.c.bf16 %v2460, %v2452
    %v2469 = vpack.c.bf16 %v2461, %v2453
    %v2470 = vpack.c.bf16 %v2462, %v2454
    %v2471 = vpack.c.bf16 %v2463, %v2455
    %v2472 = vpack.c.bf16 %v2464, %v2456
    %v2473 = vpack.c.bf16 %v2465, %v2457
    %v2474 = vmax.bf16 %v2270, %v2466
    %v2475 = vmax.bf16 %v2271, %v2467
    %v2476 = vmax.bf16 %v2272, %v2468
    %v2477 = vmax.bf16 %v2273, %v2469
    %v2478 = vmax.bf16 %v2274, %v2470
    %v2479 = vmax.bf16 %v2275, %v2471
    %v2480 = vmax.bf16 %v2276, %v2472
    %v2481 = vmax.bf16 %v2277, %v2473
    %2482 = vmatprep.subr.bf16.mxu0 %v935
    %2483 = vmatpush1.bf16.msra.mxu0 %v934
    %2484 = vmatprep.subr.bf16.mxu0 %v943
    %2485 = vmatpush1.bf16.msra.mxu0 %v942
    %2486 = vmatprep.subr.bf16.mxu0 %v951
    %2487 = vmatpush1.bf16.msra.mxu0 %v950
    %2488 = vmatprep.subr.bf16.mxu0 %v959
    %2489 = vmatpush1.bf16.msra.mxu0 %v958
    %2490 = vmatprep.subr.bf16.mxu0 %v967
    %2491 = vmatpush1.bf16.msra.mxu0 %v966
    %2492 = vmatprep.subr.bf16.mxu0 %v975
    %2493 = vmatpush1.bf16.msra.mxu0 %v974
    %2494 = vmatprep.subr.bf16.mxu0 %v983
    %2495 = vmatpush1.bf16.msra.mxu0 %v982
    %2496 = vmatprep.subr.bf16.mxu0 %v991
    %2497 = vmatpush1.bf16.msra.mxu0 %v990
    %2498 = vmatprep.subr.bf16.mxu0 0
    %2499 = vmatpush1.bf16.msra.mxu0 0
    %2500 = vmatprep.subr.bf16.mxu0 0
    %2501 = vmatpush1.bf16.msra.mxu0 0
    %2502 = vmatprep.subr.bf16.mxu0 0
    %2503 = vmatpush1.bf16.msra.mxu0 0
    %2504 = vmatprep.subr.bf16.mxu0 0
    %2505 = vmatpush1.bf16.msra.mxu0 0
    %2506 = vmatprep.subr.bf16.mxu0 0
    %2507 = vmatpush1.bf16.msra.mxu0 0
    %2508 = vmatprep.subr.bf16.mxu0 0
    %2509 = vmatpush1.bf16.msra.mxu0 0
    %2510 = vmatprep.subr.bf16.mxu0 0
    %2511 = vmatpush1.bf16.msra.mxu0 0
    %2512 = vmatprep.subr.bf16.mxu0 0
    %2513 = vmatpush1.bf16.msra.mxu0 0
    %2514 = vmatprep.mubr.bf16.mxu0 0
    %2515 = vmatmul.mubr.bf16.gmra.mrb[0].mxu0 %v632
    %v2516 = vpop.f32.mrb[0].mxu0
    %v2517 = vadd.f32 %v705, %v2516
    %v2518 = vpop.f32.mrb[0].mxu0
    %v2519 = vadd.f32 %v709, %v2518
    %v2520 = vpop.f32.mrb[0].mxu0
    %v2521 = vadd.f32 %v705, %v2520
    %v2522 = vpop.f32.mrb[0].mxu0
    %v2523 = vadd.f32 %v709, %v2522
    %2524 = vdwg.mxu0
    %2525 = vmatprep.subr.bf16.mxu0 %v937
    %2526 = vmatpush1.bf16.msra.mxu0 %v936
    %2527 = vmatprep.subr.bf16.mxu0 %v945
    %2528 = vmatpush1.bf16.msra.mxu0 %v944
    %2529 = vmatprep.subr.bf16.mxu0 %v953
    %2530 = vmatpush1.bf16.msra.mxu0 %v952
    %2531 = vmatprep.subr.bf16.mxu0 %v961
    %2532 = vmatpush1.bf16.msra.mxu0 %v960
    %2533 = vmatprep.subr.bf16.mxu0 %v969
    %2534 = vmatpush1.bf16.msra.mxu0 %v968
    %2535 = vmatprep.subr.bf16.mxu0 %v977
    %2536 = vmatpush1.bf16.msra.mxu0 %v976
    %2537 = vmatprep.subr.bf16.mxu0 %v985
    %2538 = vmatpush1.bf16.msra.mxu0 %v984
    %2539 = vmatprep.subr.bf16.mxu0 %v993
    %2540 = vmatpush1.bf16.msra.mxu0 %v992
    %2541 = vmatprep.subr.bf16.mxu0 0
    %2542 = vmatpush1.bf16.msra.mxu0 0
    %2543 = vmatprep.subr.bf16.mxu0 0
    %2544 = vmatpush1.bf16.msra.mxu0 0
    %2545 = vmatprep.subr.bf16.mxu0 0
    %2546 = vmatpush1.bf16.msra.mxu0 0
    %2547 = vmatprep.subr.bf16.mxu0 0
    %2548 = vmatpush1.bf16.msra.mxu0 0
    %2549 = vmatprep.subr.bf16.mxu0 0
    %2550 = vmatpush1.bf16.msra.mxu0 0
    %2551 = vmatprep.subr.bf16.mxu0 0
    %2552 = vmatpush1.bf16.msra.mxu0 0
    %2553 = vmatprep.subr.bf16.mxu0 0
    %2554 = vmatpush1.bf16.msra.mxu0 0
    %2555 = vmatprep.subr.bf16.mxu0 0
    %2556 = vmatpush1.bf16.msra.mxu0 0
    %2557 = vmatprep.mubr.bf16.mxu0 0
    %2558 = vmatmul.mubr.bf16.gmra.mrb[0].mxu0 %v632
    %v2559 = vpop.f32.mrb[0].mxu0
    %v2560 = vadd.f32 %v713, %v2559
    %v2561 = vpop.f32.mrb[0].mxu0
    %v2562 = vadd.f32 %v717, %v2561
    %v2563 = vpop.f32.mrb[0].mxu0
    %v2564 = vadd.f32 %v713, %v2563
    %v2565 = vpop.f32.mrb[0].mxu0
    %v2566 = vadd.f32 %v717, %v2565
    %2567 = vdwg.mxu0
    %2568 = vmatprep.subr.bf16.mxu0 %v939
    %2569 = vmatpush1.bf16.msra.mxu0 %v938
    %2570 = vmatprep.subr.bf16.mxu0 %v947
    %2571 = vmatpush1.bf16.msra.mxu0 %v946
    %2572 = vmatprep.subr.bf16.mxu0 %v955
    %2573 = vmatpush1.bf16.msra.mxu0 %v954
    %2574 = vmatprep.subr.bf16.mxu0 %v963
    %2575 = vmatpush1.bf16.msra.mxu0 %v962
    %2576 = vmatprep.subr.bf16.mxu0 %v971
    %2577 = vmatpush1.bf16.msra.mxu0 %v970
    %2578 = vmatprep.subr.bf16.mxu0 %v979
    %2579 = vmatpush1.bf16.msra.mxu0 %v978
    %2580 = vmatprep.subr.bf16.mxu0 %v987
    %2581 = vmatpush1.bf16.msra.mxu0 %v986
    %2582 = vmatprep.subr.bf16.mxu0 %v995
    %2583 = vmatpush1.bf16.msra.mxu0 %v994
    %2584 = vmatprep.subr.bf16.mxu0 0
    %2585 = vmatpush1.bf16.msra.mxu0 0
    %2586 = vmatprep.subr.bf16.mxu0 0
    %2587 = vmatpush1.bf16.msra.mxu0 0
    %2588 = vmatprep.subr.bf16.mxu0 0
    %2589 = vmatpush1.bf16.msra.mxu0 0
    %2590 = vmatprep.subr.bf16.mxu0 0
    %2591 = vmatpush1.bf16.msra.mxu0 0
    %2592 = vmatprep.subr.bf16.mxu0 0
    %2593 = vmatpush1.bf16.msra.mxu0 0
    %2594 = vmatprep.subr.bf16.mxu0 0
    %2595 = vmatpush1.bf16.msra.mxu0 0
    %2596 = vmatprep.subr.bf16.mxu0 0
    %2597 = vmatpush1.bf16.msra.mxu0 0
    %2598 = vmatprep.subr.bf16.mxu0 0
    %2599 = vmatpush1.bf16.msra.mxu0 0
    %2600 = vmatprep.mubr.bf16.mxu0 0
    %2601 = vmatmul.mubr.bf16.gmra.mrb[0].mxu0 %v632
    %v2602 = vpop.f32.mrb[0].mxu0
    %v2603 = vadd.f32 %v721, %v2602
    %v2604 = vpop.f32.mrb[0].mxu0
    %v2605 = vadd.f32 %v725, %v2604
    %v2606 = vpop.f32.mrb[0].mxu0
    %v2607 = vadd.f32 %v721, %v2606
    %v2608 = vpop.f32.mrb[0].mxu0
    %v2609 = vadd.f32 %v725, %v2608
    %2610 = vdwg.mxu0
    %2611 = vmatprep.subr.bf16.mxu0 %v941
    %2612 = vmatpush1.bf16.msra.mxu0 %v940
    %2613 = vmatprep.subr.bf16.mxu0 %v949
    %2614 = vmatpush1.bf16.msra.mxu0 %v948
    %2615 = vmatprep.subr.bf16.mxu0 %v957
    %2616 = vmatpush1.bf16.msra.mxu0 %v956
    %2617 = vmatprep.subr.bf16.mxu0 %v965
    %2618 = vmatpush1.bf16.msra.mxu0 %v964
    %2619 = vmatprep.subr.bf16.mxu0 %v973
    %2620 = vmatpush1.bf16.msra.mxu0 %v972
    %2621 = vmatprep.subr.bf16.mxu0 %v981
    %2622 = vmatpush1.bf16.msra.mxu0 %v980
    %2623 = vmatprep.subr.bf16.mxu0 %v989
    %2624 = vmatpush1.bf16.msra.mxu0 %v988
    %2625 = vmatprep.subr.bf16.mxu0 %v997
    %2626 = vmatpush1.bf16.msra.mxu0 %v996
    %2627 = vmatprep.subr.bf16.mxu0 0
    %2628 = vmatpush1.bf16.msra.mxu0 0
    %2629 = vmatprep.subr.bf16.mxu0 0
    %2630 = vmatpush1.bf16.msra.mxu0 0
    %2631 = vmatprep.subr.bf16.mxu0 0
    %2632 = vmatpush1.bf16.msra.mxu0 0
    %2633 = vmatprep.subr.bf16.mxu0 0
    %2634 = vmatpush1.bf16.msra.mxu0 0
    %2635 = vmatprep.subr.bf16.mxu0 0
    %2636 = vmatpush1.bf16.msra.mxu0 0
    %2637 = vmatprep.subr.bf16.mxu0 0
    %2638 = vmatpush1.bf16.msra.mxu0 0
    %2639 = vmatprep.subr.bf16.mxu0 0
    %2640 = vmatpush1.bf16.msra.mxu0 0
    %2641 = vmatprep.subr.bf16.mxu0 0
    %2642 = vmatpush1.bf16.msra.mxu0 0
    %2643 = vmatprep.mubr.bf16.mxu0 0
    %2644 = vmatmul.mubr.bf16.gmra.mrb[0].mxu0 %v632
    %v2645 = vpop.f32.mrb[0].mxu0
    %v2646 = vadd.f32 %v729, %v2645
    %v2647 = vpop.f32.mrb[0].mxu0
    %v2648 = vadd.f32 %v733, %v2647
    %v2649 = vpop.f32.mrb[0].mxu0
    %v2650 = vadd.f32 %v729, %v2649
    %v2651 = vpop.f32.mrb[0].mxu0
    %v2652 = vadd.f32 %v733, %v2651
    %2653 = vdwg.mxu0
    %v2654 = vmax.f32 %v2517, 0.0
    %v2655 = vmax.f32 %v2519, 0.0
    %v2656 = vmax.f32 %v2560, 0.0
    %v2657 = vmax.f32 %v2562, 0.0
    %v2658 = vmax.f32 %v2603, 0.0
    %v2659 = vmax.f32 %v2605, 0.0
    %v2660 = vmax.f32 %v2646, 0.0
    %v2661 = vmax.f32 %v2648, 0.0
    %v2662 = vmax.f32 %v2521, 0.0
    %v2663 = vmax.f32 %v2523, 0.0
    %v2664 = vmax.f32 %v2564, 0.0
    %v2665 = vmax.f32 %v2566, 0.0
    %v2666 = vmax.f32 %v2607, 0.0
    %v2667 = vmax.f32 %v2609, 0.0
    %v2668 = vmax.f32 %v2650, 0.0
    %v2669 = vmax.f32 %v2652, 0.0
    %v2670 = vpack.c.bf16 %v2662, %v2654
    %v2671 = vpack.c.bf16 %v2663, %v2655
    %v2672 = vpack.c.bf16 %v2664, %v2656
    %v2673 = vpack.c.bf16 %v2665, %v2657
    %v2674 = vpack.c.bf16 %v2666, %v2658
    %v2675 = vpack.c.bf16 %v2667, %v2659
    %v2676 = vpack.c.bf16 %v2668, %v2660
    %v2677 = vpack.c.bf16 %v2669, %v2661
    %v2678 = vmax.bf16 %v2474, %v2670
    %v2679 = vmax.bf16 %v2475, %v2671
    %v2680 = vmax.bf16 %v2476, %v2672
    %v2681 = vmax.bf16 %v2477, %v2673
    %v2682 = vmax.bf16 %v2478, %v2674
    %v2683 = vmax.bf16 %v2479, %v2675
    %v2684 = vmax.bf16 %v2480, %v2676
    %v2685 = vmax.bf16 %v2481, %v2677
    %2686 = vmatprep.subr.bf16.mxu0 %v935
    %2687 = vmatpush1.bf16.msra.mxu0 %v934
    %2688 = vmatprep.subr.bf16.mxu0 %v943
    %2689 = vmatpush1.bf16.msra.mxu0 %v942
    %2690 = vmatprep.subr.bf16.mxu0 %v951
    %2691 = vmatpush1.bf16.msra.mxu0 %v950
    %2692 = vmatprep.subr.bf16.mxu0 %v959
    %2693 = vmatpush1.bf16.msra.mxu0 %v958
    %2694 = vmatprep.subr.bf16.mxu0 %v967
    %2695 = vmatpush1.bf16.msra.mxu0 %v966
    %2696 = vmatprep.subr.bf16.mxu0 %v975
    %2697 = vmatpush1.bf16.msra.mxu0 %v974
    %2698 = vmatprep.subr.bf16.mxu0 %v983
    %2699 = vmatpush1.bf16.msra.mxu0 %v982
    %2700 = vmatprep.subr.bf16.mxu0 %v991
    %2701 = vmatpush1.bf16.msra.mxu0 %v990
    %2702 = vmatprep.subr.bf16.mxu0 0
    %2703 = vmatpush1.bf16.msra.mxu0 0
    %2704 = vmatprep.subr.bf16.mxu0 0
    %2705 = vmatpush1.bf16.msra.mxu0 0
    %2706 = vmatprep.subr.bf16.mxu0 0
    %2707 = vmatpush1.bf16.msra.mxu0 0
    %2708 = vmatprep.subr.bf16.mxu0 0
    %2709 = vmatpush1.bf16.msra.mxu0 0
    %2710 = vmatprep.subr.bf16.mxu0 0
    %2711 = vmatpush1.bf16.msra.mxu0 0
    %2712 = vmatprep.subr.bf16.mxu0 0
    %2713 = vmatpush1.bf16.msra.mxu0 0
    %2714 = vmatprep.subr.bf16.mxu0 0
    %2715 = vmatpush1.bf16.msra.mxu0 0
    %2716 = vmatprep.subr.bf16.mxu0 0
    %2717 = vmatpush1.bf16.msra.mxu0 0
    %2718 = vmatprep.mubr.bf16.mxu0 0
    %2719 = vmatmul.mubr.bf16.gmra.mrb[0].mxu0 %v633
    %v2720 = vpop.f32.mrb[0].mxu0
    %v2721 = vadd.f32 %v705, %v2720
    %v2722 = vpop.f32.mrb[0].mxu0
    %v2723 = vadd.f32 %v709, %v2722
    %v2724 = vpop.f32.mrb[0].mxu0
    %v2725 = vadd.f32 %v705, %v2724
    %v2726 = vpop.f32.mrb[0].mxu0
    %v2727 = vadd.f32 %v709, %v2726
    %2728 = vdwg.mxu0
    %2729 = vmatprep.subr.bf16.mxu0 %v937
    %2730 = vmatpush1.bf16.msra.mxu0 %v936
    %2731 = vmatprep.subr.bf16.mxu0 %v945
    %2732 = vmatpush1.bf16.msra.mxu0 %v944
    %2733 = vmatprep.subr.bf16.mxu0 %v953
    %2734 = vmatpush1.bf16.msra.mxu0 %v952
    %2735 = vmatprep.subr.bf16.mxu0 %v961
    %2736 = vmatpush1.bf16.msra.mxu0 %v960
    %2737 = vmatprep.subr.bf16.mxu0 %v969
    %2738 = vmatpush1.bf16.msra.mxu0 %v968
    %2739 = vmatprep.subr.bf16.mxu0 %v977
    %2740 = vmatpush1.bf16.msra.mxu0 %v976
    %2741 = vmatprep.subr.bf16.mxu0 %v985
    %2742 = vmatpush1.bf16.msra.mxu0 %v984
    %2743 = vmatprep.subr.bf16.mxu0 %v993
    %2744 = vmatpush1.bf16.msra.mxu0 %v992
    %2745 = vmatprep.subr.bf16.mxu0 0
    %2746 = vmatpush1.bf16.msra.mxu0 0
    %2747 = vmatprep.subr.bf16.mxu0 0
    %2748 = vmatpush1.bf16.msra.mxu0 0
    %2749 = vmatprep.subr.bf16.mxu0 0
    %2750 = vmatpush1.bf16.msra.mxu0 0
    %2751 = vmatprep.subr.bf16.mxu0 0
    %2752 = vmatpush1.bf16.msra.mxu0 0
    %2753 = vmatprep.subr.bf16.mxu0 0
    %2754 = vmatpush1.bf16.msra.mxu0 0
    %2755 = vmatprep.subr.bf16.mxu0 0
    %2756 = vmatpush1.bf16.msra.mxu0 0
    %2757 = vmatprep.subr.bf16.mxu0 0
    %2758 = vmatpush1.bf16.msra.mxu0 0
    %2759 = vmatprep.subr.bf16.mxu0 0
    %2760 = vmatpush1.bf16.msra.mxu0 0
    %2761 = vmatprep.mubr.bf16.mxu0 0
    %2762 = vmatmul.mubr.bf16.gmra.mrb[0].mxu0 %v633
    %v2763 = vpop.f32.mrb[0].mxu0
    %v2764 = vadd.f32 %v713, %v2763
    %v2765 = vpop.f32.mrb[0].mxu0
    %v2766 = vadd.f32 %v717, %v2765
    %v2767 = vpop.f32.mrb[0].mxu0
    %v2768 = vadd.f32 %v713, %v2767
    %v2769 = vpop.f32.mrb[0].mxu0
    %v2770 = vadd.f32 %v717, %v2769
    %2771 = vdwg.mxu0
    %2772 = vmatprep.subr.bf16.mxu0 %v939
    %2773 = vmatpush1.bf16.msra.mxu0 %v938
    %2774 = vmatprep.subr.bf16.mxu0 %v947
    %2775 = vmatpush1.bf16.msra.mxu0 %v946
    %2776 = vmatprep.subr.bf16.mxu0 %v955
    %2777 = vmatpush1.bf16.msra.mxu0 %v954
    %2778 = vmatprep.subr.bf16.mxu0 %v963
    %2779 = vmatpush1.bf16.msra.mxu0 %v962
    %2780 = vmatprep.subr.bf16.mxu0 %v971
    %2781 = vmatpush1.bf16.msra.mxu0 %v970
    %2782 = vmatprep.subr.bf16.mxu0 %v979
    %2783 = vmatpush1.bf16.msra.mxu0 %v978
    %2784 = vmatprep.subr.bf16.mxu0 %v987
    %2785 = vmatpush1.bf16.msra.mxu0 %v986
    %2786 = vmatprep.subr.bf16.mxu0 %v995
    %2787 = vmatpush1.bf16.msra.mxu0 %v994
    %2788 = vmatprep.subr.bf16.mxu0 0
    %2789 = vmatpush1.bf16.msra.mxu0 0
    %2790 = vmatprep.subr.bf16.mxu0 0
    %2791 = vmatpush1.bf16.msra.mxu0 0
    %2792 = vmatprep.subr.bf16.mxu0 0
    %2793 = vmatpush1.bf16.msra.mxu0 0
    %2794 = vmatprep.subr.bf16.mxu0 0
    %2795 = vmatpush1.bf16.msra.mxu0 0
    %2796 = vmatprep.subr.bf16.mxu0 0
    %2797 = vmatpush1.bf16.msra.mxu0 0
    %2798 = vmatprep.subr.bf16.mxu0 0
    %2799 = vmatpush1.bf16.msra.mxu0 0
    %2800 = vmatprep.subr.bf16.mxu0 0
    %2801 = vmatpush1.bf16.msra.mxu0 0
    %2802 = vmatprep.subr.bf16.mxu0 0
    %2803 = vmatpush1.bf16.msra.mxu0 0
    %2804 = vmatprep.mubr.bf16.mxu0 0
    %2805 = vmatmul.mubr.bf16.gmra.mrb[0].mxu0 %v633
    %v2806 = vpop.f32.mrb[0].mxu0
    %v2807 = vadd.f32 %v721, %v2806
    %v2808 = vpop.f32.mrb[0].mxu0
    %v2809 = vadd.f32 %v725, %v2808
    %v2810 = vpop.f32.mrb[0].mxu0
    %v2811 = vadd.f32 %v721, %v2810
    %v2812 = vpop.f32.mrb[0].mxu0
    %v2813 = vadd.f32 %v725, %v2812
    %2814 = vdwg.mxu0
    %2815 = vmatprep.subr.bf16.mxu0 %v941
    %2816 = vmatpush1.bf16.msra.mxu0 %v940
    %2817 = vmatprep.subr.bf16.mxu0 %v949
    %2818 = vmatpush1.bf16.msra.mxu0 %v948
    %2819 = vmatprep.subr.bf16.mxu0 %v957
    %2820 = vmatpush1.bf16.msra.mxu0 %v956
    %2821 = vmatprep.subr.bf16.mxu0 %v965
    %2822 = vmatpush1.bf16.msra.mxu0 %v964
    %2823 = vmatprep.subr.bf16.mxu0 %v973
    %2824 = vmatpush1.bf16.msra.mxu0 %v972
    %2825 = vmatprep.subr.bf16.mxu0 %v981
    %2826 = vmatpush1.bf16.msra.mxu0 %v980
    %2827 = vmatprep.subr.bf16.mxu0 %v989
    %2828 = vmatpush1.bf16.msra.mxu0 %v988
    %2829 = vmatprep.subr.bf16.mxu0 %v997
    %2830 = vmatpush1.bf16.msra.mxu0 %v996
    %2831 = vmatprep.subr.bf16.mxu0 0
    %2832 = vmatpush1.bf16.msra.mxu0 0
    %2833 = vmatprep.subr.bf16.mxu0 0
    %2834 = vmatpush1.bf16.msra.mxu0 0
    %2835 = vmatprep.subr.bf16.mxu0 0
    %2836 = vmatpush1.bf16.msra.mxu0 0
    %2837 = vmatprep.subr.bf16.mxu0 0
    %2838 = vmatpush1.bf16.msra.mxu0 0
    %2839 = vmatprep.subr.bf16.mxu0 0
    %2840 = vmatpush1.bf16.msra.mxu0 0
    %2841 = vmatprep.subr.bf16.mxu0 0
    %2842 = vmatpush1.bf16.msra.mxu0 0
    %2843 = vmatprep.subr.bf16.mxu0 0
    %2844 = vmatpush1.bf16.msra.mxu0 0
    %2845 = vmatprep.subr.bf16.mxu0 0
    %2846 = vmatpush1.bf16.msra.mxu0 0
    %2847 = vmatprep.mubr.bf16.mxu0 0
    %2848 = vmatmul.mubr.bf16.gmra.mrb[0].mxu0 %v633
    %v2849 = vpop.f32.mrb[0].mxu0
    %v2850 = vadd.f32 %v729, %v2849
    %v2851 = vpop.f32.mrb[0].mxu0
    %v2852 = vadd.f32 %v733, %v2851
    %v2853 = vpop.f32.mrb[0].mxu0
    %v2854 = vadd.f32 %v729, %v2853
    %v2855 = vpop.f32.mrb[0].mxu0
    %v2856 = vadd.f32 %v733, %v2855
    %2857 = vdwg.mxu0
    %v2858 = vmax.f32 %v2721, 0.0
    %v2859 = vmax.f32 %v2723, 0.0
    %v2860 = vmax.f32 %v2764, 0.0
    %v2861 = vmax.f32 %v2766, 0.0
    %v2862 = vmax.f32 %v2807, 0.0
    %v2863 = vmax.f32 %v2809, 0.0
    %v2864 = vmax.f32 %v2850, 0.0
    %v2865 = vmax.f32 %v2852, 0.0
    %v2866 = vmax.f32 %v2725, 0.0
    %v2867 = vmax.f32 %v2727, 0.0
    %v2868 = vmax.f32 %v2768, 0.0
    %v2869 = vmax.f32 %v2770, 0.0
    %v2870 = vmax.f32 %v2811, 0.0
    %v2871 = vmax.f32 %v2813, 0.0
    %v2872 = vmax.f32 %v2854, 0.0
    %v2873 = vmax.f32 %v2856, 0.0
    %v2874 = vpack.c.bf16 %v2866, %v2858
    %v2875 = vpack.c.bf16 %v2867, %v2859
    %v2876 = vpack.c.bf16 %v2868, %v2860
    %v2877 = vpack.c.bf16 %v2869, %v2861
    %v2878 = vpack.c.bf16 %v2870, %v2862
    %v2879 = vpack.c.bf16 %v2871, %v2863
    %v2880 = vpack.c.bf16 %v2872, %v2864
    %v2881 = vpack.c.bf16 %v2873, %v2865
    %v2882 = vmax.bf16 %v2678, %v2874
    %v2883 = vmax.bf16 %v2679, %v2875
    %v2884 = vmax.bf16 %v2680, %v2876
    %v2885 = vmax.bf16 %v2681, %v2877
    %v2886 = vmax.bf16 %v2682, %v2878
    %v2887 = vmax.bf16 %v2683, %v2879
    %v2888 = vmax.bf16 %v2684, %v2880
    %v2889 = vmax.bf16 %v2685, %v2881
    %2890 = vmatprep.subr.bf16.mxu0 %v935
    %2891 = vmatpush1.bf16.msra.mxu0 %v934
    %2892 = vmatprep.subr.bf16.mxu0 %v943
    %2893 = vmatpush1.bf16.msra.mxu0 %v942
    %2894 = vmatprep.subr.bf16.mxu0 %v951
    %2895 = vmatpush1.bf16.msra.mxu0 %v950
    %2896 = vmatprep.subr.bf16.mxu0 %v959
    %2897 = vmatpush1.bf16.msra.mxu0 %v958
    %2898 = vmatprep.subr.bf16.mxu0 %v967
    %2899 = vmatpush1.bf16.msra.mxu0 %v966
    %2900 = vmatprep.subr.bf16.mxu0 %v975
    %2901 = vmatpush1.bf16.msra.mxu0 %v974
    %2902 = vmatprep.subr.bf16.mxu0 %v983
    %2903 = vmatpush1.bf16.msra.mxu0 %v982
    %2904 = vmatprep.subr.bf16.mxu0 %v991
    %2905 = vmatpush1.bf16.msra.mxu0 %v990
    %2906 = vmatprep.subr.bf16.mxu0 0
    %2907 = vmatpush1.bf16.msra.mxu0 0
    %2908 = vmatprep.subr.bf16.mxu0 0
    %2909 = vmatpush1.bf16.msra.mxu0 0
    %2910 = vmatprep.subr.bf16.mxu0 0
    %2911 = vmatpush1.bf16.msra.mxu0 0
    %2912 = vmatprep.subr.bf16.mxu0 0
    %2913 = vmatpush1.bf16.msra.mxu0 0
    %2914 = vmatprep.subr.bf16.mxu0 0
    %2915 = vmatpush1.bf16.msra.mxu0 0
    %2916 = vmatprep.subr.bf16.mxu0 0
    %2917 = vmatpush1.bf16.msra.mxu0 0
    %2918 = vmatprep.subr.bf16.mxu0 0
    %2919 = vmatpush1.bf16.msra.mxu0 0
    %2920 = vmatprep.subr.bf16.mxu0 0
    %2921 = vmatpush1.bf16.msra.mxu0 0
    %2922 = vmatprep.mubr.bf16.mxu0 0
    %2923 = vmatmul.mubr.bf16.gmra.mrb[0].mxu0 %v634
    %v2924 = vpop.f32.mrb[0].mxu0
    %v2925 = vadd.f32 %v705, %v2924
    %v2926 = vpop.f32.mrb[0].mxu0
    %v2927 = vadd.f32 %v709, %v2926
    %v2928 = vpop.f32.mrb[0].mxu0
    %v2929 = vadd.f32 %v705, %v2928
    %v2930 = vpop.f32.mrb[0].mxu0
    %v2931 = vadd.f32 %v709, %v2930
    %2932 = vdwg.mxu0
    %2933 = vmatprep.subr.bf16.mxu0 %v937
    %2934 = vmatpush1.bf16.msra.mxu0 %v936
    %2935 = vmatprep.subr.bf16.mxu0 %v945
    %2936 = vmatpush1.bf16.msra.mxu0 %v944
    %2937 = vmatprep.subr.bf16.mxu0 %v953
    %2938 = vmatpush1.bf16.msra.mxu0 %v952
    %2939 = vmatprep.subr.bf16.mxu0 %v961
    %2940 = vmatpush1.bf16.msra.mxu0 %v960
    %2941 = vmatprep.subr.bf16.mxu0 %v969
    %2942 = vmatpush1.bf16.msra.mxu0 %v968
    %2943 = vmatprep.subr.bf16.mxu0 %v977
    %2944 = vmatpush1.bf16.msra.mxu0 %v976
    %2945 = vmatprep.subr.bf16.mxu0 %v985
    %2946 = vmatpush1.bf16.msra.mxu0 %v984
    %2947 = vmatprep.subr.bf16.mxu0 %v993
    %2948 = vmatpush1.bf16.msra.mxu0 %v992
    %2949 = vmatprep.subr.bf16.mxu0 0
    %2950 = vmatpush1.bf16.msra.mxu0 0
    %2951 = vmatprep.subr.bf16.mxu0 0
    %2952 = vmatpush1.bf16.msra.mxu0 0
    %2953 = vmatprep.subr.bf16.mxu0 0
    %2954 = vmatpush1.bf16.msra.mxu0 0
    %2955 = vmatprep.subr.bf16.mxu0 0
    %2956 = vmatpush1.bf16.msra.mxu0 0
    %2957 = vmatprep.subr.bf16.mxu0 0
    %2958 = vmatpush1.bf16.msra.mxu0 0
    %2959 = vmatprep.subr.bf16.mxu0 0
    %2960 = vmatpush1.bf16.msra.mxu0 0
    %2961 = vmatprep.subr.bf16.mxu0 0
    %2962 = vmatpush1.bf16.msra.mxu0 0
    %2963 = vmatprep.subr.bf16.mxu0 0
    %2964 = vmatpush1.bf16.msra.mxu0 0
    %2965 = vmatprep.mubr.bf16.mxu0 0
    %2966 = vmatmul.mubr.bf16.gmra.mrb[0].mxu0 %v634
    %v2967 = vpop.f32.mrb[0].mxu0
    %v2968 = vadd.f32 %v713, %v2967
    %v2969 = vpop.f32.mrb[0].mxu0
    %v2970 = vadd.f32 %v717, %v2969
    %v2971 = vpop.f32.mrb[0].mxu0
    %v2972 = vadd.f32 %v713, %v2971
    %v2973 = vpop.f32.mrb[0].mxu0
    %v2974 = vadd.f32 %v717, %v2973
    %2975 = vdwg.mxu0
    %2976 = vmatprep.subr.bf16.mxu0 %v939
    %2977 = vmatpush1.bf16.msra.mxu0 %v938
    %2978 = vmatprep.subr.bf16.mxu0 %v947
    %2979 = vmatpush1.bf16.msra.mxu0 %v946
    %2980 = vmatprep.subr.bf16.mxu0 %v955
    %2981 = vmatpush1.bf16.msra.mxu0 %v954
    %2982 = vmatprep.subr.bf16.mxu0 %v963
    %2983 = vmatpush1.bf16.msra.mxu0 %v962
    %2984 = vmatprep.subr.bf16.mxu0 %v971
    %2985 = vmatpush1.bf16.msra.mxu0 %v970
    %2986 = vmatprep.subr.bf16.mxu0 %v979
    %2987 = vmatpush1.bf16.msra.mxu0 %v978
    %2988 = vmatprep.subr.bf16.mxu0 %v987
    %2989 = vmatpush1.bf16.msra.mxu0 %v986
    %2990 = vmatprep.subr.bf16.mxu0 %v995
    %2991 = vmatpush1.bf16.msra.mxu0 %v994
    %2992 = vmatprep.subr.bf16.mxu0 0
    %2993 = vmatpush1.bf16.msra.mxu0 0
    %2994 = vmatprep.subr.bf16.mxu0 0
    %2995 = vmatpush1.bf16.msra.mxu0 0
    %2996 = vmatprep.subr.bf16.mxu0 0
    %2997 = vmatpush1.bf16.msra.mxu0 0
    %2998 = vmatprep.subr.bf16.mxu0 0
    %2999 = vmatpush1.bf16.msra.mxu0 0
    %3000 = vmatprep.subr.bf16.mxu0 0
    %3001 = vmatpush1.bf16.msra.mxu0 0
    %3002 = vmatprep.subr.bf16.mxu0 0
    %3003 = vmatpush1.bf16.msra.mxu0 0
    %3004 = vmatprep.subr.bf16.mxu0 0
    %3005 = vmatpush1.bf16.msra.mxu0 0
    %3006 = vmatprep.subr.bf16.mxu0 0
    %3007 = vmatpush1.bf16.msra.mxu0 0
    %3008 = vmatprep.mubr.bf16.mxu0 0
    %3009 = vmatmul.mubr.bf16.gmra.mrb[0].mxu0 %v634
    %v3010 = vpop.f32.mrb[0].mxu0
    %v3011 = vadd.f32 %v721, %v3010
    %v3012 = vpop.f32.mrb[0].mxu0
    %v3013 = vadd.f32 %v725, %v3012
    %v3014 = vpop.f32.mrb[0].mxu0
    %v3015 = vadd.f32 %v721, %v3014
    %v3016 = vpop.f32.mrb[0].mxu0
    %v3017 = vadd.f32 %v725, %v3016
    %3018 = vdwg.mxu0
    %3019 = vmatprep.subr.bf16.mxu0 %v941
    %3020 = vmatpush1.bf16.msra.mxu0 %v940
    %3021 = vmatprep.subr.bf16.mxu0 %v949
    %3022 = vmatpush1.bf16.msra.mxu0 %v948
    %3023 = vmatprep.subr.bf16.mxu0 %v957
    %3024 = vmatpush1.bf16.msra.mxu0 %v956
    %3025 = vmatprep.subr.bf16.mxu0 %v965
    %3026 = vmatpush1.bf16.msra.mxu0 %v964
    %3027 = vmatprep.subr.bf16.mxu0 %v973
    %3028 = vmatpush1.bf16.msra.mxu0 %v972
    %3029 = vmatprep.subr.bf16.mxu0 %v981
    %3030 = vmatpush1.bf16.msra.mxu0 %v980
    %3031 = vmatprep.subr.bf16.mxu0 %v989
    %3032 = vmatpush1.bf16.msra.mxu0 %v988
    %3033 = vmatprep.subr.bf16.mxu0 %v997
    %3034 = vmatpush1.bf16.msra.mxu0 %v996
    %3035 = vmatprep.subr.bf16.mxu0 0
    %3036 = vmatpush1.bf16.msra.mxu0 0
    %3037 = vmatprep.subr.bf16.mxu0 0
    %3038 = vmatpush1.bf16.msra.mxu0 0
    %3039 = vmatprep.subr.bf16.mxu0 0
    %3040 = vmatpush1.bf16.msra.mxu0 0
    %3041 = vmatprep.subr.bf16.mxu0 0
    %3042 = vmatpush1.bf16.msra.mxu0 0
    %3043 = vmatprep.subr.bf16.mxu0 0
    %3044 = vmatpush1.bf16.msra.mxu0 0
    %3045 = vmatprep.subr.bf16.mxu0 0
    %3046 = vmatpush1.bf16.msra.mxu0 0
    %3047 = vmatprep.subr.bf16.mxu0 0
    %3048 = vmatpush1.bf16.msra.mxu0 0
    %3049 = vmatprep.subr.bf16.mxu0 0
    %3050 = vmatpush1.bf16.msra.mxu0 0
    %3051 = vmatprep.mubr.bf16.mxu0 0
    %3052 = vmatmul.mubr.bf16.gmra.mrb[0].mxu0 %v634
    %v3053 = vpop.f32.mrb[0].mxu0
    %v3054 = vadd.f32 %v729, %v3053
    %v3055 = vpop.f32.mrb[0].mxu0
    %v3056 = vadd.f32 %v733, %v3055
    %v3057 = vpop.f32.mrb[0].mxu0
    %v3058 = vadd.f32 %v729, %v3057
    %v3059 = vpop.f32.mrb[0].mxu0
    %v3060 = vadd.f32 %v733, %v3059
    %3061 = vdwg.mxu0
    %v3062 = vmax.f32 %v2925, 0.0
    %v3063 = vmax.f32 %v2927, 0.0
    %v3064 = vmax.f32 %v2968, 0.0
    %v3065 = vmax.f32 %v2970, 0.0
    %v3066 = vmax.f32 %v3011, 0.0
    %v3067 = vmax.f32 %v3013, 0.0
    %v3068 = vmax.f32 %v3054, 0.0
    %v3069 = vmax.f32 %v3056, 0.0
    %v3070 = vmax.f32 %v2929, 0.0
    %v3071 = vmax.f32 %v2931, 0.0
    %v3072 = vmax.f32 %v2972, 0.0
    %v3073 = vmax.f32 %v2974, 0.0
    %v3074 = vmax.f32 %v3015, 0.0
    %v3075 = vmax.f32 %v3017, 0.0
    %v3076 = vmax.f32 %v3058, 0.0
    %v3077 = vmax.f32 %v3060, 0.0
    %v3078 = vpack.c.bf16 %v3070, %v3062
    %v3079 = vpack.c.bf16 %v3071, %v3063
    %v3080 = vpack.c.bf16 %v3072, %v3064
    %v3081 = vpack.c.bf16 %v3073, %v3065
    %v3082 = vpack.c.bf16 %v3074, %v3066
    %v3083 = vpack.c.bf16 %v3075, %v3067
    %v3084 = vpack.c.bf16 %v3076, %v3068
    %v3085 = vpack.c.bf16 %v3077, %v3069
    %v3086 = vmax.bf16 %v2882, %v3078
    %v3087 = vmax.bf16 %v2883, %v3079
    %v3088 = vmax.bf16 %v2884, %v3080
    %v3089 = vmax.bf16 %v2885, %v3081
    %v3090 = vmax.bf16 %v2886, %v3082
    %v3091 = vmax.bf16 %v2887, %v3083
    %v3092 = vmax.bf16 %v2888, %v3084
    %v3093 = vmax.bf16 %v2889, %v3085
    %3094 = vmatprep.subr.bf16.mxu0 %v935
    %3095 = vmatpush1.bf16.msra.mxu0 %v934
    %3096 = vmatprep.subr.bf16.mxu0 %v943
    %3097 = vmatpush1.bf16.msra.mxu0 %v942
    %3098 = vmatprep.subr.bf16.mxu0 %v951
    %3099 = vmatpush1.bf16.msra.mxu0 %v950
    %3100 = vmatprep.subr.bf16.mxu0 %v959
    %3101 = vmatpush1.bf16.msra.mxu0 %v958
    %3102 = vmatprep.subr.bf16.mxu0 %v967
    %3103 = vmatpush1.bf16.msra.mxu0 %v966
    %3104 = vmatprep.subr.bf16.mxu0 %v975
    %3105 = vmatpush1.bf16.msra.mxu0 %v974
    %3106 = vmatprep.subr.bf16.mxu0 %v983
    %3107 = vmatpush1.bf16.msra.mxu0 %v982
    %3108 = vmatprep.subr.bf16.mxu0 %v991
    %3109 = vmatpush1.bf16.msra.mxu0 %v990
    %3110 = vmatprep.subr.bf16.mxu0 0
    %3111 = vmatpush1.bf16.msra.mxu0 0
    %3112 = vmatprep.subr.bf16.mxu0 0
    %3113 = vmatpush1.bf16.msra.mxu0 0
    %3114 = vmatprep.subr.bf16.mxu0 0
    %3115 = vmatpush1.bf16.msra.mxu0 0
    %3116 = vmatprep.subr.bf16.mxu0 0
    %3117 = vmatpush1.bf16.msra.mxu0 0
    %3118 = vmatprep.subr.bf16.mxu0 0
    %3119 = vmatpush1.bf16.msra.mxu0 0
    %3120 = vmatprep.subr.bf16.mxu0 0
    %3121 = vmatpush1.bf16.msra.mxu0 0
    %3122 = vmatprep.subr.bf16.mxu0 0
    %3123 = vmatpush1.bf16.msra.mxu0 0
    %3124 = vmatprep.subr.bf16.mxu0 0
    %3125 = vmatpush1.bf16.msra.mxu0 0
    %3126 = vmatprep.mubr.bf16.mxu0 0
    %3127 = vmatmul.mubr.bf16.gmra.mrb[0].mxu0 %v635
    %v3128 = vpop.f32.mrb[0].mxu0
    %v3129 = vadd.f32 %v705, %v3128
    %v3130 = vpop.f32.mrb[0].mxu0
    %v3131 = vadd.f32 %v709, %v3130
    %v3132 = vpop.f32.mrb[0].mxu0
    %v3133 = vadd.f32 %v705, %v3132
    %v3134 = vpop.f32.mrb[0].mxu0
    %v3135 = vadd.f32 %v709, %v3134
    %3136 = vdwg.mxu0
    %3137 = vmatprep.subr.bf16.mxu0 %v937
    %3138 = vmatpush1.bf16.msra.mxu0 %v936
    %3139 = vmatprep.subr.bf16.mxu0 %v945
    %3140 = vmatpush1.bf16.msra.mxu0 %v944
    %3141 = vmatprep.subr.bf16.mxu0 %v953
    %3142 = vmatpush1.bf16.msra.mxu0 %v952
    %3143 = vmatprep.subr.bf16.mxu0 %v961
    %3144 = vmatpush1.bf16.msra.mxu0 %v960
    %3145 = vmatprep.subr.bf16.mxu0 %v969
    %3146 = vmatpush1.bf16.msra.mxu0 %v968
    %3147 = vmatprep.subr.bf16.mxu0 %v977
    %3148 = vmatpush1.bf16.msra.mxu0 %v976
    %3149 = vmatprep.subr.bf16.mxu0 %v985
    %3150 = vmatpush1.bf16.msra.mxu0 %v984
    %3151 = vmatprep.subr.bf16.mxu0 %v993
    %3152 = vmatpush1.bf16.msra.mxu0 %v992
    %3153 = vmatprep.subr.bf16.mxu0 0
    %3154 = vmatpush1.bf16.msra.mxu0 0
    %3155 = vmatprep.subr.bf16.mxu0 0
    %3156 = vmatpush1.bf16.msra.mxu0 0
    %3157 = vmatprep.subr.bf16.mxu0 0
    %3158 = vmatpush1.bf16.msra.mxu0 0
    %3159 = vmatprep.subr.bf16.mxu0 0
    %3160 = vmatpush1.bf16.msra.mxu0 0
    %3161 = vmatprep.subr.bf16.mxu0 0
    %3162 = vmatpush1.bf16.msra.mxu0 0
    %3163 = vmatprep.subr.bf16.mxu0 0
    %3164 = vmatpush1.bf16.msra.mxu0 0
    %3165 = vmatprep.subr.bf16.mxu0 0
    %3166 = vmatpush1.bf16.msra.mxu0 0
    %3167 = vmatprep.subr.bf16.mxu0 0
    %3168 = vmatpush1.bf16.msra.mxu0 0
    %3169 = vmatprep.mubr.bf16.mxu0 0
    %3170 = vmatmul.mubr.bf16.gmra.mrb[0].mxu0 %v635
    %v3171 = vpop.f32.mrb[0].mxu0
    %v3172 = vadd.f32 %v713, %v3171
    %v3173 = vpop.f32.mrb[0].mxu0
    %v3174 = vadd.f32 %v717, %v3173
    %v3175 = vpop.f32.mrb[0].mxu0
    %v3176 = vadd.f32 %v713, %v3175
    %v3177 = vpop.f32.mrb[0].mxu0
    %v3178 = vadd.f32 %v717, %v3177
    %3179 = vdwg.mxu0
    %3180 = vmatprep.subr.bf16.mxu0 %v939
    %3181 = vmatpush1.bf16.msra.mxu0 %v938
    %3182 = vmatprep.subr.bf16.mxu0 %v947
    %3183 = vmatpush1.bf16.msra.mxu0 %v946
    %3184 = vmatprep.subr.bf16.mxu0 %v955
    %3185 = vmatpush1.bf16.msra.mxu0 %v954
    %3186 = vmatprep.subr.bf16.mxu0 %v963
    %3187 = vmatpush1.bf16.msra.mxu0 %v962
    %3188 = vmatprep.subr.bf16.mxu0 %v971
    %3189 = vmatpush1.bf16.msra.mxu0 %v970
    %3190 = vmatprep.subr.bf16.mxu0 %v979
    %3191 = vmatpush1.bf16.msra.mxu0 %v978
    %3192 = vmatprep.subr.bf16.mxu0 %v987
    %3193 = vmatpush1.bf16.msra.mxu0 %v986
    %3194 = vmatprep.subr.bf16.mxu0 %v995
    %3195 = vmatpush1.bf16.msra.mxu0 %v994
    %3196 = vmatprep.subr.bf16.mxu0 0
    %3197 = vmatpush1.bf16.msra.mxu0 0
    %3198 = vmatprep.subr.bf16.mxu0 0
    %3199 = vmatpush1.bf16.msra.mxu0 0
    %3200 = vmatprep.subr.bf16.mxu0 0
    %3201 = vmatpush1.bf16.msra.mxu0 0
    %3202 = vmatprep.subr.bf16.mxu0 0
    %3203 = vmatpush1.bf16.msra.mxu0 0
    %3204 = vmatprep.subr.bf16.mxu0 0
    %3205 = vmatpush1.bf16.msra.mxu0 0
    %3206 = vmatprep.subr.bf16.mxu0 0
    %3207 = vmatpush1.bf16.msra.mxu0 0
    %3208 = vmatprep.subr.bf16.mxu0 0
    %3209 = vmatpush1.bf16.msra.mxu0 0
    %3210 = vmatprep.subr.bf16.mxu0 0
    %3211 = vmatpush1.bf16.msra.mxu0 0
    %3212 = vmatprep.mubr.bf16.mxu0 0
    %3213 = vmatmul.mubr.bf16.gmra.mrb[0].mxu0 %v635
    %v3214 = vpop.f32.mrb[0].mxu0
    %v3215 = vadd.f32 %v721, %v3214
    %v3216 = vpop.f32.mrb[0].mxu0
    %v3217 = vadd.f32 %v725, %v3216
    %v3218 = vpop.f32.mrb[0].mxu0
    %v3219 = vadd.f32 %v721, %v3218
    %v3220 = vpop.f32.mrb[0].mxu0
    %v3221 = vadd.f32 %v725, %v3220
    %3222 = vdwg.mxu0
    %3223 = vmatprep.subr.bf16.mxu0 %v941
    %3224 = vmatpush1.bf16.msra.mxu0 %v940
    %3225 = vmatprep.subr.bf16.mxu0 %v949
    %3226 = vmatpush1.bf16.msra.mxu0 %v948
    %3227 = vmatprep.subr.bf16.mxu0 %v957
    %3228 = vmatpush1.bf16.msra.mxu0 %v956
    %3229 = vmatprep.subr.bf16.mxu0 %v965
    %3230 = vmatpush1.bf16.msra.mxu0 %v964
    %3231 = vmatprep.subr.bf16.mxu0 %v973
    %3232 = vmatpush1.bf16.msra.mxu0 %v972
    %3233 = vmatprep.subr.bf16.mxu0 %v981
    %3234 = vmatpush1.bf16.msra.mxu0 %v980
    %3235 = vmatprep.subr.bf16.mxu0 %v989
    %3236 = vmatpush1.bf16.msra.mxu0 %v988
    %3237 = vmatprep.subr.bf16.mxu0 %v997
    %3238 = vmatpush1.bf16.msra.mxu0 %v996
    %3239 = vmatprep.subr.bf16.mxu0 0
    %3240 = vmatpush1.bf16.msra.mxu0 0
    %3241 = vmatprep.subr.bf16.mxu0 0
    %3242 = vmatpush1.bf16.msra.mxu0 0
    %3243 = vmatprep.subr.bf16.mxu0 0
    %3244 = vmatpush1.bf16.msra.mxu0 0
    %3245 = vmatprep.subr.bf16.mxu0 0
    %3246 = vmatpush1.bf16.msra.mxu0 0
    %3247 = vmatprep.subr.bf16.mxu0 0
    %3248 = vmatpush1.bf16.msra.mxu0 0
    %3249 = vmatprep.subr.bf16.mxu0 0
    %3250 = vmatpush1.bf16.msra.mxu0 0
    %3251 = vmatprep.subr.bf16.mxu0 0
    %3252 = vmatpush1.bf16.msra.mxu0 0
    %3253 = vmatprep.subr.bf16.mxu0 0
    %3254 = vmatpush1.bf16.msra.mxu0 0
    %3255 = vmatprep.mubr.bf16.mxu0 0
    %3256 = vmatmul.mubr.bf16.gmra.mrb[0].mxu0 %v635
    %v3257 = vpop.f32.mrb[0].mxu0
    %v3258 = vadd.f32 %v729, %v3257
    %v3259 = vpop.f32.mrb[0].mxu0
    %v3260 = vadd.f32 %v733, %v3259
    %v3261 = vpop.f32.mrb[0].mxu0
    %v3262 = vadd.f32 %v729, %v3261
    %v3263 = vpop.f32.mrb[0].mxu0
    %v3264 = vadd.f32 %v733, %v3263
    %3265 = vdwg.mxu0
    %v3266 = vmax.f32 %v3129, 0.0
    %v3267 = vmax.f32 %v3131, 0.0
    %v3268 = vmax.f32 %v3172, 0.0
    %v3269 = vmax.f32 %v3174, 0.0
    %v3270 = vmax.f32 %v3215, 0.0
    %v3271 = vmax.f32 %v3217, 0.0
    %v3272 = vmax.f32 %v3258, 0.0
    %v3273 = vmax.f32 %v3260, 0.0
    %v3274 = vmax.f32 %v3133, 0.0
    %v3275 = vmax.f32 %v3135, 0.0
    %v3276 = vmax.f32 %v3176, 0.0
    %v3277 = vmax.f32 %v3178, 0.0
    %v3278 = vmax.f32 %v3219, 0.0
    %v3279 = vmax.f32 %v3221, 0.0
    %v3280 = vmax.f32 %v3262, 0.0
    %v3281 = vmax.f32 %v3264, 0.0
    %v3282 = vpack.c.bf16 %v3274, %v3266
    %v3283 = vpack.c.bf16 %v3275, %v3267
    %v3284 = vpack.c.bf16 %v3276, %v3268
    %v3285 = vpack.c.bf16 %v3277, %v3269
    %v3286 = vpack.c.bf16 %v3278, %v3270
    %v3287 = vpack.c.bf16 %v3279, %v3271
    %v3288 = vpack.c.bf16 %v3280, %v3272
    %v3289 = vpack.c.bf16 %v3281, %v3273
    %v3290 = vmax.bf16 %v3086, %v3282
    %v3291 = vmax.bf16 %v3087, %v3283
    %v3292 = vmax.bf16 %v3088, %v3284
    %v3293 = vmax.bf16 %v3089, %v3285
    %v3294 = vmax.bf16 %v3090, %v3286
    %v3295 = vmax.bf16 %v3091, %v3287
    %v3296 = vmax.bf16 %v3092, %v3288
    %v3297 = vmax.bf16 %v3093, %v3289
    %v3298 = vld [vmem:[%s7] sm:$0xf]
    %v3299 = vld [vmem:[%s7 + $0x4] sm:$0xf]
    %v3300 = vld [vmem:[%s7 + $0x8] sm:$0xf]
    %v3301 = vld [vmem:[%s7 + $0xc] sm:$0xf]
    %v3302 = vld [vmem:[%s7 + $0x10] sm:$0xf]
    %v3303 = vld [vmem:[%s7 + $0x14] sm:$0xf]
    %v3304 = vld [vmem:[%s7 + $0x18] sm:$0xf]
    %v3305 = vld [vmem:[%s7 + $0x1c] sm:$0xf]
    %v3306 = vld [vmem:[%s7 + $0x20] sm:$0xf]
    %v3307 = vld [vmem:[%s7 + $0x24] sm:$0xf]
    %v3308 = vld [vmem:[%s7 + $0x28] sm:$0xf]
    %v3309 = vld [vmem:[%s7 + $0x2c] sm:$0xf]
    %v3310 = vld [vmem:[%s7 + $0x30] sm:$0xf]
    %v3311 = vld [vmem:[%s7 + $0x34] sm:$0xf]
    %v3312 = vld [vmem:[%s7 + $0x38] sm:$0xf]
    %v3313 = vld [vmem:[%s7 + $0x3c] sm:$0xf]
    %v3314 = vld [vmem:[%s7 + $0x40] sm:$0xf]
    %v3315 = vld [vmem:[%s7 + $0x44] sm:$0xf]
    %v3316 = vld [vmem:[%s7 + $0x48] sm:$0xf]
    %v3317 = vld [vmem:[%s7 + $0x4c] sm:$0xf]
    %v3318 = vld [vmem:[%s7 + $0x50] sm:$0xf]
    %v3319 = vld [vmem:[%s7 + $0x54] sm:$0xf]
    %v3320 = vld [vmem:[%s7 + $0x58] sm:$0xf]
    %v3321 = vld [vmem:[%s7 + $0x5c] sm:$0xf]
    %v3322 = vld [vmem:[%s7 + $0x60] sm:$0xf]
    %v3323 = vld [vmem:[%s7 + $0x64] sm:$0xf]
    %v3324 = vld [vmem:[%s7 + $0x68] sm:$0xf]
    %v3325 = vld [vmem:[%s7 + $0x6c] sm:$0xf]
    %v3326 = vld [vmem:[%s7 + $0x70] sm:$0xf]
    %v3327 = vld [vmem:[%s7 + $0x74] sm:$0xf]
    %v3328 = vld [vmem:[%s7 + $0x78] sm:$0xf]
    %v3329 = vld [vmem:[%s7 + $0x7c] sm:$0xf]
    %v3330 = vld [vmem:[%s7 + $0x80] sm:$0xf]
    %v3331 = vld [vmem:[%s7 + $0x84] sm:$0xf]
    %v3332 = vld [vmem:[%s7 + $0x88] sm:$0xf]
    %v3333 = vld [vmem:[%s7 + $0x8c] sm:$0xf]
    %v3334 = vld [vmem:[%s7 + $0x90] sm:$0xf]
    %v3335 = vld [vmem:[%s7 + $0x94] sm:$0xf]
    %v3336 = vld [vmem:[%s7 + $0x98] sm:$0xf]
    %v3337 = vld [vmem:[%s7 + $0x9c] sm:$0xf]
    %v3338 = vld [vmem:[%s7 + $0xa0] sm:$0xf]
    %v3339 = vld [vmem:[%s7 + $0xa4] sm:$0xf]
    %v3340 = vld [vmem:[%s7 + $0xa8] sm:$0xf]
    %v3341 = vld [vmem:[%s7 + $0xac] sm:$0xf]
    %v3342 = vld [vmem:[%s7 + $0xb0] sm:$0xf]
    %v3343 = vld [vmem:[%s7 + $0xb4] sm:$0xf]
    %v3344 = vld [vmem:[%s7 + $0xb8] sm:$0xf]
    %v3345 = vld [vmem:[%s7 + $0xbc] sm:$0xf]
    %v3346 = vld [vmem:[%s7 + $0xc0] sm:$0xf]
    %v3347 = vld [vmem:[%s7 + $0xc4] sm:$0xf]
    %v3348 = vld [vmem:[%s7 + $0xc8] sm:$0xf]
    %v3349 = vld [vmem:[%s7 + $0xcc] sm:$0xf]
    %v3350 = vld [vmem:[%s7 + $0xd0] sm:$0xf]
    %v3351 = vld [vmem:[%s7 + $0xd4] sm:$0xf]
    %v3352 = vld [vmem:[%s7 + $0xd8] sm:$0xf]
    %v3353 = vld [vmem:[%s7 + $0xdc] sm:$0xf]
    %v3354 = vld [vmem:[%s7 + $0xe0] sm:$0xf]
    %v3355 = vld [vmem:[%s7 + $0xe4] sm:$0xf]
    %v3356 = vld [vmem:[%s7 + $0xe8] sm:$0xf]
    %v3357 = vld [vmem:[%s7 + $0xec] sm:$0xf]
    %v3358 = vld [vmem:[%s7 + $0xf0] sm:$0xf]
    %v3359 = vld [vmem:[%s7 + $0xf4] sm:$0xf]
    %v3360 = vld [vmem:[%s7 + $0xf8] sm:$0xf]
    %v3361 = vld [vmem:[%s7 + $0xfc] sm:$0xf]
    %v3362 = vld [vmem:[%s7 + $0x100] sm:$0xf]
    %v3363 = vld [vmem:[%s7 + $0x104] sm:$0xf]
    %v3364 = vld [vmem:[%s7 + $0x108] sm:$0xf]
    %v3365 = vld [vmem:[%s7 + $0x10c] sm:$0xf]
    %v3366 = vld [vmem:[%s7 + $0x110] sm:$0xf]
    %v3367 = vld [vmem:[%s7 + $0x114] sm:$0xf]
    %v3368 = vld [vmem:[%s7 + $0x118] sm:$0xf]
    %v3369 = vld [vmem:[%s7 + $0x11c] sm:$0xf]
    %v3370 = vld [vmem:[%s7 + $0x120] sm:$0xf]
    %v3371 = vld [vmem:[%s7 + $0x124] sm:$0xf]
    %v3372 = vld [vmem:[%s7 + $0x128] sm:$0xf]
    %v3373 = vld [vmem:[%s7 + $0x12c] sm:$0xf]
    %v3374 = vld [vmem:[%s7 + $0x130] sm:$0xf]
    %v3375 = vld [vmem:[%s7 + $0x134] sm:$0xf]
    %v3376 = vld [vmem:[%s7 + $0x138] sm:$0xf]
    %v3377 = vld [vmem:[%s7 + $0x13c] sm:$0xf]
    %v3378 = vld [vmem:[%s7 + $0x140] sm:$0xf]
    %v3379 = vld [vmem:[%s7 + $0x144] sm:$0xf]
    %v3380 = vld [vmem:[%s7 + $0x148] sm:$0xf]
    %v3381 = vld [vmem:[%s7 + $0x14c] sm:$0xf]
    %v3382 = vld [vmem:[%s7 + $0x150] sm:$0xf]
    %v3383 = vld [vmem:[%s7 + $0x154] sm:$0xf]
    %v3384 = vld [vmem:[%s7 + $0x158] sm:$0xf]
    %v3385 = vld [vmem:[%s7 + $0x15c] sm:$0xf]
    %v3386 = vld [vmem:[%s7 + $0x160] sm:$0xf]
    %v3387 = vld [vmem:[%s7 + $0x164] sm:$0xf]
    %v3388 = vld [vmem:[%s7 + $0x168] sm:$0xf]
    %v3389 = vld [vmem:[%s7 + $0x16c] sm:$0xf]
    %v3390 = vld [vmem:[%s7 + $0x170] sm:$0xf]
    %v3391 = vld [vmem:[%s7 + $0x174] sm:$0xf]
    %v3392 = vld [vmem:[%s7 + $0x178] sm:$0xf]
    %v3393 = vld [vmem:[%s7 + $0x17c] sm:$0xf]
    %v3394 = vld [vmem:[%s7 + $0x180] sm:$0xf]
    %v3395 = vld [vmem:[%s7 + $0x184] sm:$0xf]
    %v3396 = vld [vmem:[%s7 + $0x188] sm:$0xf]
    %v3397 = vld [vmem:[%s7 + $0x18c] sm:$0xf]
    %v3398 = vld [vmem:[%s7 + $0x190] sm:$0xf]
    %v3399 = vld [vmem:[%s7 + $0x194] sm:$0xf]
    %v3400 = vld [vmem:[%s7 + $0x198] sm:$0xf]
    %v3401 = vld [vmem:[%s7 + $0x19c] sm:$0xf]
    %v3402 = vld [vmem:[%s7 + $0x1a0] sm:$0xf]
    %v3403 = vld [vmem:[%s7 + $0x1a4] sm:$0xf]
    %v3404 = vld [vmem:[%s7 + $0x1a8] sm:$0xf]
    %v3405 = vld [vmem:[%s7 + $0x1ac] sm:$0xf]
    %v3406 = vld [vmem:[%s7 + $0x1b0] sm:$0xf]
    %v3407 = vld [vmem:[%s7 + $0x1b4] sm:$0xf]
    %v3408 = vld [vmem:[%s7 + $0x1b8] sm:$0xf]
    %v3409 = vld [vmem:[%s7 + $0x1bc] sm:$0xf]
    %v3410 = vld [vmem:[%s7 + $0x1c0] sm:$0xf]
    %v3411 = vld [vmem:[%s7 + $0x1c4] sm:$0xf]
    %v3412 = vld [vmem:[%s7 + $0x1c8] sm:$0xf]
    %v3413 = vld [vmem:[%s7 + $0x1cc] sm:$0xf]
    %v3414 = vld [vmem:[%s7 + $0x1d0] sm:$0xf]
    %v3415 = vld [vmem:[%s7 + $0x1d4] sm:$0xf]
    %v3416 = vld [vmem:[%s7 + $0x1d8] sm:$0xf]
    %v3417 = vld [vmem:[%s7 + $0x1dc] sm:$0xf]
    %v3418 = vld [vmem:[%s7 + $0x1e0] sm:$0xf]
    %v3419 = vld [vmem:[%s7 + $0x1e4] sm:$0xf]
    %v3420 = vld [vmem:[%s7 + $0x1e8] sm:$0xf]
    %v3421 = vld [vmem:[%s7 + $0x1ec] sm:$0xf]
    %v3422 = vld [vmem:[%s7 + $0x1f0] sm:$0xf]
    %v3423 = vld [vmem:[%s7 + $0x1f4] sm:$0xf]
    %v3424 = vld [vmem:[%s7 + $0x1f8] sm:$0xf]
    %v3425 = vld [vmem:[%s7 + $0x1fc] sm:$0xf]
    %v3426 = vld [vmem:[%s8] sm:$0x1]
    %v3428 = vlaneseq
    %v3429 = vshrl.u32 %v3428, 7
    %v3430 = vsub.s32 0, %v3429
    %v3431 = vrot.slane %v3426, %v3430
    %v3561 = vunpack.c.l.b16 %v3298
    %v3562 = vunpack.c.l.b16 %v3299
    %v3563 = vunpack.c.l.b16 %v3300
    %v3564 = vunpack.c.l.b16 %v3301
    %v3565 = vunpack.c.l.b16 %v3302
    %v3566 = vunpack.c.l.b16 %v3303
    %v3567 = vunpack.c.l.b16 %v3304
    %v3568 = vunpack.c.l.b16 %v3305
    %v3569 = vunpack.c.l.b16 %v3306
    %v3570 = vunpack.c.l.b16 %v3307
    %v3571 = vunpack.c.l.b16 %v3308
    %v3572 = vunpack.c.l.b16 %v3309
    %v3573 = vunpack.c.l.b16 %v3310
    %v3574 = vunpack.c.l.b16 %v3311
    %v3575 = vunpack.c.l.b16 %v3312
    %v3576 = vunpack.c.l.b16 %v3313
    %v3577 = vunpack.c.l.b16 %v3314
    %v3578 = vunpack.c.l.b16 %v3315
    %v3579 = vunpack.c.l.b16 %v3316
    %v3580 = vunpack.c.l.b16 %v3317
    %v3581 = vunpack.c.l.b16 %v3318
    %v3582 = vunpack.c.l.b16 %v3319
    %v3583 = vunpack.c.l.b16 %v3320
    %v3584 = vunpack.c.l.b16 %v3321
    %v3585 = vunpack.c.l.b16 %v3322
    %v3586 = vunpack.c.l.b16 %v3323
    %v3587 = vunpack.c.l.b16 %v3324
    %v3588 = vunpack.c.l.b16 %v3325
    %v3589 = vunpack.c.l.b16 %v3326
    %v3590 = vunpack.c.l.b16 %v3327
    %v3591 = vunpack.c.l.b16 %v3328
    %v3592 = vunpack.c.l.b16 %v3329
    %v3593 = vunpack.c.l.b16 %v3330
    %v3594 = vunpack.c.l.b16 %v3331
    %v3595 = vunpack.c.l.b16 %v3332
    %v3596 = vunpack.c.l.b16 %v3333
    %v3597 = vunpack.c.l.b16 %v3334
    %v3598 = vunpack.c.l.b16 %v3335
    %v3599 = vunpack.c.l.b16 %v3336
    %v3600 = vunpack.c.l.b16 %v3337
    %v3601 = vunpack.c.l.b16 %v3338
    %v3602 = vunpack.c.l.b16 %v3339
    %v3603 = vunpack.c.l.b16 %v3340
    %v3604 = vunpack.c.l.b16 %v3341
    %v3605 = vunpack.c.l.b16 %v3342
    %v3606 = vunpack.c.l.b16 %v3343
    %v3607 = vunpack.c.l.b16 %v3344
    %v3608 = vunpack.c.l.b16 %v3345
    %v3609 = vunpack.c.l.b16 %v3346
    %v3610 = vunpack.c.l.b16 %v3347
    %v3611 = vunpack.c.l.b16 %v3348
    %v3612 = vunpack.c.l.b16 %v3349
    %v3613 = vunpack.c.l.b16 %v3350
    %v3614 = vunpack.c.l.b16 %v3351
    %v3615 = vunpack.c.l.b16 %v3352
    %v3616 = vunpack.c.l.b16 %v3353
    %v3617 = vunpack.c.l.b16 %v3354
    %v3618 = vunpack.c.l.b16 %v3355
    %v3619 = vunpack.c.l.b16 %v3356
    %v3620 = vunpack.c.l.b16 %v3357
    %v3621 = vunpack.c.l.b16 %v3358
    %v3622 = vunpack.c.l.b16 %v3359
    %v3623 = vunpack.c.l.b16 %v3360
    %v3624 = vunpack.c.l.b16 %v3361
    %v3625 = vunpack.c.l.b16 %v3362
    %v3626 = vunpack.c.l.b16 %v3363
    %v3627 = vunpack.c.l.b16 %v3364
    %v3628 = vunpack.c.l.b16 %v3365
    %v3629 = vunpack.c.l.b16 %v3366
    %v3630 = vunpack.c.l.b16 %v3367
    %v3631 = vunpack.c.l.b16 %v3368
    %v3632 = vunpack.c.l.b16 %v3369
    %v3633 = vunpack.c.l.b16 %v3370
    %v3634 = vunpack.c.l.b16 %v3371
    %v3635 = vunpack.c.l.b16 %v3372
    %v3636 = vunpack.c.l.b16 %v3373
    %v3637 = vunpack.c.l.b16 %v3374
    %v3638 = vunpack.c.l.b16 %v3375
    %v3639 = vunpack.c.l.b16 %v3376
    %v3640 = vunpack.c.l.b16 %v3377
    %v3641 = vunpack.c.l.b16 %v3378
    %v3642 = vunpack.c.l.b16 %v3379
    %v3643 = vunpack.c.l.b16 %v3380
    %v3644 = vunpack.c.l.b16 %v3381
    %v3645 = vunpack.c.l.b16 %v3382
    %v3646 = vunpack.c.l.b16 %v3383
    %v3647 = vunpack.c.l.b16 %v3384
    %v3648 = vunpack.c.l.b16 %v3385
    %v3649 = vunpack.c.l.b16 %v3386
    %v3650 = vunpack.c.l.b16 %v3387
    %v3651 = vunpack.c.l.b16 %v3388
    %v3652 = vunpack.c.l.b16 %v3389
    %v3653 = vunpack.c.l.b16 %v3390
    %v3654 = vunpack.c.l.b16 %v3391
    %v3655 = vunpack.c.l.b16 %v3392
    %v3656 = vunpack.c.l.b16 %v3393
    %v3657 = vunpack.c.l.b16 %v3394
    %v3658 = vunpack.c.l.b16 %v3395
    %v3659 = vunpack.c.l.b16 %v3396
    %v3660 = vunpack.c.l.b16 %v3397
    %v3661 = vunpack.c.l.b16 %v3398
    %v3662 = vunpack.c.l.b16 %v3399
    %v3663 = vunpack.c.l.b16 %v3400
    %v3664 = vunpack.c.l.b16 %v3401
    %v3665 = vunpack.c.l.b16 %v3402
    %v3666 = vunpack.c.l.b16 %v3403
    %v3667 = vunpack.c.l.b16 %v3404
    %v3668 = vunpack.c.l.b16 %v3405
    %v3669 = vunpack.c.l.b16 %v3406
    %v3670 = vunpack.c.l.b16 %v3407
    %v3671 = vunpack.c.l.b16 %v3408
    %v3672 = vunpack.c.l.b16 %v3409
    %v3673 = vunpack.c.l.b16 %v3410
    %v3674 = vunpack.c.l.b16 %v3411
    %v3675 = vunpack.c.l.b16 %v3412
    %v3676 = vunpack.c.l.b16 %v3413
    %v3677 = vunpack.c.l.b16 %v3414
    %v3678 = vunpack.c.l.b16 %v3415
    %v3679 = vunpack.c.l.b16 %v3416
    %v3680 = vunpack.c.l.b16 %v3417
    %v3681 = vunpack.c.l.b16 %v3418
    %v3682 = vunpack.c.l.b16 %v3419
    %v3683 = vunpack.c.l.b16 %v3420
    %v3684 = vunpack.c.l.b16 %v3421
    %v3685 = vunpack.c.l.b16 %v3422
    %v3686 = vunpack.c.l.b16 %v3423
    %v3687 = vunpack.c.l.b16 %v3424
    %v3688 = vunpack.c.l.b16 %v3425
    %v3689 = vpack.c.b16 %v3562, %v3561
    %v3690 = vpack.c.b16 %v3564, %v3563
    %v3691 = vpack.c.b16 %v3566, %v3565
    %v3692 = vpack.c.b16 %v3568, %v3567
    %v3693 = vpack.c.b16 %v3570, %v3569
    %v3694 = vpack.c.b16 %v3572, %v3571
    %v3695 = vpack.c.b16 %v3574, %v3573
    %v3696 = vpack.c.b16 %v3576, %v3575
    %v3697 = vpack.c.b16 %v3578, %v3577
    %v3698 = vpack.c.b16 %v3580, %v3579
    %v3699 = vpack.c.b16 %v3582, %v3581
    %v3700 = vpack.c.b16 %v3584, %v3583
    %v3701 = vpack.c.b16 %v3586, %v3585
    %v3702 = vpack.c.b16 %v3588, %v3587
    %v3703 = vpack.c.b16 %v3590, %v3589
    %v3704 = vpack.c.b16 %v3592, %v3591
    %v3705 = vpack.c.b16 %v3594, %v3593
    %v3706 = vpack.c.b16 %v3596, %v3595
    %v3707 = vpack.c.b16 %v3598, %v3597
    %v3708 = vpack.c.b16 %v3600, %v3599
    %v3709 = vpack.c.b16 %v3602, %v3601
    %v3710 = vpack.c.b16 %v3604, %v3603
    %v3711 = vpack.c.b16 %v3606, %v3605
    %v3712 = vpack.c.b16 %v3608, %v3607
    %v3713 = vpack.c.b16 %v3610, %v3609
    %v3714 = vpack.c.b16 %v3612, %v3611
    %v3715 = vpack.c.b16 %v3614, %v3613
    %v3716 = vpack.c.b16 %v3616, %v3615
    %v3717 = vpack.c.b16 %v3618, %v3617
    %v3718 = vpack.c.b16 %v3620, %v3619
    %v3719 = vpack.c.b16 %v3622, %v3621
    %v3720 = vpack.c.b16 %v3624, %v3623
    %v3721 = vpack.c.b16 %v3626, %v3625
    %v3722 = vpack.c.b16 %v3628, %v3627
    %v3723 = vpack.c.b16 %v3630, %v3629
    %v3724 = vpack.c.b16 %v3632, %v3631
    %v3725 = vpack.c.b16 %v3634, %v3633
    %v3726 = vpack.c.b16 %v3636, %v3635
    %v3727 = vpack.c.b16 %v3638, %v3637
    %v3728 = vpack.c.b16 %v3640, %v3639
    %v3729 = vpack.c.b16 %v3642, %v3641
    %v3730 = vpack.c.b16 %v3644, %v3643
    %v3731 = vpack.c.b16 %v3646, %v3645
    %v3732 = vpack.c.b16 %v3648, %v3647
    %v3733 = vpack.c.b16 %v3650, %v3649
    %v3734 = vpack.c.b16 %v3652, %v3651
    %v3735 = vpack.c.b16 %v3654, %v3653
    %v3736 = vpack.c.b16 %v3656, %v3655
    %v3737 = vpack.c.b16 %v3658, %v3657
    %v3738 = vpack.c.b16 %v3660, %v3659
    %v3739 = vpack.c.b16 %v3662, %v3661
    %v3740 = vpack.c.b16 %v3664, %v3663
    %v3741 = vpack.c.b16 %v3666, %v3665
    %v3742 = vpack.c.b16 %v3668, %v3667
    %v3743 = vpack.c.b16 %v3670, %v3669
    %v3744 = vpack.c.b16 %v3672, %v3671
    %v3745 = vpack.c.b16 %v3674, %v3673
    %v3746 = vpack.c.b16 %v3676, %v3675
    %v3747 = vpack.c.b16 %v3678, %v3677
    %v3748 = vpack.c.b16 %v3680, %v3679
    %v3749 = vpack.c.b16 %v3682, %v3681
    %v3750 = vpack.c.b16 %v3684, %v3683
    %v3751 = vpack.c.b16 %v3686, %v3685
    %v3752 = vpack.c.b16 %v3688, %v3687
    %3817 = vmatprep.subr.bf16.mxu0 0
    %3818 = vmatpush1.bf16.msra.mxu0 %v3689
    %3819 = vmatprep.subr.bf16.mxu0 0
    %3820 = vmatpush1.bf16.msra.mxu0 %v3690
    %3821 = vmatprep.subr.bf16.mxu0 0
    %3822 = vmatpush1.bf16.msra.mxu0 %v3691
    %3823 = vmatprep.subr.bf16.mxu0 0
    %3824 = vmatpush1.bf16.msra.mxu0 %v3692
    %3825 = vmatprep.subr.bf16.mxu0 0
    %3826 = vmatpush1.bf16.msra.mxu0 %v3693
    %3827 = vmatprep.subr.bf16.mxu0 0
    %3828 = vmatpush1.bf16.msra.mxu0 %v3694
    %3829 = vmatprep.subr.bf16.mxu0 0
    %3830 = vmatpush1.bf16.msra.mxu0 %v3695
    %3831 = vmatprep.subr.bf16.mxu0 0
    %3832 = vmatpush1.bf16.msra.mxu0 %v3696
    %3833 = vmatprep.subr.bf16.mxu0 0
    %3834 = vmatpush1.bf16.msra.mxu0 %v3697
    %3835 = vmatprep.subr.bf16.mxu0 0
    %3836 = vmatpush1.bf16.msra.mxu0 %v3698
    %3837 = vmatprep.subr.bf16.mxu0 0
    %3838 = vmatpush1.bf16.msra.mxu0 %v3699
    %3839 = vmatprep.subr.bf16.mxu0 0
    %3840 = vmatpush1.bf16.msra.mxu0 %v3700
    %3841 = vmatprep.subr.bf16.mxu0 0
    %3842 = vmatpush1.bf16.msra.mxu0 %v3701
    %3843 = vmatprep.subr.bf16.mxu0 0
    %3844 = vmatpush1.bf16.msra.mxu0 %v3702
    %3845 = vmatprep.subr.bf16.mxu0 0
    %3846 = vmatpush1.bf16.msra.mxu0 %v3703
    %3847 = vmatprep.subr.bf16.mxu0 0
    %3848 = vmatpush1.bf16.msra.mxu0 %v3704
    %3849 = vmatprep.mubr.bf16.mxu0 %v3291
    %3850 = vmatmul.mubr.bf16.gmra.mrb[0].mxu0 %v3290
    %v3851 = vpop.f32.mrb[0].mxu0
    %v3852 = vadd.f32 %v3431, %v3851
    %v3853 = vpop.f32.mrb[0].mxu0
    %v3854 = vpop.f32.mrb[0].mxu0
    %v3855 = vadd.f32 %v3431, %v3854
    %v3856 = vpop.f32.mrb[0].mxu0
    %3857 = vdwg.mxu0
    %3858 = vmatprep.subr.bf16.mxu0 0
    %3859 = vmatpush1.bf16.msra.mxu0 %v3705
    %3860 = vmatprep.subr.bf16.mxu0 0
    %3861 = vmatpush1.bf16.msra.mxu0 %v3706
    %3862 = vmatprep.subr.bf16.mxu0 0
    %3863 = vmatpush1.bf16.msra.mxu0 %v3707
    %3864 = vmatprep.subr.bf16.mxu0 0
    %3865 = vmatpush1.bf16.msra.mxu0 %v3708
    %3866 = vmatprep.subr.bf16.mxu0 0
    %3867 = vmatpush1.bf16.msra.mxu0 %v3709
    %3868 = vmatprep.subr.bf16.mxu0 0
    %3869 = vmatpush1.bf16.msra.mxu0 %v3710
    %3870 = vmatprep.subr.bf16.mxu0 0
    %3871 = vmatpush1.bf16.msra.mxu0 %v3711
    %3872 = vmatprep.subr.bf16.mxu0 0
    %3873 = vmatpush1.bf16.msra.mxu0 %v3712
    %3874 = vmatprep.subr.bf16.mxu0 0
    %3875 = vmatpush1.bf16.msra.mxu0 %v3713
    %3876 = vmatprep.subr.bf16.mxu0 0
    %3877 = vmatpush1.bf16.msra.mxu0 %v3714
    %3878 = vmatprep.subr.bf16.mxu0 0
    %3879 = vmatpush1.bf16.msra.mxu0 %v3715
    %3880 = vmatprep.subr.bf16.mxu0 0
    %3881 = vmatpush1.bf16.msra.mxu0 %v3716
    %3882 = vmatprep.subr.bf16.mxu0 0
    %3883 = vmatpush1.bf16.msra.mxu0 %v3717
    %3884 = vmatprep.subr.bf16.mxu0 0
    %3885 = vmatpush1.bf16.msra.mxu0 %v3718
    %3886 = vmatprep.subr.bf16.mxu0 0
    %3887 = vmatpush1.bf16.msra.mxu0 %v3719
    %3888 = vmatprep.subr.bf16.mxu0 0
    %3889 = vmatpush1.bf16.msra.mxu0 %v3720
    %3890 = vmatprep.mubr.bf16.mxu0 %v3293
    %3891 = vmatmul.mubr.bf16.gmra.mrb[0].mxu0 %v3292
    %v3892 = vpop.f32.mrb[0].mxu0
    %v3893 = vadd.f32 %v3852, %v3892
    %v3894 = vpop.f32.mrb[0].mxu0
    %v3895 = vpop.f32.mrb[0].mxu0
    %v3896 = vadd.f32 %v3855, %v3895
    %v3897 = vpop.f32.mrb[0].mxu0
    %3898 = vdwg.mxu0
    %3899 = vmatprep.subr.bf16.mxu0 0
    %3900 = vmatpush1.bf16.msra.mxu0 %v3721
    %3901 = vmatprep.subr.bf16.mxu0 0
    %3902 = vmatpush1.bf16.msra.mxu0 %v3722
    %3903 = vmatprep.subr.bf16.mxu0 0
    %3904 = vmatpush1.bf16.msra.mxu0 %v3723
    %3905 = vmatprep.subr.bf16.mxu0 0
    %3906 = vmatpush1.bf16.msra.mxu0 %v3724
    %3907 = vmatprep.subr.bf16.mxu0 0
    %3908 = vmatpush1.bf16.msra.mxu0 %v3725
    %3909 = vmatprep.subr.bf16.mxu0 0
    %3910 = vmatpush1.bf16.msra.mxu0 %v3726
    %3911 = vmatprep.subr.bf16.mxu0 0
    %3912 = vmatpush1.bf16.msra.mxu0 %v3727
    %3913 = vmatprep.subr.bf16.mxu0 0
    %3914 = vmatpush1.bf16.msra.mxu0 %v3728
    %3915 = vmatprep.subr.bf16.mxu0 0
    %3916 = vmatpush1.bf16.msra.mxu0 %v3729
    %3917 = vmatprep.subr.bf16.mxu0 0
    %3918 = vmatpush1.bf16.msra.mxu0 %v3730
    %3919 = vmatprep.subr.bf16.mxu0 0
    %3920 = vmatpush1.bf16.msra.mxu0 %v3731
    %3921 = vmatprep.subr.bf16.mxu0 0
    %3922 = vmatpush1.bf16.msra.mxu0 %v3732
    %3923 = vmatprep.subr.bf16.mxu0 0
    %3924 = vmatpush1.bf16.msra.mxu0 %v3733
    %3925 = vmatprep.subr.bf16.mxu0 0
    %3926 = vmatpush1.bf16.msra.mxu0 %v3734
    %3927 = vmatprep.subr.bf16.mxu0 0
    %3928 = vmatpush1.bf16.msra.mxu0 %v3735
    %3929 = vmatprep.subr.bf16.mxu0 0
    %3930 = vmatpush1.bf16.msra.mxu0 %v3736
    %3931 = vmatprep.mubr.bf16.mxu0 %v3295
    %3932 = vmatmul.mubr.bf16.gmra.mrb[0].mxu0 %v3294
    %v3933 = vpop.f32.mrb[0].mxu0
    %v3934 = vadd.f32 %v3893, %v3933
    %v3935 = vpop.f32.mrb[0].mxu0
    %v3936 = vpop.f32.mrb[0].mxu0
    %v3937 = vadd.f32 %v3896, %v3936
    %v3938 = vpop.f32.mrb[0].mxu0
    %3939 = vdwg.mxu0
    %3940 = vmatprep.subr.bf16.mxu0 0
    %3941 = vmatpush1.bf16.msra.mxu0 %v3737
    %3942 = vmatprep.subr.bf16.mxu0 0
    %3943 = vmatpush1.bf16.msra.mxu0 %v3738
    %3944 = vmatprep.subr.bf16.mxu0 0
    %3945 = vmatpush1.bf16.msra.mxu0 %v3739
    %3946 = vmatprep.subr.bf16.mxu0 0
    %3947 = vmatpush1.bf16.msra.mxu0 %v3740
    %3948 = vmatprep.subr.bf16.mxu0 0
    %3949 = vmatpush1.bf16.msra.mxu0 %v3741
    %3950 = vmatprep.subr.bf16.mxu0 0
    %3951 = vmatpush1.bf16.msra.mxu0 %v3742
    %3952 = vmatprep.subr.bf16.mxu0 0
    %3953 = vmatpush1.bf16.msra.mxu0 %v3743
    %3954 = vmatprep.subr.bf16.mxu0 0
    %3955 = vmatpush1.bf16.msra.mxu0 %v3744
    %3956 = vmatprep.subr.bf16.mxu0 0
    %3957 = vmatpush1.bf16.msra.mxu0 %v3745
    %3958 = vmatprep.subr.bf16.mxu0 0
    %3959 = vmatpush1.bf16.msra.mxu0 %v3746
    %3960 = vmatprep.subr.bf16.mxu0 0
    %3961 = vmatpush1.bf16.msra.mxu0 %v3747
    %3962 = vmatprep.subr.bf16.mxu0 0
    %3963 = vmatpush1.bf16.msra.mxu0 %v3748
    %3964 = vmatprep.subr.bf16.mxu0 0
    %3965 = vmatpush1.bf16.msra.mxu0 %v3749
    %3966 = vmatprep.subr.bf16.mxu0 0
    %3967 = vmatpush1.bf16.msra.mxu0 %v3750
    %3968 = vmatprep.subr.bf16.mxu0 0
    %3969 = vmatpush1.bf16.msra.mxu0 %v3751
    %3970 = vmatprep.subr.bf16.mxu0 0
    %3971 = vmatpush1.bf16.msra.mxu0 %v3752
    %3972 = vmatprep.mubr.bf16.mxu0 %v3297
    %3973 = vmatmul.mubr.bf16.gmra.mrb[0].mxu0 %v3296
    %v3974 = vpop.f32.mrb[0].mxu0
    %v3975 = vadd.f32 %v3934, %v3974
    %v3976 = vpop.f32.mrb[0].mxu0
    %v3977 = vpop.f32.mrb[0].mxu0
    %v3978 = vadd.f32 %v3937, %v3977
    %v3979 = vpop.f32.mrb[0].mxu0
    %3980 = vdwg.mxu0
    %v3981 = vmax.f32 %v3975, 0.0
    %v3982 = vmax.f32 %v3978, 0.0
    %v3983 = vpack.c.bf16 %v3982, %v3981
    %v3984 = vld [vmem:[%s9] sm:$0xf]
    %v3985 = vld [vmem:[%s9 + $0x4] sm:$0xf]
    %v3986 = vld [vmem:[%s9 + $0x8] sm:$0xf]
    %v3987 = vld [vmem:[%s9 + $0xc] sm:$0xf]
    %v3988 = vld [vmem:[%s10] sm:$0x1]
    %v3990 = vlaneseq
    %v3991 = vshrl.u32 %v3990, 7
    %v3992 = vsub.s32 0, %v3991
    %v3993 = vrot.slane %v3988, %v3992
    %v3999 = vunpack.c.l.b16 %v3984
    %v4000 = vunpack.c.l.b16 %v3985
    %v4001 = vunpack.c.l.b16 %v3986
    %v4002 = vunpack.c.l.b16 %v3987
    %v4003 = vpack.c.b16 %v4000, %v3999
    %v4004 = vpack.c.b16 %v4002, %v4001
    %vm4007 = vcmask 261120
    %v4009 = vsel %vm4007, %v3983, 0
    %4011 = vmatprep.subr.bf16.mxu0 0
    %4012 = vmatpush1.bf16.msra.mxu0 %v4003
    %4013 = vmatprep.subr.bf16.mxu0 0
    %4014 = vmatpush1.bf16.msra.mxu0 %v4004
    %4015 = vmatprep.subr.bf16.mxu0 0
    %4016 = vmatpush1.bf16.msra.mxu0 0
    %4017 = vmatprep.subr.bf16.mxu0 0
    %4018 = vmatpush1.bf16.msra.mxu0 0
    %4019 = vmatprep.subr.bf16.mxu0 0
    %4020 = vmatpush1.bf16.msra.mxu0 0
    %4021 = vmatprep.subr.bf16.mxu0 0
    %4022 = vmatpush1.bf16.msra.mxu0 0
    %4023 = vmatprep.subr.bf16.mxu0 0
    %4024 = vmatpush1.bf16.msra.mxu0 0
    %4025 = vmatprep.subr.bf16.mxu0 0
    %4026 = vmatpush1.bf16.msra.mxu0 0
    %4027 = vmatprep.subr.bf16.mxu0 0
    %4028 = vmatpush1.bf16.msra.mxu0 0
    %4029 = vmatprep.subr.bf16.mxu0 0
    %4030 = vmatpush1.bf16.msra.mxu0 0
    %4031 = vmatprep.subr.bf16.mxu0 0
    %4032 = vmatpush1.bf16.msra.mxu0 0
    %4033 = vmatprep.subr.bf16.mxu0 0
    %4034 = vmatpush1.bf16.msra.mxu0 0
    %4035 = vmatprep.subr.bf16.mxu0 0
    %4036 = vmatpush1.bf16.msra.mxu0 0
    %4037 = vmatprep.subr.bf16.mxu0 0
    %4038 = vmatpush1.bf16.msra.mxu0 0
    %4039 = vmatprep.subr.bf16.mxu0 0
    %4040 = vmatpush1.bf16.msra.mxu0 0
    %4041 = vmatprep.subr.bf16.mxu0 0
    %4042 = vmatpush1.bf16.msra.mxu0 0
    %4043 = vmatprep.mubr.bf16.mxu0 0
    %4044 = vmatmul.mubr.bf16.gmra.mrb[0].mxu0 %v4009
    %v4045 = vpop.f32.mrb[0].mxu0
    %v4046 = vadd.f32 %v3993, %v4045
    %v4047 = vpop.f32.mrb[0].mxu0
    %v4048 = vpop.f32.mrb[0].mxu0
    %v4049 = vadd.f32 %v3993, %v4048
    %v4050 = vpop.f32.mrb[0].mxu0
    %4051 = vdwg.mxu0
    %4052 = vst.msk [vmem:[#allocation2] sm:$0xff] %vm4007, %v4046
    %4053 = vst.msk [vmem:[#allocation2 + $0x8] sm:$0xff] %vm4007, %v4049
    // Predicated region
    $region46: #{tpu_custom_call.1} parent=1 // pred_check
      _
    $region47: #{tpu_custom_call.1} parent=1 // pred_check_branch
      %4055 = sbr.rel (0) target = $region49
    $region48: #{tpu_custom_call.1} parent=1 // pred_region
      %s4057 = ssub.s32 256, 256
      %4058 = vsyncadd [#allocation3], %s4057
      %s4059 = sshll.u32 [#allocation2], 4
      %s4060 = int_to_ptr.vmem [resolvable:$true] %s4059
      %4065 = dma.vmem_to_hbm [thread:$0]  %s4060, 256, %s11, [#allocation3], 128, 128, 8
    $region49: #{tpu_custom_call.1} parent=1 // pred_fallthru
      _
    // Predicated region
    $region50: #{tpu_custom_call.1} parent=1 // pred_check
      _
    $region51: #{tpu_custom_call.1} parent=1 // pred_check_branch
      %4067 = sbr.rel (0) target = $region53
    $region52: #{tpu_custom_call.1} parent=1 // pred_region
      %4068 = dma.done [#allocation3], 256
    $region53: #{tpu_custom_call.1} parent=1 // pred_fallthru
      _
    %4069 = vsyncpa [#allocation3], 1

</llo_original>
